<compile_context>
chip_gen: v7x
topology: tpu7x:2x2x1
jax: 0.10.0
libtpu: 0.0.40
codegen_flags: <defaults>
</compile_context>

<pallas_src>
import functools
import math

import jax
import jax.numpy as jnp
from jax.experimental import pallas as pl
from jax.experimental.pallas import tpu as pltpu


# -----------------------------------------------------------------------------
# Model constants — synthetic AVBert stack, sized lane-dense (multiples of 128)
# -----------------------------------------------------------------------------
D_MODEL = 128
D_FF = 512
N_LAYERS = 2
T_VIDEO = 4                  # frames per crop
C, H, W = 3, 16, 16          # per-frame channels / spatial; C*H*W = 768
F_AUDIO = 128                # audio frame (feature) size
NUM_CROPS = 3


# -----------------------------------------------------------------------------
# Fused Pallas kernel: visual + audio + fusion branches in one call
# -----------------------------------------------------------------------------
def _gelu(x):
    # tanh-approx GELU (EUP-friendly)
    return 0.5 * x * (1.0 + jnp.tanh(0.7978845608028654 * (x + 0.044715 * x * x * x)))


def _encode_stack(h, w1_ref, b1_ref, w2_ref, b2_ref, g_ref, beta_ref,
                  hid_ref, n_layers):
    """Runs the residual-FFN + LayerNorm stack; writes every hidden state.

    hid_ref has shape (n_layers+1, M, D): slot 0 is the input embedding,
    slot l+1 is the output of layer l.  Layer loop is statically unrolled;
    weights stay VMEM-resident.  Returns the final hidden.
    """
    hid_ref[0] = h
    for l in range(n_layers):  # static unroll over layers
        z = jnp.dot(h, w1_ref[l], preferred_element_type=jnp.float32) + b1_ref[l]
        z = _gelu(z)
        z = jnp.dot(z, w2_ref[l], preferred_element_type=jnp.float32) + b2_ref[l]
        y = h + z
        mean = jnp.mean(y, axis=-1, keepdims=True)
        var = jnp.mean((y - mean) ** 2, axis=-1, keepdims=True)
        y = (y - mean) * jax.lax.rsqrt(var + 1e-5)
        h = y * g_ref[l] + beta_ref[l]
        hid_ref[l + 1] = h
    return h


def _avbert_kernel(v_ref, a_ref,
                   wpv_ref, bpv_ref, wpa_ref, bpa_ref,
                   w1v_ref, b1v_ref, w2v_ref, b2v_ref, gv_ref, betav_ref,
                   w1a_ref, b1a_ref, w2a_ref, b2a_ref, ga_ref, betaa_ref,
                   w1f_ref, b1f_ref, w2f_ref, b2f_ref, gf_ref, betaf_ref,
                   vhid_ref, ahid_ref, fhid_ref,
                   *, n_layers):
    # --- visual branch (all crops folded into the token dim) ---
    hv = jnp.dot(v_ref[...], wpv_ref[...], preferred_element_type=jnp.float32)
    hv = jnp.tanh(hv + bpv_ref[...])
    hv = _encode_stack(hv, w1v_ref, b1v_ref, w2v_ref, b2v_ref, gv_ref, betav_ref,
                       vhid_ref, n_layers)

    # --- audio branch (identical for every crop -> computed once) ---
    ha = jnp.dot(a_ref[...], wpa_ref[...], preferred_element_type=jnp.float32)
    ha = jnp.tanh(ha + bpa_ref[...])
    ha = _encode_stack(ha, w1a_ref, b1a_ref, w2a_ref, b2a_ref, ga_ref, betaa_ref,
                       ahid_ref, n_layers)

    # --- fusion branch: per-token encoder over [video tokens ; audio tokens].
    # Audio tokens are deduped (encoded once, broadcast per crop in the glue).
    hf = jnp.concatenate([hv, ha], axis=0)
    _encode_stack(hf, w1f_ref, b1f_ref, w2f_ref, b2f_ref, gf_ref, betaf_ref,
                  fhid_ref, n_layers)


def _full_spec(arr):
    nd = arr.ndim
    return pl.BlockSpec(arr.shape, lambda i, _nd=nd: (0,) * _nd)


def avbert_fused_call(v_tokens, a_tokens, params):
    """v_tokens: (Mv, C*H*W), a_tokens: (Ma, F_AUDIO).

    Returns stacked hidden-state slabs:
      v_hid (L+1, Mv, D), a_hid (L+1, Ma, D), f_hid (L+1, Mv+Ma, D)
    """
    Mv = v_tokens.shape[0]
    Ma = a_tokens.shape[0]
    wpv, bpv = params["v_proj"]
    wpa, bpa = params["a_proj"]
    args = (v_tokens, a_tokens, wpv, bpv, wpa, bpa,
            *params["v_layers"], *params["a_layers"], *params["f_layers"])

    kernel = functools.partial(_avbert_kernel, n_layers=N_LAYERS)

    out_shapes = (
        jax.ShapeDtypeStruct((N_LAYERS + 1, Mv, D_MODEL), jnp.float32),
        jax.ShapeDtypeStruct((N_LAYERS + 1, Ma, D_MODEL), jnp.float32),
        jax.ShapeDtypeStruct((N_LAYERS + 1, Mv + Ma, D_MODEL), jnp.float32),
    )
    out_specs = tuple(pl.BlockSpec(s.shape, lambda i: (0, 0, 0)) for s in out_shapes)

    # TODO(synk): at real AVBert sizes (D~768, FF~3072, long sequences) this
    # single whole-array block should become a token-tiled grid marked
    # "parallel" (megacore on v7x) with K/N tiling sized against 64 MiB VMEM.
    return pl.pallas_call(
        kernel,
        out_shape=out_shapes,
        grid=(1,),
        in_specs=[_full_spec(a) for a in args],
        out_specs=out_specs,
        compiler_params=pltpu.CompilerParams(dimension_semantics=("arbitrary",)),
    )(*args)


# -----------------------------------------------------------------------------
# Synthetic parameter initialization
# -----------------------------------------------------------------------------
def _dense_init(key, fan_in, fan_out):
    w = jax.random.normal(key, (fan_in, fan_out), jnp.float32) * (1.0 / math.sqrt(fan_in))
    b = jnp.zeros((1, fan_out), jnp.float32)
    return w, b


def _stack_init(key, d, d_ff, n_layers):
    w1s, b1s, w2s, b2s = [], [], [], []
    for i in range(n_layers):
        k1, k2 = jax.random.split(jax.random.fold_in(key, i))
        w1, b1 = _dense_init(k1, d, d_ff)
        w2, b2 = _dense_init(k2, d_ff, d)
        w1s.append(w1); b1s.append(b1); w2s.append(w2); b2s.append(b2)
    return (jnp.stack(w1s), jnp.stack(b1s), jnp.stack(w2s), jnp.stack(b2s),
            jnp.ones((n_layers, 1, d), jnp.float32),
            jnp.zeros((n_layers, 1, d), jnp.float32))


def init_params(seed=0):
    # TODO(synk): real AVBert loads pretrained weights from a .pt checkpoint;
    # replaced here by a deterministic synthetic stack with the same interface.
    key = jax.random.PRNGKey(seed)
    keys = jax.random.split(key, 5)
    return {
        "v_proj": _dense_init(keys[0], C * H * W, D_MODEL),
        "a_proj": _dense_init(keys[1], F_AUDIO, D_MODEL),
        "v_layers": _stack_init(keys[2], D_MODEL, D_FF, N_LAYERS),
        "a_layers": _stack_init(keys[3], D_MODEL, D_FF, N_LAYERS),
        "f_layers": _stack_init(keys[4], D_MODEL, D_FF, N_LAYERS),
    }


# -----------------------------------------------------------------------------
# Jitted multi-crop forward + feature concatenation
# -----------------------------------------------------------------------------
@functools.partial(jax.jit, static_argnames=("feature_concat_axis",))
def _avbert_forward(videos, audios, params, feature_concat_axis):
    """
    videos: (NUM_CROPS, B, T, C, H, W)
    audios: (B, La), La divisible by F_AUDIO
    """
    n_crops, B, T = videos.shape[0], videos.shape[1], videos.shape[2]
    Mv = n_crops * B * T
    v_tokens = videos.reshape(Mv, C * H * W)

    La = audios.shape[1]
    Ta = La // F_AUDIO
    a_tokens = audios.reshape(B * Ta, F_AUDIO)
    # TODO(synk): padded audio frames are not masked in the encoder (fidelity
    # gap vs. the checkpointed AVBert preprocessing).

    v_hid, a_hid, f_hid = avbert_fused_call(v_tokens, a_tokens, params)

    video_hiddens = [v_hid[l].reshape(n_crops, B, T, D_MODEL)
                     for l in range(N_LAYERS + 1)]
    audio_hiddens = [a_hid[l].reshape(B, Ta, D_MODEL)
                     for l in range(N_LAYERS + 1)]

    # reconstruct per-crop fused sequences [video ; audio] per layer
    fusion_hiddens = []
    for l in range(N_LAYERS + 1):
        fv = f_hid[l, :Mv].reshape(n_crops, B, T, D_MODEL)
        fa = jnp.broadcast_to(f_hid[l, Mv:].reshape(1, B, Ta, D_MODEL),
                              (n_crops, B, Ta, D_MODEL))
        fusion_hiddens.append(jnp.concatenate([fv, fa], axis=2))

    audio_feats = tuple(audio_hiddens)   # audio hiddens of "crop 0" (identical crops)

    def concat_crops(hid):                       # hid: (crops, B, T, D)
        bt = jnp.transpose(hid, (1, 2, 0, 3))    # (B, T, crops, D)
        if feature_concat_axis == "hidden":
            return bt.reshape(bt.shape[0], bt.shape[1], -1)                        # (B, T, crops*D)
        elif feature_concat_axis == "time":
            return bt.reshape(bt.shape[0], bt.shape[1] * bt.shape[2], bt.shape[3])  # (B, crops*T, D)
        else:
            raise NotImplementedError

    video_feats = tuple(concat_crops(h) for h in video_hiddens)
    fusion_feats = tuple(concat_crops(h) for h in fusion_hiddens)

    return {"video_feats": video_feats,
            "audio_feats": audio_feats,
            "fusion_feats": fusion_feats}


# -----------------------------------------------------------------------------
# UpstreamExpert.forward equivalent
# -----------------------------------------------------------------------------
def upstream_expert_forward(source, params, feature_concat_axis="hidden"):
    """
    source: list of (audio, video) pairs
        audio: (La_i,) float32
        video: (NUM_CROPS, T, C, H, W) float32
    """
    audio_list, video_list = zip(*source)

    # pad_sequence(batch_first=True)
    max_len = max(a.shape[0] for a in audio_list)
    audios = jnp.stack([jnp.pad(a, (0, max_len - a.shape[0])) for a in audio_list])

    videos = jnp.stack(video_list)          # (B, crops, T, C, H, W)
    videos = jnp.swapaxes(videos, 0, 1)     # (crops, B, T, C, H, W)

    return _avbert_forward(videos, audios, params, feature_concat_axis)


# -----------------------------------------------------------------------------
# main
# -----------------------------------------------------------------------------
if __name__ == "__main__":
    key = jax.random.PRNGKey(0)
    params = init_params(seed=0)

    B = 2
    k1, k2, k3, k4 = jax.random.split(key, 4)
    # variable-length audio (pad_sequence pads to 1024 = 8 * 128-sample frames)
    audio0 = jax.random.normal(k1, (1024,), jnp.float32)
    audio1 = jax.random.normal(k2, (960,), jnp.float32)
    video0 = jax.random.normal(k3, (NUM_CROPS, T_VIDEO, C, H, W), jnp.float32)
    video1 = jax.random.normal(k4, (NUM_CROPS, T_VIDEO, C, H, W), jnp.float32)
    source = [(audio0, video0), (audio1, video1)]

    out = upstream_expert_forward(source, params, feature_concat_axis="hidden")
    out = jax.block_until_ready(out)

    Ta = 1024 // F_AUDIO
    assert len(out["video_feats"]) == N_LAYERS + 1
    assert len(out["fusion_feats"]) == N_LAYERS + 1
    assert len(out["audio_feats"]) == N_LAYERS + 1
    assert out["video_feats"][0].shape == (B, T_VIDEO, NUM_CROPS * D_MODEL)
    assert out["fusion_feats"][0].shape == (B, T_VIDEO + Ta, NUM_CROPS * D_MODEL)
    assert out["audio_feats"][0].shape == (B, Ta, D_MODEL)

    # also exercise the "time" concat path once
    out_t = upstream_expert_forward(source, params, feature_concat_axis="time")
    out_t = jax.block_until_ready(out_t)
    assert out_t["video_feats"][0].shape == (B, NUM_CROPS * T_VIDEO, D_MODEL)
    assert out_t["fusion_feats"][0].shape == (B, NUM_CROPS * (T_VIDEO + Ta), D_MODEL)

    print("KERNEL_OK")
</pallas_src>

<mosaic_0001>
module attributes {stable_mosaic.version = 11 : i64} {
  func.func @_avbert_kernel(%arg0: i32, %arg1: memref<24x768xf32, #tpu.memory_space<vmem>>, %arg2: memref<16x128xf32, #tpu.memory_space<vmem>>, %arg3: memref<768x128xf32, #tpu.memory_space<vmem>>, %arg4: memref<1x128xf32, #tpu.memory_space<vmem>>, %arg5: memref<128x128xf32, #tpu.memory_space<vmem>>, %arg6: memref<1x128xf32, #tpu.memory_space<vmem>>, %arg7: memref<2x128x512xf32, #tpu.memory_space<vmem>>, %arg8: memref<2x1x512xf32, #tpu.memory_space<vmem>>, %arg9: memref<2x512x128xf32, #tpu.memory_space<vmem>>, %arg10: memref<2x1x128xf32, #tpu.memory_space<vmem>>, %arg11: memref<2x1x128xf32, #tpu.memory_space<vmem>>, %arg12: memref<2x1x128xf32, #tpu.memory_space<vmem>>, %arg13: memref<2x128x512xf32, #tpu.memory_space<vmem>>, %arg14: memref<2x1x512xf32, #tpu.memory_space<vmem>>, %arg15: memref<2x512x128xf32, #tpu.memory_space<vmem>>, %arg16: memref<2x1x128xf32, #tpu.memory_space<vmem>>, %arg17: memref<2x1x128xf32, #tpu.memory_space<vmem>>, %arg18: memref<2x1x128xf32, #tpu.memory_space<vmem>>, %arg19: memref<2x128x512xf32, #tpu.memory_space<vmem>>, %arg20: memref<2x1x512xf32, #tpu.memory_space<vmem>>, %arg21: memref<2x512x128xf32, #tpu.memory_space<vmem>>, %arg22: memref<2x1x128xf32, #tpu.memory_space<vmem>>, %arg23: memref<2x1x128xf32, #tpu.memory_space<vmem>>, %arg24: memref<2x1x128xf32, #tpu.memory_space<vmem>>, %arg25: memref<3x24x128xf32, #tpu.memory_space<vmem>>, %arg26: memref<3x16x128xf32, #tpu.memory_space<vmem>>, %arg27: memref<3x40x128xf32, #tpu.memory_space<vmem>>) attributes {dimension_semantics = [#tpu.dimension_semantics<arbitrary>], iteration_bounds = array<i64: 1>, scalar_prefetch = 0 : i64, scratch_operands = 0 : i64, tpu.core_type = #tpu.core_type<tc>, window_params = [{pipeline_mode = #tpu.pipeline_mode<synchronous>, transform_indices = @transform_0, window_bounds = array<i64: 24, 768>}, {pipeline_mode = #tpu.pipeline_mode<synchronous>, transform_indices = @transform_1, window_bounds = array<i64: 16, 128>}, {pipeline_mode = #tpu.pipeline_mode<synchronous>, transform_indices = @transform_2, window_bounds = array<i64: 768, 128>}, {pipeline_mode = #tpu.pipeline_mode<synchronous>, transform_indices = @transform_3, window_bounds = array<i64: 1, 128>}, {pipeline_mode = #tpu.pipeline_mode<synchronous>, transform_indices = @transform_4, window_bounds = array<i64: 128, 128>}, {pipeline_mode = #tpu.pipeline_mode<synchronous>, transform_indices = @transform_5, window_bounds = array<i64: 1, 128>}, {pipeline_mode = #tpu.pipeline_mode<synchronous>, transform_indices = @transform_6, window_bounds = array<i64: 2, 128, 512>}, {pipeline_mode = #tpu.pipeline_mode<synchronous>, transform_indices = @transform_7, window_bounds = array<i64: 2, 1, 512>}, {pipeline_mode = #tpu.pipeline_mode<synchronous>, transform_indices = @transform_8, window_bounds = array<i64: 2, 512, 128>}, {pipeline_mode = #tpu.pipeline_mode<synchronous>, transform_indices = @transform_9, window_bounds = array<i64: 2, 1, 128>}, {pipeline_mode = #tpu.pipeline_mode<synchronous>, transform_indices = @transform_10, window_bounds = array<i64: 2, 1, 128>}, {pipeline_mode = #tpu.pipeline_mode<synchronous>, transform_indices = @transform_11, window_bounds = array<i64: 2, 1, 128>}, {pipeline_mode = #tpu.pipeline_mode<synchronous>, transform_indices = @transform_12, window_bounds = array<i64: 2, 128, 512>}, {pipeline_mode = #tpu.pipeline_mode<synchronous>, transform_indices = @transform_13, window_bounds = array<i64: 2, 1, 512>}, {pipeline_mode = #tpu.pipeline_mode<synchronous>, transform_indices = @transform_14, window_bounds = array<i64: 2, 512, 128>}, {pipeline_mode = #tpu.pipeline_mode<synchronous>, transform_indices = @transform_15, window_bounds = array<i64: 2, 1, 128>}, {pipeline_mode = #tpu.pipeline_mode<synchronous>, transform_indices = @transform_16, window_bounds = array<i64: 2, 1, 128>}, {pipeline_mode = #tpu.pipeline_mode<synchronous>, transform_indices = @transform_17, window_bounds = array<i64: 2, 1, 128>}, {pipeline_mode = #tpu.pipeline_mode<synchronous>, transform_indices = @transform_18, window_bounds = array<i64: 2, 128, 512>}, {pipeline_mode = #tpu.pipeline_mode<synchronous>, transform_indices = @transform_19, window_bounds = array<i64: 2, 1, 512>}, {pipeline_mode = #tpu.pipeline_mode<synchronous>, transform_indices = @transform_20, window_bounds = array<i64: 2, 512, 128>}, {pipeline_mode = #tpu.pipeline_mode<synchronous>, transform_indices = @transform_21, window_bounds = array<i64: 2, 1, 128>}, {pipeline_mode = #tpu.pipeline_mode<synchronous>, transform_indices = @transform_22, window_bounds = array<i64: 2, 1, 128>}, {pipeline_mode = #tpu.pipeline_mode<synchronous>, transform_indices = @transform_23, window_bounds = array<i64: 2, 1, 128>}, {pipeline_mode = #tpu.pipeline_mode<synchronous>, transform_indices = @transform_24, window_bounds = array<i64: 3, 24, 128>}, {pipeline_mode = #tpu.pipeline_mode<synchronous>, transform_indices = @transform_25, window_bounds = array<i64: 3, 16, 128>}, {pipeline_mode = #tpu.pipeline_mode<synchronous>, transform_indices = @transform_26, window_bounds = array<i64: 3, 40, 128>}]} {
    %c0 = arith.constant 0 : index
    %c0_0 = arith.constant 0 : index
    %0 = vector.load %arg1[%c0, %c0_0] : memref<24x768xf32, #tpu.memory_space<vmem>>, vector<24x768xf32>
    %c0_1 = arith.constant 0 : index
    %c0_2 = arith.constant 0 : index
    %1 = vector.load %arg3[%c0_1, %c0_2] : memref<768x128xf32, #tpu.memory_space<vmem>>, vector<768x128xf32>
    %cst = arith.constant dense<0.000000e+00> : vector<24x128xf32>
    %2 = tpu.matmul %0, %1, %cst {dimension_numbers = #tpu.dot_dimension_numbers<[1], [0], [0], [1], [0, 0, 1, 1], [], []>} : vector<24x768xf32>, vector<768x128xf32>, vector<24x128xf32> -> vector<24x128xf32>
    %c0_3 = arith.constant 0 : index
    %c0_4 = arith.constant 0 : index
    %3 = vector.load %arg4[%c0_3, %c0_4] : memref<1x128xf32, #tpu.memory_space<vmem>>, vector<1x128xf32>
    %4 = vector.broadcast %3 : vector<1x128xf32> to vector<24x128xf32>
    %5 = arith.addf %2, %4 : vector<24x128xf32>
    %6 = math.tanh %5 : vector<24x128xf32>
    %c0_5 = arith.constant 0 : index
    %c0_6 = arith.constant 0 : index
    %c0_7 = arith.constant 0 : index
    %7 = vector.load %arg25[%c0_5, %c0_6, %c0_7] : memref<3x24x128xf32, #tpu.memory_space<vmem>>, vector<1x24x128xf32>
    %8 = vector.shape_cast %7 : vector<1x24x128xf32> to vector<24x128xf32>
    %9 = vector.shape_cast %6 : vector<24x128xf32> to vector<1x24x128xf32>
    tpu.vector_store %arg25[%c0_5, %c0_6, %c0_7], %9 {strides = array<i32>} : memref<3x24x128xf32, #tpu.memory_space<vmem>>, vector<1x24x128xf32>,
    %c0_8 = arith.constant 0 : index
    %c0_9 = arith.constant 0 : index
    %c0_10 = arith.constant 0 : index
    %10 = vector.load %arg7[%c0_8, %c0_9, %c0_10] : memref<2x128x512xf32, #tpu.memory_space<vmem>>, vector<1x128x512xf32>
    %11 = vector.shape_cast %10 : vector<1x128x512xf32> to vector<128x512xf32>
    %cst_11 = arith.constant dense<0.000000e+00> : vector<24x512xf32>
    %12 = tpu.matmul %6, %11, %cst_11 {dimension_numbers = #tpu.dot_dimension_numbers<[1], [0], [0], [1], [0, 0, 1, 1], [], []>} : vector<24x128xf32>, vector<128x512xf32>, vector<24x512xf32> -> vector<24x512xf32>
    %c0_12 = arith.constant 0 : index
    %c0_13 = arith.constant 0 : index
    %c0_14 = arith.constant 0 : index
    %13 = vector.load %arg8[%c0_12, %c0_13, %c0_14] : memref<2x1x512xf32, #tpu.memory_space<vmem>>, vector<1x1x512xf32>
    %14 = vector.shape_cast %13 : vector<1x1x512xf32> to vector<1x512xf32>
    %15 = vector.broadcast %14 : vector<1x512xf32> to vector<24x512xf32>
    %16 = arith.addf %12, %15 : vector<24x512xf32>
    %cst_15 = arith.constant 5.000000e-01 : f32
    %17 = vector.broadcast %cst_15 : f32 to vector<24x512xf32>
    %18 = arith.mulf %17, %16 : vector<24x512xf32>
    %cst_16 = arith.constant 4.471500e-02 : f32
    %19 = vector.broadcast %cst_16 : f32 to vector<24x512xf32>
    %20 = arith.mulf %19, %16 : vector<24x512xf32>
    %21 = arith.mulf %20, %16 : vector<24x512xf32>
    %22 = arith.mulf %21, %16 : vector<24x512xf32>
    %23 = arith.addf %16, %22 : vector<24x512xf32>
    %cst_17 = arith.constant 0.797884583 : f32
    %24 = vector.broadcast %cst_17 : f32 to vector<24x512xf32>
    %25 = arith.mulf %24, %23 : vector<24x512xf32>
    %26 = math.tanh %25 : vector<24x512xf32>
    %cst_18 = arith.constant 1.000000e+00 : f32
    %27 = vector.broadcast %cst_18 : f32 to vector<24x512xf32>
    %28 = arith.addf %27, %26 : vector<24x512xf32>
    %29 = arith.mulf %18, %28 : vector<24x512xf32>
    %c0_19 = arith.constant 0 : index
    %c0_20 = arith.constant 0 : index
    %c0_21 = arith.constant 0 : index
    %30 = vector.load %arg9[%c0_19, %c0_20, %c0_21] : memref<2x512x128xf32, #tpu.memory_space<vmem>>, vector<1x512x128xf32>
    %31 = vector.shape_cast %30 : vector<1x512x128xf32> to vector<512x128xf32>
    %cst_22 = arith.constant dense<0.000000e+00> : vector<24x128xf32>
    %32 = tpu.matmul %29, %31, %cst_22 {dimension_numbers = #tpu.dot_dimension_numbers<[1], [0], [0], [1], [0, 0, 1, 1], [], []>} : vector<24x512xf32>, vector<512x128xf32>, vector<24x128xf32> -> vector<24x128xf32>
    %c0_23 = arith.constant 0 : index
    %c0_24 = arith.constant 0 : index
    %c0_25 = arith.constant 0 : index
    %33 = vector.load %arg10[%c0_23, %c0_24, %c0_25] : memref<2x1x128xf32, #tpu.memory_space<vmem>>, vector<1x1x128xf32>
    %34 = vector.shape_cast %33 : vector<1x1x128xf32> to vector<1x128xf32>
    %35 = vector.broadcast %34 : vector<1x128xf32> to vector<24x128xf32>
    %36 = arith.addf %32, %35 : vector<24x128xf32>
    %37 = arith.addf %6, %36 : vector<24x128xf32>
    %cst_26 = arith.constant dense<0.000000e+00> : vector<24xf32>
    %38 = vector.multi_reduction <add>, %37, %cst_26 [1] : vector<24x128xf32> to vector<24xf32>
    %39 = vector.shape_cast %38 : vector<24xf32> to vector<24x1xf32>
    %cst_27 = arith.constant 1.280000e+02 : f32
    %40 = vector.broadcast %cst_27 : f32 to vector<24x1xf32>
    %41 = arith.divf %39, %40 : vector<24x1xf32>
    %42 = vector.broadcast %41 : vector<24x1xf32> to vector<24x128xf32>
    %43 = arith.subf %37, %42 : vector<24x128xf32>
    %44 = arith.mulf %43, %43 : vector<24x128xf32>
    %cst_28 = arith.constant dense<0.000000e+00> : vector<24xf32>
    %45 = vector.multi_reduction <add>, %44, %cst_28 [1] : vector<24x128xf32> to vector<24xf32>
    %46 = vector.shape_cast %45 : vector<24xf32> to vector<24x1xf32>
    %cst_29 = arith.constant 1.280000e+02 : f32
    %47 = vector.broadcast %cst_29 : f32 to vector<24x1xf32>
    %48 = arith.divf %46, %47 : vector<24x1xf32>
    %49 = vector.broadcast %41 : vector<24x1xf32> to vector<24x128xf32>
    %50 = arith.subf %37, %49 : vector<24x128xf32>
    %cst_30 = arith.constant 9.99999974E-6 : f32
    %51 = vector.broadcast %cst_30 : f32 to vector<24x1xf32>
    %52 = arith.addf %48, %51 : vector<24x1xf32>
    %53 = math.rsqrt %52 : vector<24x1xf32>
    %54 = vector.broadcast %53 : vector<24x1xf32> to vector<24x128xf32>
    %55 = arith.mulf %50, %54 : vector<24x128xf32>
    %c0_31 = arith.constant 0 : index
    %c0_32 = arith.constant 0 : index
    %c0_33 = arith.constant 0 : index
    %56 = vector.load %arg11[%c0_31, %c0_32, %c0_33] : memref<2x1x128xf32, #tpu.memory_space<vmem>>, vector<1x1x128xf32>
    %57 = vector.shape_cast %56 : vector<1x1x128xf32> to vector<1x128xf32>
    %58 = vector.broadcast %57 : vector<1x128xf32> to vector<24x128xf32>
    %59 = arith.mulf %55, %58 : vector<24x128xf32>
    %c0_34 = arith.constant 0 : index
    %c0_35 = arith.constant 0 : index
    %c0_36 = arith.constant 0 : index
    %60 = vector.load %arg12[%c0_34, %c0_35, %c0_36] : memref<2x1x128xf32, #tpu.memory_space<vmem>>, vector<1x1x128xf32>
    %61 = vector.shape_cast %60 : vector<1x1x128xf32> to vector<1x128xf32>
    %62 = vector.broadcast %61 : vector<1x128xf32> to vector<24x128xf32>
    %63 = arith.addf %59, %62 : vector<24x128xf32>
    %c1 = arith.constant 1 : index
    %c0_37 = arith.constant 0 : index
    %c0_38 = arith.constant 0 : index
    %64 = vector.load %arg25[%c1, %c0_37, %c0_38] : memref<3x24x128xf32, #tpu.memory_space<vmem>>, vector<1x24x128xf32>
    %65 = vector.shape_cast %64 : vector<1x24x128xf32> to vector<24x128xf32>
    %66 = vector.shape_cast %63 : vector<24x128xf32> to vector<1x24x128xf32>
    tpu.vector_store %arg25[%c1, %c0_37, %c0_38], %66 {strides = array<i32>} : memref<3x24x128xf32, #tpu.memory_space<vmem>>, vector<1x24x128xf32>,
    %c1_39 = arith.constant 1 : index
    %c0_40 = arith.constant 0 : index
    %c0_41 = arith.constant 0 : index
    %67 = vector.load %arg7[%c1_39, %c0_40, %c0_41] : memref<2x128x512xf32, #tpu.memory_space<vmem>>, vector<1x128x512xf32>
    %68 = vector.shape_cast %67 : vector<1x128x512xf32> to vector<128x512xf32>
    %cst_42 = arith.constant dense<0.000000e+00> : vector<24x512xf32>
    %69 = tpu.matmul %63, %68, %cst_42 {dimension_numbers = #tpu.dot_dimension_numbers<[1], [0], [0], [1], [0, 0, 1, 1], [], []>} : vector<24x128xf32>, vector<128x512xf32>, vector<24x512xf32> -> vector<24x512xf32>
    %c1_43 = arith.constant 1 : index
    %c0_44 = arith.constant 0 : index
    %c0_45 = arith.constant 0 : index
    %70 = vector.load %arg8[%c1_43, %c0_44, %c0_45] : memref<2x1x512xf32, #tpu.memory_space<vmem>>, vector<1x1x512xf32>
    %71 = vector.shape_cast %70 : vector<1x1x512xf32> to vector<1x512xf32>
    %72 = vector.broadcast %71 : vector<1x512xf32> to vector<24x512xf32>
    %73 = arith.addf %69, %72 : vector<24x512xf32>
    %cst_46 = arith.constant 5.000000e-01 : f32
    %74 = vector.broadcast %cst_46 : f32 to vector<24x512xf32>
    %75 = arith.mulf %74, %73 : vector<24x512xf32>
    %cst_47 = arith.constant 4.471500e-02 : f32
    %76 = vector.broadcast %cst_47 : f32 to vector<24x512xf32>
    %77 = arith.mulf %76, %73 : vector<24x512xf32>
    %78 = arith.mulf %77, %73 : vector<24x512xf32>
    %79 = arith.mulf %78, %73 : vector<24x512xf32>
    %80 = arith.addf %73, %79 : vector<24x512xf32>
    %cst_48 = arith.constant 0.797884583 : f32
    %81 = vector.broadcast %cst_48 : f32 to vector<24x512xf32>
    %82 = arith.mulf %81, %80 : vector<24x512xf32>
    %83 = math.tanh %82 : vector<24x512xf32>
    %cst_49 = arith.constant 1.000000e+00 : f32
    %84 = vector.broadcast %cst_49 : f32 to vector<24x512xf32>
    %85 = arith.addf %84, %83 : vector<24x512xf32>
    %86 = arith.mulf %75, %85 : vector<24x512xf32>
    %c1_50 = arith.constant 1 : index
    %c0_51 = arith.constant 0 : index
    %c0_52 = arith.constant 0 : index
    %87 = vector.load %arg9[%c1_50, %c0_51, %c0_52] : memref<2x512x128xf32, #tpu.memory_space<vmem>>, vector<1x512x128xf32>
    %88 = vector.shape_cast %87 : vector<1x512x128xf32> to vector<512x128xf32>
    %cst_53 = arith.constant dense<0.000000e+00> : vector<24x128xf32>
    %89 = tpu.matmul %86, %88, %cst_53 {dimension_numbers = #tpu.dot_dimension_numbers<[1], [0], [0], [1], [0, 0, 1, 1], [], []>} : vector<24x512xf32>, vector<512x128xf32>, vector<24x128xf32> -> vector<24x128xf32>
    %c1_54 = arith.constant 1 : index
    %c0_55 = arith.constant 0 : index
    %c0_56 = arith.constant 0 : index
    %90 = vector.load %arg10[%c1_54, %c0_55, %c0_56] : memref<2x1x128xf32, #tpu.memory_space<vmem>>, vector<1x1x128xf32>
    %91 = vector.shape_cast %90 : vector<1x1x128xf32> to vector<1x128xf32>
    %92 = vector.broadcast %91 : vector<1x128xf32> to vector<24x128xf32>
    %93 = arith.addf %89, %92 : vector<24x128xf32>
    %94 = arith.addf %63, %93 : vector<24x128xf32>
    %cst_57 = arith.constant dense<0.000000e+00> : vector<24xf32>
    %95 = vector.multi_reduction <add>, %94, %cst_57 [1] : vector<24x128xf32> to vector<24xf32>
    %96 = vector.shape_cast %95 : vector<24xf32> to vector<24x1xf32>
    %cst_58 = arith.constant 1.280000e+02 : f32
    %97 = vector.broadcast %cst_58 : f32 to vector<24x1xf32>
    %98 = arith.divf %96, %97 : vector<24x1xf32>
    %99 = vector.broadcast %98 : vector<24x1xf32> to vector<24x128xf32>
    %100 = arith.subf %94, %99 : vector<24x128xf32>
    %101 = arith.mulf %100, %100 : vector<24x128xf32>
    %cst_59 = arith.constant dense<0.000000e+00> : vector<24xf32>
    %102 = vector.multi_reduction <add>, %101, %cst_59 [1] : vector<24x128xf32> to vector<24xf32>
    %103 = vector.shape_cast %102 : vector<24xf32> to vector<24x1xf32>
    %cst_60 = arith.constant 1.280000e+02 : f32
    %104 = vector.broadcast %cst_60 : f32 to vector<24x1xf32>
    %105 = arith.divf %103, %104 : vector<24x1xf32>
    %106 = vector.broadcast %98 : vector<24x1xf32> to vector<24x128xf32>
    %107 = arith.subf %94, %106 : vector<24x128xf32>
    %cst_61 = arith.constant 9.99999974E-6 : f32
    %108 = vector.broadcast %cst_61 : f32 to vector<24x1xf32>
    %109 = arith.addf %105, %108 : vector<24x1xf32>
    %110 = math.rsqrt %109 : vector<24x1xf32>
    %111 = vector.broadcast %110 : vector<24x1xf32> to vector<24x128xf32>
    %112 = arith.mulf %107, %111 : vector<24x128xf32>
    %c1_62 = arith.constant 1 : index
    %c0_63 = arith.constant 0 : index
    %c0_64 = arith.constant 0 : index
    %113 = vector.load %arg11[%c1_62, %c0_63, %c0_64] : memref<2x1x128xf32, #tpu.memory_space<vmem>>, vector<1x1x128xf32>
    %114 = vector.shape_cast %113 : vector<1x1x128xf32> to vector<1x128xf32>
    %115 = vector.broadcast %114 : vector<1x128xf32> to vector<24x128xf32>
    %116 = arith.mulf %112, %115 : vector<24x128xf32>
    %c1_65 = arith.constant 1 : index
    %c0_66 = arith.constant 0 : index
    %c0_67 = arith.constant 0 : index
    %117 = vector.load %arg12[%c1_65, %c0_66, %c0_67] : memref<2x1x128xf32, #tpu.memory_space<vmem>>, vector<1x1x128xf32>
    %118 = vector.shape_cast %117 : vector<1x1x128xf32> to vector<1x128xf32>
    %119 = vector.broadcast %118 : vector<1x128xf32> to vector<24x128xf32>
    %120 = arith.addf %116, %119 : vector<24x128xf32>
    %c2 = arith.constant 2 : index
    %c0_68 = arith.constant 0 : index
    %c0_69 = arith.constant 0 : index
    %121 = vector.load %arg25[%c2, %c0_68, %c0_69] : memref<3x24x128xf32, #tpu.memory_space<vmem>>, vector<1x24x128xf32>
    %122 = vector.shape_cast %121 : vector<1x24x128xf32> to vector<24x128xf32>
    %123 = vector.shape_cast %120 : vector<24x128xf32> to vector<1x24x128xf32>
    tpu.vector_store %arg25[%c2, %c0_68, %c0_69], %123 {strides = array<i32>} : memref<3x24x128xf32, #tpu.memory_space<vmem>>, vector<1x24x128xf32>,
    %c0_70 = arith.constant 0 : index
    %c0_71 = arith.constant 0 : index
    %124 = vector.load %arg2[%c0_70, %c0_71] : memref<16x128xf32, #tpu.memory_space<vmem>>, vector<16x128xf32>
    %c0_72 = arith.constant 0 : index
    %c0_73 = arith.constant 0 : index
    %125 = vector.load %arg5[%c0_72, %c0_73] : memref<128x128xf32, #tpu.memory_space<vmem>>, vector<128x128xf32>
    %cst_74 = arith.constant dense<0.000000e+00> : vector<16x128xf32>
    %126 = tpu.matmul %124, %125, %cst_74 {dimension_numbers = #tpu.dot_dimension_numbers<[1], [0], [0], [1], [0, 0, 1, 1], [], []>} : vector<16x128xf32>, vector<128x128xf32>, vector<16x128xf32> -> vector<16x128xf32>
    %c0_75 = arith.constant 0 : index
    %c0_76 = arith.constant 0 : index
    %127 = vector.load %arg6[%c0_75, %c0_76] : memref<1x128xf32, #tpu.memory_space<vmem>>, vector<1x128xf32>
    %128 = vector.broadcast %127 : vector<1x128xf32> to vector<16x128xf32>
    %129 = arith.addf %126, %128 : vector<16x128xf32>
    %130 = math.tanh %129 : vector<16x128xf32>
    %c0_77 = arith.constant 0 : index
    %c0_78 = arith.constant 0 : index
    %c0_79 = arith.constant 0 : index
    %131 = vector.load %arg26[%c0_77, %c0_78, %c0_79] : memref<3x16x128xf32, #tpu.memory_space<vmem>>, vector<1x16x128xf32>
    %132 = vector.shape_cast %131 : vector<1x16x128xf32> to vector<16x128xf32>
    %133 = vector.shape_cast %130 : vector<16x128xf32> to vector<1x16x128xf32>
    tpu.vector_store %arg26[%c0_77, %c0_78, %c0_79], %133 {strides = array<i32>} : memref<3x16x128xf32, #tpu.memory_space<vmem>>, vector<1x16x128xf32>,
    %c0_80 = arith.constant 0 : index
    %c0_81 = arith.constant 0 : index
    %c0_82 = arith.constant 0 : index
    %134 = vector.load %arg13[%c0_80, %c0_81, %c0_82] : memref<2x128x512xf32, #tpu.memory_space<vmem>>, vector<1x128x512xf32>
    %135 = vector.shape_cast %134 : vector<1x128x512xf32> to vector<128x512xf32>
    %cst_83 = arith.constant dense<0.000000e+00> : vector<16x512xf32>
    %136 = tpu.matmul %130, %135, %cst_83 {dimension_numbers = #tpu.dot_dimension_numbers<[1], [0], [0], [1], [0, 0, 1, 1], [], []>} : vector<16x128xf32>, vector<128x512xf32>, vector<16x512xf32> -> vector<16x512xf32>
    %c0_84 = arith.constant 0 : index
    %c0_85 = arith.constant 0 : index
    %c0_86 = arith.constant 0 : index
    %137 = vector.load %arg14[%c0_84, %c0_85, %c0_86] : memref<2x1x512xf32, #tpu.memory_space<vmem>>, vector<1x1x512xf32>
    %138 = vector.shape_cast %137 : vector<1x1x512xf32> to vector<1x512xf32>
    %139 = vector.broadcast %138 : vector<1x512xf32> to vector<16x512xf32>
    %140 = arith.addf %136, %139 : vector<16x512xf32>
    %cst_87 = arith.constant 5.000000e-01 : f32
    %141 = vector.broadcast %cst_87 : f32 to vector<16x512xf32>
    %142 = arith.mulf %141, %140 : vector<16x512xf32>
    %cst_88 = arith.constant 4.471500e-02 : f32
    %143 = vector.broadcast %cst_88 : f32 to vector<16x512xf32>
    %144 = arith.mulf %143, %140 : vector<16x512xf32>
    %145 = arith.mulf %144, %140 : vector<16x512xf32>
    %146 = arith.mulf %145, %140 : vector<16x512xf32>
    %147 = arith.addf %140, %146 : vector<16x512xf32>
    %cst_89 = arith.constant 0.797884583 : f32
    %148 = vector.broadcast %cst_89 : f32 to vector<16x512xf32>
    %149 = arith.mulf %148, %147 : vector<16x512xf32>
    %150 = math.tanh %149 : vector<16x512xf32>
    %cst_90 = arith.constant 1.000000e+00 : f32
    %151 = vector.broadcast %cst_90 : f32 to vector<16x512xf32>
    %152 = arith.addf %151, %150 : vector<16x512xf32>
    %153 = arith.mulf %142, %152 : vector<16x512xf32>
    %c0_91 = arith.constant 0 : index
    %c0_92 = arith.constant 0 : index
    %c0_93 = arith.constant 0 : index
    %154 = vector.load %arg15[%c0_91, %c0_92, %c0_93] : memref<2x512x128xf32, #tpu.memory_space<vmem>>, vector<1x512x128xf32>
    %155 = vector.shape_cast %154 : vector<1x512x128xf32> to vector<512x128xf32>
    %cst_94 = arith.constant dense<0.000000e+00> : vector<16x128xf32>
    %156 = tpu.matmul %153, %155, %cst_94 {dimension_numbers = #tpu.dot_dimension_numbers<[1], [0], [0], [1], [0, 0, 1, 1], [], []>} : vector<16x512xf32>, vector<512x128xf32>, vector<16x128xf32> -> vector<16x128xf32>
    %c0_95 = arith.constant 0 : index
    %c0_96 = arith.constant 0 : index
    %c0_97 = arith.constant 0 : index
    %157 = vector.load %arg16[%c0_95, %c0_96, %c0_97] : memref<2x1x128xf32, #tpu.memory_space<vmem>>, vector<1x1x128xf32>
    %158 = vector.shape_cast %157 : vector<1x1x128xf32> to vector<1x128xf32>
    %159 = vector.broadcast %158 : vector<1x128xf32> to vector<16x128xf32>
    %160 = arith.addf %156, %159 : vector<16x128xf32>
    %161 = arith.addf %130, %160 : vector<16x128xf32>
    %cst_98 = arith.constant dense<0.000000e+00> : vector<16xf32>
    %162 = vector.multi_reduction <add>, %161, %cst_98 [1] : vector<16x128xf32> to vector<16xf32>
    %163 = vector.shape_cast %162 : vector<16xf32> to vector<16x1xf32>
    %cst_99 = arith.constant 1.280000e+02 : f32
    %164 = vector.broadcast %cst_99 : f32 to vector<16x1xf32>
    %165 = arith.divf %163, %164 : vector<16x1xf32>
    %166 = vector.broadcast %165 : vector<16x1xf32> to vector<16x128xf32>
    %167 = arith.subf %161, %166 : vector<16x128xf32>
    %168 = arith.mulf %167, %167 : vector<16x128xf32>
    %cst_100 = arith.constant dense<0.000000e+00> : vector<16xf32>
    %169 = vector.multi_reduction <add>, %168, %cst_100 [1] : vector<16x128xf32> to vector<16xf32>
    %170 = vector.shape_cast %169 : vector<16xf32> to vector<16x1xf32>
    %cst_101 = arith.constant 1.280000e+02 : f32
    %171 = vector.broadcast %cst_101 : f32 to vector<16x1xf32>
    %172 = arith.divf %170, %171 : vector<16x1xf32>
    %173 = vector.broadcast %165 : vector<16x1xf32> to vector<16x128xf32>
    %174 = arith.subf %161, %173 : vector<16x128xf32>
    %cst_102 = arith.constant 9.99999974E-6 : f32
    %175 = vector.broadcast %cst_102 : f32 to vector<16x1xf32>
    %176 = arith.addf %172, %175 : vector<16x1xf32>
    %177 = math.rsqrt %176 : vector<16x1xf32>
    %178 = vector.broadcast %177 : vector<16x1xf32> to vector<16x128xf32>
    %179 = arith.mulf %174, %178 : vector<16x128xf32>
    %c0_103 = arith.constant 0 : index
    %c0_104 = arith.constant 0 : index
    %c0_105 = arith.constant 0 : index
    %180 = vector.load %arg17[%c0_103, %c0_104, %c0_105] : memref<2x1x128xf32, #tpu.memory_space<vmem>>, vector<1x1x128xf32>
    %181 = vector.shape_cast %180 : vector<1x1x128xf32> to vector<1x128xf32>
    %182 = vector.broadcast %181 : vector<1x128xf32> to vector<16x128xf32>
    %183 = arith.mulf %179, %182 : vector<16x128xf32>
    %c0_106 = arith.constant 0 : index
    %c0_107 = arith.constant 0 : index
    %c0_108 = arith.constant 0 : index
    %184 = vector.load %arg18[%c0_106, %c0_107, %c0_108] : memref<2x1x128xf32, #tpu.memory_space<vmem>>, vector<1x1x128xf32>
    %185 = vector.shape_cast %184 : vector<1x1x128xf32> to vector<1x128xf32>
    %186 = vector.broadcast %185 : vector<1x128xf32> to vector<16x128xf32>
    %187 = arith.addf %183, %186 : vector<16x128xf32>
    %c1_109 = arith.constant 1 : index
    %c0_110 = arith.constant 0 : index
    %c0_111 = arith.constant 0 : index
    %188 = vector.load %arg26[%c1_109, %c0_110, %c0_111] : memref<3x16x128xf32, #tpu.memory_space<vmem>>, vector<1x16x128xf32>
    %189 = vector.shape_cast %188 : vector<1x16x128xf32> to vector<16x128xf32>
    %190 = vector.shape_cast %187 : vector<16x128xf32> to vector<1x16x128xf32>
    tpu.vector_store %arg26[%c1_109, %c0_110, %c0_111], %190 {strides = array<i32>} : memref<3x16x128xf32, #tpu.memory_space<vmem>>, vector<1x16x128xf32>,
    %c1_112 = arith.constant 1 : index
    %c0_113 = arith.constant 0 : index
    %c0_114 = arith.constant 0 : index
    %191 = vector.load %arg13[%c1_112, %c0_113, %c0_114] : memref<2x128x512xf32, #tpu.memory_space<vmem>>, vector<1x128x512xf32>
    %192 = vector.shape_cast %191 : vector<1x128x512xf32> to vector<128x512xf32>
    %cst_115 = arith.constant dense<0.000000e+00> : vector<16x512xf32>
    %193 = tpu.matmul %187, %192, %cst_115 {dimension_numbers = #tpu.dot_dimension_numbers<[1], [0], [0], [1], [0, 0, 1, 1], [], []>} : vector<16x128xf32>, vector<128x512xf32>, vector<16x512xf32> -> vector<16x512xf32>
    %c1_116 = arith.constant 1 : index
    %c0_117 = arith.constant 0 : index
    %c0_118 = arith.constant 0 : index
    %194 = vector.load %arg14[%c1_116, %c0_117, %c0_118] : memref<2x1x512xf32, #tpu.memory_space<vmem>>, vector<1x1x512xf32>
    %195 = vector.shape_cast %194 : vector<1x1x512xf32> to vector<1x512xf32>
    %196 = vector.broadcast %195 : vector<1x512xf32> to vector<16x512xf32>
    %197 = arith.addf %193, %196 : vector<16x512xf32>
    %cst_119 = arith.constant 5.000000e-01 : f32
    %198 = vector.broadcast %cst_119 : f32 to vector<16x512xf32>
    %199 = arith.mulf %198, %197 : vector<16x512xf32>
    %cst_120 = arith.constant 4.471500e-02 : f32
    %200 = vector.broadcast %cst_120 : f32 to vector<16x512xf32>
    %201 = arith.mulf %200, %197 : vector<16x512xf32>
    %202 = arith.mulf %201, %197 : vector<16x512xf32>
    %203 = arith.mulf %202, %197 : vector<16x512xf32>
    %204 = arith.addf %197, %203 : vector<16x512xf32>
    %cst_121 = arith.constant 0.797884583 : f32
    %205 = vector.broadcast %cst_121 : f32 to vector<16x512xf32>
    %206 = arith.mulf %205, %204 : vector<16x512xf32>
    %207 = math.tanh %206 : vector<16x512xf32>
    %cst_122 = arith.constant 1.000000e+00 : f32
    %208 = vector.broadcast %cst_122 : f32 to vector<16x512xf32>
    %209 = arith.addf %208, %207 : vector<16x512xf32>
    %210 = arith.mulf %199, %209 : vector<16x512xf32>
    %c1_123 = arith.constant 1 : index
    %c0_124 = arith.constant 0 : index
    %c0_125 = arith.constant 0 : index
    %211 = vector.load %arg15[%c1_123, %c0_124, %c0_125] : memref<2x512x128xf32, #tpu.memory_space<vmem>>, vector<1x512x128xf32>
    %212 = vector.shape_cast %211 : vector<1x512x128xf32> to vector<512x128xf32>
    %cst_126 = arith.constant dense<0.000000e+00> : vector<16x128xf32>
    %213 = tpu.matmul %210, %212, %cst_126 {dimension_numbers = #tpu.dot_dimension_numbers<[1], [0], [0], [1], [0, 0, 1, 1], [], []>} : vector<16x512xf32>, vector<512x128xf32>, vector<16x128xf32> -> vector<16x128xf32>
    %c1_127 = arith.constant 1 : index
    %c0_128 = arith.constant 0 : index
    %c0_129 = arith.constant 0 : index
    %214 = vector.load %arg16[%c1_127, %c0_128, %c0_129] : memref<2x1x128xf32, #tpu.memory_space<vmem>>, vector<1x1x128xf32>
    %215 = vector.shape_cast %214 : vector<1x1x128xf32> to vector<1x128xf32>
    %216 = vector.broadcast %215 : vector<1x128xf32> to vector<16x128xf32>
    %217 = arith.addf %213, %216 : vector<16x128xf32>
    %218 = arith.addf %187, %217 : vector<16x128xf32>
    %cst_130 = arith.constant dense<0.000000e+00> : vector<16xf32>
    %219 = vector.multi_reduction <add>, %218, %cst_130 [1] : vector<16x128xf32> to vector<16xf32>
    %220 = vector.shape_cast %219 : vector<16xf32> to vector<16x1xf32>
    %cst_131 = arith.constant 1.280000e+02 : f32
    %221 = vector.broadcast %cst_131 : f32 to vector<16x1xf32>
    %222 = arith.divf %220, %221 : vector<16x1xf32>
    %223 = vector.broadcast %222 : vector<16x1xf32> to vector<16x128xf32>
    %224 = arith.subf %218, %223 : vector<16x128xf32>
    %225 = arith.mulf %224, %224 : vector<16x128xf32>
    %cst_132 = arith.constant dense<0.000000e+00> : vector<16xf32>
    %226 = vector.multi_reduction <add>, %225, %cst_132 [1] : vector<16x128xf32> to vector<16xf32>
    %227 = vector.shape_cast %226 : vector<16xf32> to vector<16x1xf32>
    %cst_133 = arith.constant 1.280000e+02 : f32
    %228 = vector.broadcast %cst_133 : f32 to vector<16x1xf32>
    %229 = arith.divf %227, %228 : vector<16x1xf32>
    %230 = vector.broadcast %222 : vector<16x1xf32> to vector<16x128xf32>
    %231 = arith.subf %218, %230 : vector<16x128xf32>
    %cst_134 = arith.constant 9.99999974E-6 : f32
    %232 = vector.broadcast %cst_134 : f32 to vector<16x1xf32>
    %233 = arith.addf %229, %232 : vector<16x1xf32>
    %234 = math.rsqrt %233 : vector<16x1xf32>
    %235 = vector.broadcast %234 : vector<16x1xf32> to vector<16x128xf32>
    %236 = arith.mulf %231, %235 : vector<16x128xf32>
    %c1_135 = arith.constant 1 : index
    %c0_136 = arith.constant 0 : index
    %c0_137 = arith.constant 0 : index
    %237 = vector.load %arg17[%c1_135, %c0_136, %c0_137] : memref<2x1x128xf32, #tpu.memory_space<vmem>>, vector<1x1x128xf32>
    %238 = vector.shape_cast %237 : vector<1x1x128xf32> to vector<1x128xf32>
    %239 = vector.broadcast %238 : vector<1x128xf32> to vector<16x128xf32>
    %240 = arith.mulf %236, %239 : vector<16x128xf32>
    %c1_138 = arith.constant 1 : index
    %c0_139 = arith.constant 0 : index
    %c0_140 = arith.constant 0 : index
    %241 = vector.load %arg18[%c1_138, %c0_139, %c0_140] : memref<2x1x128xf32, #tpu.memory_space<vmem>>, vector<1x1x128xf32>
    %242 = vector.shape_cast %241 : vector<1x1x128xf32> to vector<1x128xf32>
    %243 = vector.broadcast %242 : vector<1x128xf32> to vector<16x128xf32>
    %244 = arith.addf %240, %243 : vector<16x128xf32>
    %c2_141 = arith.constant 2 : index
    %c0_142 = arith.constant 0 : index
    %c0_143 = arith.constant 0 : index
    %245 = vector.load %arg26[%c2_141, %c0_142, %c0_143] : memref<3x16x128xf32, #tpu.memory_space<vmem>>, vector<1x16x128xf32>
    %246 = vector.shape_cast %245 : vector<1x16x128xf32> to vector<16x128xf32>
    %247 = vector.shape_cast %244 : vector<16x128xf32> to vector<1x16x128xf32>
    tpu.vector_store %arg26[%c2_141, %c0_142, %c0_143], %247 {strides = array<i32>} : memref<3x16x128xf32, #tpu.memory_space<vmem>>, vector<1x16x128xf32>,
    %248 = tpu.concatenate %120, %244 in 0 : vector<24x128xf32>, vector<16x128xf32> -> vector<40x128xf32>
    %c0_144 = arith.constant 0 : index
    %c0_145 = arith.constant 0 : index
    %c0_146 = arith.constant 0 : index
    %249 = vector.load %arg27[%c0_144, %c0_145, %c0_146] : memref<3x40x128xf32, #tpu.memory_space<vmem>>, vector<1x40x128xf32>
    %250 = vector.shape_cast %249 : vector<1x40x128xf32> to vector<40x128xf32>
    %251 = vector.shape_cast %248 : vector<40x128xf32> to vector<1x40x128xf32>
    tpu.vector_store %arg27[%c0_144, %c0_145, %c0_146], %251 {strides = array<i32>} : memref<3x40x128xf32, #tpu.memory_space<vmem>>, vector<1x40x128xf32>,
    %c0_147 = arith.constant 0 : index
    %c0_148 = arith.constant 0 : index
    %c0_149 = arith.constant 0 : index
    %252 = vector.load %arg19[%c0_147, %c0_148, %c0_149] : memref<2x128x512xf32, #tpu.memory_space<vmem>>, vector<1x128x512xf32>
    %253 = vector.shape_cast %252 : vector<1x128x512xf32> to vector<128x512xf32>
    %cst_150 = arith.constant dense<0.000000e+00> : vector<40x512xf32>
    %254 = tpu.matmul %248, %253, %cst_150 {dimension_numbers = #tpu.dot_dimension_numbers<[1], [0], [0], [1], [0, 0, 1, 1], [], []>} : vector<40x128xf32>, vector<128x512xf32>, vector<40x512xf32> -> vector<40x512xf32>
    %c0_151 = arith.constant 0 : index
    %c0_152 = arith.constant 0 : index
    %c0_153 = arith.constant 0 : index
    %255 = vector.load %arg20[%c0_151, %c0_152, %c0_153] : memref<2x1x512xf32, #tpu.memory_space<vmem>>, vector<1x1x512xf32>
    %256 = vector.shape_cast %255 : vector<1x1x512xf32> to vector<1x512xf32>
    %257 = vector.broadcast %256 : vector<1x512xf32> to vector<40x512xf32>
    %258 = arith.addf %254, %257 : vector<40x512xf32>
    %cst_154 = arith.constant 5.000000e-01 : f32
    %259 = vector.broadcast %cst_154 : f32 to vector<40x512xf32>
    %260 = arith.mulf %259, %258 : vector<40x512xf32>
    %cst_155 = arith.constant 4.471500e-02 : f32
    %261 = vector.broadcast %cst_155 : f32 to vector<40x512xf32>
    %262 = arith.mulf %261, %258 : vector<40x512xf32>
    %263 = arith.mulf %262, %258 : vector<40x512xf32>
    %264 = arith.mulf %263, %258 : vector<40x512xf32>
    %265 = arith.addf %258, %264 : vector<40x512xf32>
    %cst_156 = arith.constant 0.797884583 : f32
    %266 = vector.broadcast %cst_156 : f32 to vector<40x512xf32>
    %267 = arith.mulf %266, %265 : vector<40x512xf32>
    %268 = math.tanh %267 : vector<40x512xf32>
    %cst_157 = arith.constant 1.000000e+00 : f32
    %269 = vector.broadcast %cst_157 : f32 to vector<40x512xf32>
    %270 = arith.addf %269, %268 : vector<40x512xf32>
    %271 = arith.mulf %260, %270 : vector<40x512xf32>
    %c0_158 = arith.constant 0 : index
    %c0_159 = arith.constant 0 : index
    %c0_160 = arith.constant 0 : index
    %272 = vector.load %arg21[%c0_158, %c0_159, %c0_160] : memref<2x512x128xf32, #tpu.memory_space<vmem>>, vector<1x512x128xf32>
    %273 = vector.shape_cast %272 : vector<1x512x128xf32> to vector<512x128xf32>
    %cst_161 = arith.constant dense<0.000000e+00> : vector<40x128xf32>
    %274 = tpu.matmul %271, %273, %cst_161 {dimension_numbers = #tpu.dot_dimension_numbers<[1], [0], [0], [1], [0, 0, 1, 1], [], []>} : vector<40x512xf32>, vector<512x128xf32>, vector<40x128xf32> -> vector<40x128xf32>
    %c0_162 = arith.constant 0 : index
    %c0_163 = arith.constant 0 : index
    %c0_164 = arith.constant 0 : index
    %275 = vector.load %arg22[%c0_162, %c0_163, %c0_164] : memref<2x1x128xf32, #tpu.memory_space<vmem>>, vector<1x1x128xf32>
    %276 = vector.shape_cast %275 : vector<1x1x128xf32> to vector<1x128xf32>
    %277 = vector.broadcast %276 : vector<1x128xf32> to vector<40x128xf32>
    %278 = arith.addf %274, %277 : vector<40x128xf32>
    %279 = arith.addf %248, %278 : vector<40x128xf32>
    %cst_165 = arith.constant dense<0.000000e+00> : vector<40xf32>
    %280 = vector.multi_reduction <add>, %279, %cst_165 [1] : vector<40x128xf32> to vector<40xf32>
    %281 = vector.shape_cast %280 : vector<40xf32> to vector<40x1xf32>
    %cst_166 = arith.constant 1.280000e+02 : f32
    %282 = vector.broadcast %cst_166 : f32 to vector<40x1xf32>
    %283 = arith.divf %281, %282 : vector<40x1xf32>
    %284 = vector.broadcast %283 : vector<40x1xf32> to vector<40x128xf32>
    %285 = arith.subf %279, %284 : vector<40x128xf32>
    %286 = arith.mulf %285, %285 : vector<40x128xf32>
    %cst_167 = arith.constant dense<0.000000e+00> : vector<40xf32>
    %287 = vector.multi_reduction <add>, %286, %cst_167 [1] : vector<40x128xf32> to vector<40xf32>
    %288 = vector.shape_cast %287 : vector<40xf32> to vector<40x1xf32>
    %cst_168 = arith.constant 1.280000e+02 : f32
    %289 = vector.broadcast %cst_168 : f32 to vector<40x1xf32>
    %290 = arith.divf %288, %289 : vector<40x1xf32>
    %291 = vector.broadcast %283 : vector<40x1xf32> to vector<40x128xf32>
    %292 = arith.subf %279, %291 : vector<40x128xf32>
    %cst_169 = arith.constant 9.99999974E-6 : f32
    %293 = vector.broadcast %cst_169 : f32 to vector<40x1xf32>
    %294 = arith.addf %290, %293 : vector<40x1xf32>
    %295 = math.rsqrt %294 : vector<40x1xf32>
    %296 = vector.broadcast %295 : vector<40x1xf32> to vector<40x128xf32>
    %297 = arith.mulf %292, %296 : vector<40x128xf32>
    %c0_170 = arith.constant 0 : index
    %c0_171 = arith.constant 0 : index
    %c0_172 = arith.constant 0 : index
    %298 = vector.load %arg23[%c0_170, %c0_171, %c0_172] : memref<2x1x128xf32, #tpu.memory_space<vmem>>, vector<1x1x128xf32>
    %299 = vector.shape_cast %298 : vector<1x1x128xf32> to vector<1x128xf32>
    %300 = vector.broadcast %299 : vector<1x128xf32> to vector<40x128xf32>
    %301 = arith.mulf %297, %300 : vector<40x128xf32>
    %c0_173 = arith.constant 0 : index
    %c0_174 = arith.constant 0 : index
    %c0_175 = arith.constant 0 : index
    %302 = vector.load %arg24[%c0_173, %c0_174, %c0_175] : memref<2x1x128xf32, #tpu.memory_space<vmem>>, vector<1x1x128xf32>
    %303 = vector.shape_cast %302 : vector<1x1x128xf32> to vector<1x128xf32>
    %304 = vector.broadcast %303 : vector<1x128xf32> to vector<40x128xf32>
    %305 = arith.addf %301, %304 : vector<40x128xf32>
    %c1_176 = arith.constant 1 : index
    %c0_177 = arith.constant 0 : index
    %c0_178 = arith.constant 0 : index
    %306 = vector.load %arg27[%c1_176, %c0_177, %c0_178] : memref<3x40x128xf32, #tpu.memory_space<vmem>>, vector<1x40x128xf32>
    %307 = vector.shape_cast %306 : vector<1x40x128xf32> to vector<40x128xf32>
    %308 = vector.shape_cast %305 : vector<40x128xf32> to vector<1x40x128xf32>
    tpu.vector_store %arg27[%c1_176, %c0_177, %c0_178], %308 {strides = array<i32>} : memref<3x40x128xf32, #tpu.memory_space<vmem>>, vector<1x40x128xf32>,
    %c1_179 = arith.constant 1 : index
    %c0_180 = arith.constant 0 : index
    %c0_181 = arith.constant 0 : index
    %309 = vector.load %arg19[%c1_179, %c0_180, %c0_181] : memref<2x128x512xf32, #tpu.memory_space<vmem>>, vector<1x128x512xf32>
    %310 = vector.shape_cast %309 : vector<1x128x512xf32> to vector<128x512xf32>
    %cst_182 = arith.constant dense<0.000000e+00> : vector<40x512xf32>
    %311 = tpu.matmul %305, %310, %cst_182 {dimension_numbers = #tpu.dot_dimension_numbers<[1], [0], [0], [1], [0, 0, 1, 1], [], []>} : vector<40x128xf32>, vector<128x512xf32>, vector<40x512xf32> -> vector<40x512xf32>
    %c1_183 = arith.constant 1 : index
    %c0_184 = arith.constant 0 : index
    %c0_185 = arith.constant 0 : index
    %312 = vector.load %arg20[%c1_183, %c0_184, %c0_185] : memref<2x1x512xf32, #tpu.memory_space<vmem>>, vector<1x1x512xf32>
    %313 = vector.shape_cast %312 : vector<1x1x512xf32> to vector<1x512xf32>
    %314 = vector.broadcast %313 : vector<1x512xf32> to vector<40x512xf32>
    %315 = arith.addf %311, %314 : vector<40x512xf32>
    %cst_186 = arith.constant 5.000000e-01 : f32
    %316 = vector.broadcast %cst_186 : f32 to vector<40x512xf32>
    %317 = arith.mulf %316, %315 : vector<40x512xf32>
    %cst_187 = arith.constant 4.471500e-02 : f32
    %318 = vector.broadcast %cst_187 : f32 to vector<40x512xf32>
    %319 = arith.mulf %318, %315 : vector<40x512xf32>
    %320 = arith.mulf %319, %315 : vector<40x512xf32>
    %321 = arith.mulf %320, %315 : vector<40x512xf32>
    %322 = arith.addf %315, %321 : vector<40x512xf32>
    %cst_188 = arith.constant 0.797884583 : f32
    %323 = vector.broadcast %cst_188 : f32 to vector<40x512xf32>
    %324 = arith.mulf %323, %322 : vector<40x512xf32>
    %325 = math.tanh %324 : vector<40x512xf32>
    %cst_189 = arith.constant 1.000000e+00 : f32
    %326 = vector.broadcast %cst_189 : f32 to vector<40x512xf32>
    %327 = arith.addf %326, %325 : vector<40x512xf32>
    %328 = arith.mulf %317, %327 : vector<40x512xf32>
    %c1_190 = arith.constant 1 : index
    %c0_191 = arith.constant 0 : index
    %c0_192 = arith.constant 0 : index
    %329 = vector.load %arg21[%c1_190, %c0_191, %c0_192] : memref<2x512x128xf32, #tpu.memory_space<vmem>>, vector<1x512x128xf32>
    %330 = vector.shape_cast %329 : vector<1x512x128xf32> to vector<512x128xf32>
    %cst_193 = arith.constant dense<0.000000e+00> : vector<40x128xf32>
    %331 = tpu.matmul %328, %330, %cst_193 {dimension_numbers = #tpu.dot_dimension_numbers<[1], [0], [0], [1], [0, 0, 1, 1], [], []>} : vector<40x512xf32>, vector<512x128xf32>, vector<40x128xf32> -> vector<40x128xf32>
    %c1_194 = arith.constant 1 : index
    %c0_195 = arith.constant 0 : index
    %c0_196 = arith.constant 0 : index
    %332 = vector.load %arg22[%c1_194, %c0_195, %c0_196] : memref<2x1x128xf32, #tpu.memory_space<vmem>>, vector<1x1x128xf32>
    %333 = vector.shape_cast %332 : vector<1x1x128xf32> to vector<1x128xf32>
    %334 = vector.broadcast %333 : vector<1x128xf32> to vector<40x128xf32>
    %335 = arith.addf %331, %334 : vector<40x128xf32>
    %336 = arith.addf %305, %335 : vector<40x128xf32>
    %cst_197 = arith.constant dense<0.000000e+00> : vector<40xf32>
    %337 = vector.multi_reduction <add>, %336, %cst_197 [1] : vector<40x128xf32> to vector<40xf32>
    %338 = vector.shape_cast %337 : vector<40xf32> to vector<40x1xf32>
    %cst_198 = arith.constant 1.280000e+02 : f32
    %339 = vector.broadcast %cst_198 : f32 to vector<40x1xf32>
    %340 = arith.divf %338, %339 : vector<40x1xf32>
    %341 = vector.broadcast %340 : vector<40x1xf32> to vector<40x128xf32>
    %342 = arith.subf %336, %341 : vector<40x128xf32>
    %343 = arith.mulf %342, %342 : vector<40x128xf32>
    %cst_199 = arith.constant dense<0.000000e+00> : vector<40xf32>
    %344 = vector.multi_reduction <add>, %343, %cst_199 [1] : vector<40x128xf32> to vector<40xf32>
    %345 = vector.shape_cast %344 : vector<40xf32> to vector<40x1xf32>
    %cst_200 = arith.constant 1.280000e+02 : f32
    %346 = vector.broadcast %cst_200 : f32 to vector<40x1xf32>
    %347 = arith.divf %345, %346 : vector<40x1xf32>
    %348 = vector.broadcast %340 : vector<40x1xf32> to vector<40x128xf32>
    %349 = arith.subf %336, %348 : vector<40x128xf32>
    %cst_201 = arith.constant 9.99999974E-6 : f32
    %350 = vector.broadcast %cst_201 : f32 to vector<40x1xf32>
    %351 = arith.addf %347, %350 : vector<40x1xf32>
    %352 = math.rsqrt %351 : vector<40x1xf32>
    %353 = vector.broadcast %352 : vector<40x1xf32> to vector<40x128xf32>
    %354 = arith.mulf %349, %353 : vector<40x128xf32>
    %c1_202 = arith.constant 1 : index
    %c0_203 = arith.constant 0 : index
    %c0_204 = arith.constant 0 : index
    %355 = vector.load %arg23[%c1_202, %c0_203, %c0_204] : memref<2x1x128xf32, #tpu.memory_space<vmem>>, vector<1x1x128xf32>
    %356 = vector.shape_cast %355 : vector<1x1x128xf32> to vector<1x128xf32>
    %357 = vector.broadcast %356 : vector<1x128xf32> to vector<40x128xf32>
    %358 = arith.mulf %354, %357 : vector<40x128xf32>
    %c1_205 = arith.constant 1 : index
    %c0_206 = arith.constant 0 : index
    %c0_207 = arith.constant 0 : index
    %359 = vector.load %arg24[%c1_205, %c0_206, %c0_207] : memref<2x1x128xf32, #tpu.memory_space<vmem>>, vector<1x1x128xf32>
    %360 = vector.shape_cast %359 : vector<1x1x128xf32> to vector<1x128xf32>
    %361 = vector.broadcast %360 : vector<1x128xf32> to vector<40x128xf32>
    %362 = arith.addf %358, %361 : vector<40x128xf32>
    %c2_208 = arith.constant 2 : index
    %c0_209 = arith.constant 0 : index
    %c0_210 = arith.constant 0 : index
    %363 = vector.load %arg27[%c2_208, %c0_209, %c0_210] : memref<3x40x128xf32, #tpu.memory_space<vmem>>, vector<1x40x128xf32>
    %364 = vector.shape_cast %363 : vector<1x40x128xf32> to vector<40x128xf32>
    %365 = vector.shape_cast %362 : vector<40x128xf32> to vector<1x40x128xf32>
    tpu.vector_store %arg27[%c2_208, %c0_209, %c0_210], %365 {strides = array<i32>} : memref<3x40x128xf32, #tpu.memory_space<vmem>>, vector<1x40x128xf32>,
    return
  }
  func.func @transform_0(%arg0: i32) -> (i32, i32) {
    %c0_i32 = arith.constant 0 : i32
    %c0_i32_0 = arith.constant 0 : i32
    %c0_i32_1 = arith.constant 0 : i32
    return %c0_i32, %c0_i32_0 : i32, i32
  }
  func.func @transform_1(%arg0: i32) -> (i32, i32) {
    %c0_i32 = arith.constant 0 : i32
    %c0_i32_0 = arith.constant 0 : i32
    %c0_i32_1 = arith.constant 0 : i32
    return %c0_i32, %c0_i32_0 : i32, i32
  }
  func.func @transform_2(%arg0: i32) -> (i32, i32) {
    %c0_i32 = arith.constant 0 : i32
    %c0_i32_0 = arith.constant 0 : i32
    %c0_i32_1 = arith.constant 0 : i32
    return %c0_i32, %c0_i32_0 : i32, i32
  }
  func.func @transform_3(%arg0: i32) -> (i32, i32) {
    %c0_i32 = arith.constant 0 : i32
    %c0_i32_0 = arith.constant 0 : i32
    %c0_i32_1 = arith.constant 0 : i32
    return %c0_i32, %c0_i32_0 : i32, i32
  }
  func.func @transform_4(%arg0: i32) -> (i32, i32) {
    %c0_i32 = arith.constant 0 : i32
    %c0_i32_0 = arith.constant 0 : i32
    %c0_i32_1 = arith.constant 0 : i32
    return %c0_i32, %c0_i32_0 : i32, i32
  }
  func.func @transform_5(%arg0: i32) -> (i32, i32) {
    %c0_i32 = arith.constant 0 : i32
    %c0_i32_0 = arith.constant 0 : i32
    %c0_i32_1 = arith.constant 0 : i32
    return %c0_i32, %c0_i32_0 : i32, i32
  }
  func.func @transform_6(%arg0: i32) -> (i32, i32, i32) {
    %c0_i32 = arith.constant 0 : i32
    %c0_i32_0 = arith.constant 0 : i32
    %c0_i32_1 = arith.constant 0 : i32
    %c0_i32_2 = arith.constant 0 : i32
    return %c0_i32, %c0_i32_0, %c0_i32_1 : i32, i32, i32
  }
  func.func @transform_7(%arg0: i32) -> (i32, i32, i32) {
    %c0_i32 = arith.constant 0 : i32
    %c0_i32_0 = arith.constant 0 : i32
    %c0_i32_1 = arith.constant 0 : i32
    %c0_i32_2 = arith.constant 0 : i32
    return %c0_i32, %c0_i32_0, %c0_i32_1 : i32, i32, i32
  }
  func.func @transform_8(%arg0: i32) -> (i32, i32, i32) {
    %c0_i32 = arith.constant 0 : i32
    %c0_i32_0 = arith.constant 0 : i32
    %c0_i32_1 = arith.constant 0 : i32
    %c0_i32_2 = arith.constant 0 : i32
    return %c0_i32, %c0_i32_0, %c0_i32_1 : i32, i32, i32
  }
  func.func @transform_9(%arg0: i32) -> (i32, i32, i32) {
    %c0_i32 = arith.constant 0 : i32
    %c0_i32_0 = arith.constant 0 : i32
    %c0_i32_1 = arith.constant 0 : i32
    %c0_i32_2 = arith.constant 0 : i32
    return %c0_i32, %c0_i32_0, %c0_i32_1 : i32, i32, i32
  }
  func.func @transform_10(%arg0: i32) -> (i32, i32, i32) {
    %c0_i32 = arith.constant 0 : i32
    %c0_i32_0 = arith.constant 0 : i32
    %c0_i32_1 = arith.constant 0 : i32
    %c0_i32_2 = arith.constant 0 : i32
    return %c0_i32, %c0_i32_0, %c0_i32_1 : i32, i32, i32
  }
  func.func @transform_11(%arg0: i32) -> (i32, i32, i32) {
    %c0_i32 = arith.constant 0 : i32
    %c0_i32_0 = arith.constant 0 : i32
    %c0_i32_1 = arith.constant 0 : i32
    %c0_i32_2 = arith.constant 0 : i32
    return %c0_i32, %c0_i32_0, %c0_i32_1 : i32, i32, i32
  }
  func.func @transform_12(%arg0: i32) -> (i32, i32, i32) {
    %c0_i32 = arith.constant 0 : i32
    %c0_i32_0 = arith.constant 0 : i32
    %c0_i32_1 = arith.constant 0 : i32
    %c0_i32_2 = arith.constant 0 : i32
    return %c0_i32, %c0_i32_0, %c0_i32_1 : i32, i32, i32
  }
  func.func @transform_13(%arg0: i32) -> (i32, i32, i32) {
    %c0_i32 = arith.constant 0 : i32
    %c0_i32_0 = arith.constant 0 : i32
    %c0_i32_1 = arith.constant 0 : i32
    %c0_i32_2 = arith.constant 0 : i32
    return %c0_i32, %c0_i32_0, %c0_i32_1 : i32, i32, i32
  }
  func.func @transform_14(%arg0: i32) -> (i32, i32, i32) {
    %c0_i32 = arith.constant 0 : i32
    %c0_i32_0 = arith.constant 0 : i32
    %c0_i32_1 = arith.constant 0 : i32
    %c0_i32_2 = arith.constant 0 : i32
    return %c0_i32, %c0_i32_0, %c0_i32_1 : i32, i32, i32
  }
  func.func @transform_15(%arg0: i32) -> (i32, i32, i32) {
    %c0_i32 = arith.constant 0 : i32
    %c0_i32_0 = arith.constant 0 : i32
    %c0_i32_1 = arith.constant 0 : i32
    %c0_i32_2 = arith.constant 0 : i32
    return %c0_i32, %c0_i32_0, %c0_i32_1 : i32, i32, i32
  }
  func.func @transform_16(%arg0: i32) -> (i32, i32, i32) {
    %c0_i32 = arith.constant 0 : i32
    %c0_i32_0 = arith.constant 0 : i32
    %c0_i32_1 = arith.constant 0 : i32
    %c0_i32_2 = arith.constant 0 : i32
    return %c0_i32, %c0_i32_0, %c0_i32_1 : i32, i32, i32
  }
  func.func @transform_17(%arg0: i32) -> (i32, i32, i32) {
    %c0_i32 = arith.constant 0 : i32
    %c0_i32_0 = arith.constant 0 : i32
    %c0_i32_1 = arith.constant 0 : i32
    %c0_i32_2 = arith.constant 0 : i32
    return %c0_i32, %c0_i32_0, %c0_i32_1 : i32, i32, i32
  }
  func.func @transform_18(%arg0: i32) -> (i32, i32, i32) {
    %c0_i32 = arith.constant 0 : i32
    %c0_i32_0 = arith.constant 0 : i32
    %c0_i32_1 = arith.constant 0 : i32
    %c0_i32_2 = arith.constant 0 : i32
    return %c0_i32, %c0_i32_0, %c0_i32_1 : i32, i32, i32
  }
  func.func @transform_19(%arg0: i32) -> (i32, i32, i32) {
    %c0_i32 = arith.constant 0 : i32
    %c0_i32_0 = arith.constant 0 : i32
    %c0_i32_1 = arith.constant 0 : i32
    %c0_i32_2 = arith.constant 0 : i32
    return %c0_i32, %c0_i32_0, %c0_i32_1 : i32, i32, i32
  }
  func.func @transform_20(%arg0: i32) -> (i32, i32, i32) {
    %c0_i32 = arith.constant 0 : i32
    %c0_i32_0 = arith.constant 0 : i32
    %c0_i32_1 = arith.constant 0 : i32
    %c0_i32_2 = arith.constant 0 : i32
    return %c0_i32, %c0_i32_0, %c0_i32_1 : i32, i32, i32
  }
  func.func @transform_21(%arg0: i32) -> (i32, i32, i32) {
    %c0_i32 = arith.constant 0 : i32
    %c0_i32_0 = arith.constant 0 : i32
    %c0_i32_1 = arith.constant 0 : i32
    %c0_i32_2 = arith.constant 0 : i32
    return %c0_i32, %c0_i32_0, %c0_i32_1 : i32, i32, i32
  }
  func.func @transform_22(%arg0: i32) -> (i32, i32, i32) {
    %c0_i32 = arith.constant 0 : i32
    %c0_i32_0 = arith.constant 0 : i32
    %c0_i32_1 = arith.constant 0 : i32
    %c0_i32_2 = arith.constant 0 : i32
    return %c0_i32, %c0_i32_0, %c0_i32_1 : i32, i32, i32
  }
  func.func @transform_23(%arg0: i32) -> (i32, i32, i32) {
    %c0_i32 = arith.constant 0 : i32
    %c0_i32_0 = arith.constant 0 : i32
    %c0_i32_1 = arith.constant 0 : i32
    %c0_i32_2 = arith.constant 0 : i32
    return %c0_i32, %c0_i32_0, %c0_i32_1 : i32, i32, i32
  }
  func.func @transform_24(%arg0: i32) -> (i32, i32, i32) {
    %c0_i32 = arith.constant 0 : i32
    %c0_i32_0 = arith.constant 0 : i32
    %c0_i32_1 = arith.constant 0 : i32
    %c0_i32_2 = arith.constant 0 : i32
    return %c0_i32, %c0_i32_0, %c0_i32_1 : i32, i32, i32
  }
  func.func @transform_25(%arg0: i32) -> (i32, i32, i32) {
    %c0_i32 = arith.constant 0 : i32
    %c0_i32_0 = arith.constant 0 : i32
    %c0_i32_1 = arith.constant 0 : i32
    %c0_i32_2 = arith.constant 0 : i32
    return %c0_i32, %c0_i32_0, %c0_i32_1 : i32, i32, i32
  }
  func.func @transform_26(%arg0: i32) -> (i32, i32, i32) {
    %c0_i32 = arith.constant 0 : i32
    %c0_i32_0 = arith.constant 0 : i32
    %c0_i32_1 = arith.constant 0 : i32
    %c0_i32_2 = arith.constant 0 : i32
    return %c0_i32, %c0_i32_0, %c0_i32_1 : i32, i32, i32
  }
}

</mosaic_0001>

<llo_original>
// kernel: _avbert_forward.1
$region0: #{_avbert_forward.1}
  #allocation0 [shape = 'u32[]', space=smem, size = 0x4, offset = 0x4, fixed_abs, tag = 'smem constant byte address 0x4 - core index']
  #allocation1 [shape = 'u32[144,128]{1,0:T(1,128)}', space=vmem, size = 0x12000, scoped, tag = 'internal scratch']
  %s0 = inlined_call_operand.vmem [shape: f32[24,768], index: 0, kind: input, shape index: {}]
  %s1 = inlined_call_operand.vmem [shape: f32[16,128], index: 1, kind: input, shape index: {}]
  %s2 = inlined_call_operand.hbm [shape: f32[768,128], index: 2, kind: input, shape index: {}]
  %s3 = inlined_call_operand.vmem [shape: f32[1,128], index: 3, kind: input, shape index: {}]
  %s4 = inlined_call_operand.vmem [shape: f32[128,128], index: 4, kind: input, shape index: {}]
  %s5 = inlined_call_operand.vmem [shape: f32[1,128], index: 5, kind: input, shape index: {}]
  %s6 = inlined_call_operand.vmem [shape: f32[2,128,512], index: 6, kind: input, shape index: {}]
  %s7 = inlined_call_operand.vmem [shape: f32[2,1,512], index: 7, kind: input, shape index: {}]
  %s8 = inlined_call_operand.hbm [shape: f32[2,512,128], index: 8, kind: input, shape index: {}]
  %s9 = inlined_call_operand.vmem [shape: f32[2,1,128], index: 9, kind: input, shape index: {}]
  %s10 = inlined_call_operand.vmem [shape: f32[2,1,128], index: 10, kind: input, shape index: {}]
  %s11 = inlined_call_operand.vmem [shape: f32[2,1,128], index: 11, kind: input, shape index: {}]
  %s12 = inlined_call_operand.hbm [shape: f32[2,128,512], index: 12, kind: input, shape index: {}]
  %s13 = inlined_call_operand.vmem [shape: f32[2,1,512], index: 13, kind: input, shape index: {}]
  %s14 = inlined_call_operand.hbm [shape: f32[2,512,128], index: 14, kind: input, shape index: {}]
  %s15 = inlined_call_operand.vmem [shape: f32[2,1,128], index: 15, kind: input, shape index: {}]
  %s16 = inlined_call_operand.vmem [shape: f32[2,1,128], index: 16, kind: input, shape index: {}]
  %s17 = inlined_call_operand.vmem [shape: f32[2,1,128], index: 17, kind: input, shape index: {}]
  %s18 = inlined_call_operand.hbm [shape: f32[2,128,512], index: 18, kind: input, shape index: {}]
  %s19 = inlined_call_operand.vmem [shape: f32[2,1,512], index: 19, kind: input, shape index: {}]
  %s20 = inlined_call_operand.hbm [shape: f32[2,512,128], index: 20, kind: input, shape index: {}]
  %s21 = inlined_call_operand.vmem [shape: f32[2,1,128], index: 21, kind: input, shape index: {}]
  %s22 = inlined_call_operand.vmem [shape: f32[2,1,128], index: 22, kind: input, shape index: {}]
  %s23 = inlined_call_operand.vmem [shape: f32[2,1,128], index: 23, kind: input, shape index: {}]
  %s24 = inlined_call_operand.vmem [shape: f32[3,24,128], index: 24, kind: output, shape index: {0}]
  %s25 = inlined_call_operand.vmem [shape: f32[3,16,128], index: 25, kind: output, shape index: {1}]
  %s26 = inlined_call_operand.vmem [shape: f32[3,40,128], index: 26, kind: output, shape index: {2}]
  %27 = xla_tuple %s24, %s25, %s26
  %s28 = sld [smem:[#allocation0]]
  $region146: #{_avbert_forward.1} parent=0
    _
  %s30 = ssub.s32 1, %s28
  %s31 = scalar_select 0, %s30, %s28
  $region1: #{_avbert_forward.1} parent=0
    #allocation2 [shape = 'u8[393216]{0}', space=vmem, size = 0x60000, scoped, tag = 'input window, operand 2, single buffered']
    #allocation3 [shape = 's32[1]{0}', space=sflag, size = 0x4, scoped, tag = 'scoped memory for _avbert_forward.1']
    #allocation4 [shape = 'u8[524288]{0}', space=vmem, size = 0x80000, scoped, tag = 'input window, operand 8, single buffered']
    #allocation5 [shape = 's32[1]{0}', space=sflag, size = 0x4, scoped, tag = 'scoped memory for _avbert_forward.1']
    #allocation6 [shape = 'u8[524288]{0}', space=vmem, size = 0x80000, scoped, tag = 'input window, operand 12, single buffered']
    #allocation7 [shape = 'u8[524288]{0}', space=vmem, size = 0x80000, scoped, tag = 'input window, operand 14, single buffered']
    #allocation8 [shape = 's32[1]{0}', space=sflag, size = 0x4, scoped, tag = 'scoped memory for _avbert_forward.1']
    #allocation9 [shape = 'u8[524288]{0}', space=vmem, size = 0x80000, scoped, tag = 'input window, operand 18, single buffered']
    #allocation10 [shape = 'u8[524288]{0}', space=vmem, size = 0x80000, scoped, tag = 'input window, operand 20, single buffered']
    #allocation11 [shape = 's32[1]{0}', space=sflag, size = 0x4, scoped, tag = 'scoped memory for _avbert_forward.1']
    %32 = vsyncpa [#allocation3], 0
    %33 = vsyncpa [#allocation5], 0
    %34 = vsyncpa [#allocation8], 0
    %35 = vsyncpa [#allocation11], 0
    // Predicated region
    $region2: #{_avbert_forward.1} parent=1 // pred_check
      _
    $region3: #{_avbert_forward.1} parent=1 // pred_check_branch
      %37 = sbr.rel (0) target = $region5
    $region4: #{_avbert_forward.1} parent=1 // pred_region
      _
    $region5: #{_avbert_forward.1} parent=1 // pred_fallthru
      _
    // Predicated region
    $region6: #{_avbert_forward.1} parent=1 // pred_check
      _
    $region7: #{_avbert_forward.1} parent=1 // pred_check_branch
      %39 = sbr.rel (0) target = $region9
    $region8: #{_avbert_forward.1} parent=1 // pred_region
      _
    $region9: #{_avbert_forward.1} parent=1 // pred_fallthru
      _
    // Predicated region
    $region10: #{_avbert_forward.1} parent=1 // pred_check
      _
    $region11: #{_avbert_forward.1} parent=1 // pred_check_branch
      %41 = sbr.rel (0) target = $region13
    $region12: #{_avbert_forward.1} parent=1 // pred_region
      %s43 = ssub.s32 12288, 12288
      %44 = vsyncadd [#allocation3], %s43
      %s45 = sshll.u32 [#allocation2], 4
      %s46 = int_to_ptr.vmem [resolvable:$true] %s45
      %51 = dma.hbm_to_vmem [thread:$0]  %s2, 12288, %s46, [#allocation3], 128, 128, 8
    $region13: #{_avbert_forward.1} parent=1 // pred_fallthru
      _
    // Predicated region
    $region14: #{_avbert_forward.1} parent=1 // pred_check
      _
    $region15: #{_avbert_forward.1} parent=1 // pred_check_branch
      %53 = sbr.rel (0) target = $region17
    $region16: #{_avbert_forward.1} parent=1 // pred_region
      _
    $region17: #{_avbert_forward.1} parent=1 // pred_fallthru
      _
    // Predicated region
    $region18: #{_avbert_forward.1} parent=1 // pred_check
      _
    $region19: #{_avbert_forward.1} parent=1 // pred_check_branch
      %55 = sbr.rel (0) target = $region21
    $region20: #{_avbert_forward.1} parent=1 // pred_region
      _
    $region21: #{_avbert_forward.1} parent=1 // pred_fallthru
      _
    // Predicated region
    $region22: #{_avbert_forward.1} parent=1 // pred_check
      _
    $region23: #{_avbert_forward.1} parent=1 // pred_check_branch
      %57 = sbr.rel (0) target = $region25
    $region24: #{_avbert_forward.1} parent=1 // pred_region
      _
    $region25: #{_avbert_forward.1} parent=1 // pred_fallthru
      _
    // Predicated region
    $region26: #{_avbert_forward.1} parent=1 // pred_check
      _
    $region27: #{_avbert_forward.1} parent=1 // pred_check_branch
      %59 = sbr.rel (0) target = $region29
    $region28: #{_avbert_forward.1} parent=1 // pred_region
      _
    $region29: #{_avbert_forward.1} parent=1 // pred_fallthru
      _
    // Predicated region
    $region30: #{_avbert_forward.1} parent=1 // pred_check
      _
    $region31: #{_avbert_forward.1} parent=1 // pred_check_branch
      %61 = sbr.rel (0) target = $region33
    $region32: #{_avbert_forward.1} parent=1 // pred_region
      _
    $region33: #{_avbert_forward.1} parent=1 // pred_fallthru
      _
    // Predicated region
    $region34: #{_avbert_forward.1} parent=1 // pred_check
      _
    $region35: #{_avbert_forward.1} parent=1 // pred_check_branch
      %63 = sbr.rel (0) target = $region37
    $region36: #{_avbert_forward.1} parent=1 // pred_region
      %s65 = ssub.s32 16384, 16384
      %66 = vsyncadd [#allocation5], %s65
      %s67 = sshll.u32 [#allocation4], 4
      %s68 = int_to_ptr.vmem [resolvable:$true] %s67
      %73 = dma.hbm_to_vmem [thread:$0]  %s8, 16384, %s68, [#allocation5], 128, 128, 8
    $region37: #{_avbert_forward.1} parent=1 // pred_fallthru
      _
    // Predicated region
    $region38: #{_avbert_forward.1} parent=1 // pred_check
      _
    $region39: #{_avbert_forward.1} parent=1 // pred_check_branch
      %75 = sbr.rel (0) target = $region41
    $region40: #{_avbert_forward.1} parent=1 // pred_region
      _
    $region41: #{_avbert_forward.1} parent=1 // pred_fallthru
      _
    // Predicated region
    $region42: #{_avbert_forward.1} parent=1 // pred_check
      _
    $region43: #{_avbert_forward.1} parent=1 // pred_check_branch
      %77 = sbr.rel (0) target = $region45
    $region44: #{_avbert_forward.1} parent=1 // pred_region
      _
    $region45: #{_avbert_forward.1} parent=1 // pred_fallthru
      _
    // Predicated region
    $region46: #{_avbert_forward.1} parent=1 // pred_check
      _
    $region47: #{_avbert_forward.1} parent=1 // pred_check_branch
      %79 = sbr.rel (0) target = $region49
    $region48: #{_avbert_forward.1} parent=1 // pred_region
      _
    $region49: #{_avbert_forward.1} parent=1 // pred_fallthru
      _
    // Predicated region
    $region50: #{_avbert_forward.1} parent=1 // pred_check
      _
    $region51: #{_avbert_forward.1} parent=1 // pred_check_branch
      %81 = sbr.rel (0) target = $region53
    $region52: #{_avbert_forward.1} parent=1 // pred_region
      %s83 = ssub.s32 16384, 16384
      %84 = vsyncadd [#allocation5], %s83
      %s85 = sshll.u32 [#allocation6], 4
      %s86 = int_to_ptr.vmem [resolvable:$true] %s85
      %91 = dma.hbm_to_vmem [thread:$0]  %s12, 16384, %s86, [#allocation5], 512, 512, 32
    $region53: #{_avbert_forward.1} parent=1 // pred_fallthru
      _
    // Predicated region
    $region54: #{_avbert_forward.1} parent=1 // pred_check
      _
    $region55: #{_avbert_forward.1} parent=1 // pred_check_branch
      %93 = sbr.rel (0) target = $region57
    $region56: #{_avbert_forward.1} parent=1 // pred_region
      _
    $region57: #{_avbert_forward.1} parent=1 // pred_fallthru
      _
    // Predicated region
    $region58: #{_avbert_forward.1} parent=1 // pred_check
      _
    $region59: #{_avbert_forward.1} parent=1 // pred_check_branch
      %95 = sbr.rel (0) target = $region61
    $region60: #{_avbert_forward.1} parent=1 // pred_region
      %s97 = ssub.s32 16384, 16384
      %98 = vsyncadd [#allocation8], %s97
      %s99 = sshll.u32 [#allocation7], 4
      %s100 = int_to_ptr.vmem [resolvable:$true] %s99
      %105 = dma.hbm_to_vmem [thread:$0]  %s14, 16384, %s100, [#allocation8], 128, 128, 8
    $region61: #{_avbert_forward.1} parent=1 // pred_fallthru
      _
    // Predicated region
    $region62: #{_avbert_forward.1} parent=1 // pred_check
      _
    $region63: #{_avbert_forward.1} parent=1 // pred_check_branch
      %107 = sbr.rel (0) target = $region65
    $region64: #{_avbert_forward.1} parent=1 // pred_region
      _
    $region65: #{_avbert_forward.1} parent=1 // pred_fallthru
      _
    // Predicated region
    $region66: #{_avbert_forward.1} parent=1 // pred_check
      _
    $region67: #{_avbert_forward.1} parent=1 // pred_check_branch
      %109 = sbr.rel (0) target = $region69
    $region68: #{_avbert_forward.1} parent=1 // pred_region
      _
    $region69: #{_avbert_forward.1} parent=1 // pred_fallthru
      _
    // Predicated region
    $region70: #{_avbert_forward.1} parent=1 // pred_check
      _
    $region71: #{_avbert_forward.1} parent=1 // pred_check_branch
      %111 = sbr.rel (0) target = $region73
    $region72: #{_avbert_forward.1} parent=1 // pred_region
      _
    $region73: #{_avbert_forward.1} parent=1 // pred_fallthru
      _
    // Predicated region
    $region74: #{_avbert_forward.1} parent=1 // pred_check
      _
    $region75: #{_avbert_forward.1} parent=1 // pred_check_branch
      %113 = sbr.rel (0) target = $region77
    $region76: #{_avbert_forward.1} parent=1 // pred_region
      %s115 = ssub.s32 16384, 16384
      %116 = vsyncadd [#allocation8], %s115
      %s117 = sshll.u32 [#allocation9], 4
      %s118 = int_to_ptr.vmem [resolvable:$true] %s117
      %123 = dma.hbm_to_vmem [thread:$0]  %s18, 16384, %s118, [#allocation8], 512, 512, 32
    $region77: #{_avbert_forward.1} parent=1 // pred_fallthru
      _
    // Predicated region
    $region78: #{_avbert_forward.1} parent=1 // pred_check
      _
    $region79: #{_avbert_forward.1} parent=1 // pred_check_branch
      %125 = sbr.rel (0) target = $region81
    $region80: #{_avbert_forward.1} parent=1 // pred_region
      _
    $region81: #{_avbert_forward.1} parent=1 // pred_fallthru
      _
    // Predicated region
    $region82: #{_avbert_forward.1} parent=1 // pred_check
      _
    $region83: #{_avbert_forward.1} parent=1 // pred_check_branch
      %127 = sbr.rel (0) target = $region85
    $region84: #{_avbert_forward.1} parent=1 // pred_region
      %s129 = ssub.s32 16384, 16384
      %130 = vsyncadd [#allocation11], %s129
      %s131 = sshll.u32 [#allocation10], 4
      %s132 = int_to_ptr.vmem [resolvable:$true] %s131
      %137 = dma.hbm_to_vmem [thread:$0]  %s20, 16384, %s132, [#allocation11], 128, 128, 8
    $region85: #{_avbert_forward.1} parent=1 // pred_fallthru
      _
    // Predicated region
    $region86: #{_avbert_forward.1} parent=1 // pred_check
      _
    $region87: #{_avbert_forward.1} parent=1 // pred_check_branch
      %139 = sbr.rel (0) target = $region89
    $region88: #{_avbert_forward.1} parent=1 // pred_region
      _
    $region89: #{_avbert_forward.1} parent=1 // pred_fallthru
      _
    // Predicated region
    $region90: #{_avbert_forward.1} parent=1 // pred_check
      _
    $region91: #{_avbert_forward.1} parent=1 // pred_check_branch
      %141 = sbr.rel (0) target = $region93
    $region92: #{_avbert_forward.1} parent=1 // pred_region
      _
    $region93: #{_avbert_forward.1} parent=1 // pred_fallthru
      _
    // Predicated region
    $region94: #{_avbert_forward.1} parent=1 // pred_check
      _
    $region95: #{_avbert_forward.1} parent=1 // pred_check_branch
      %143 = sbr.rel (0) target = $region97
    $region96: #{_avbert_forward.1} parent=1 // pred_region
      _
    $region97: #{_avbert_forward.1} parent=1 // pred_fallthru
      _
    // Predicated region
    $region98: #{_avbert_forward.1} parent=1 // pred_check
      _
    $region99: #{_avbert_forward.1} parent=1 // pred_check_branch
      %145 = sbr.rel (0) target = $region101
    $region100: #{_avbert_forward.1} parent=1 // pred_region
      %146 = dma.done [#allocation3], 12288
    $region101: #{_avbert_forward.1} parent=1 // pred_fallthru
      _
    // Predicated region
    $region102: #{_avbert_forward.1} parent=1 // pred_check
      _
    $region103: #{_avbert_forward.1} parent=1 // pred_check_branch
      %148 = sbr.rel (0) target = $region105
    $region104: #{_avbert_forward.1} parent=1 // pred_region
      %149 = dma.done [#allocation5], 16384
    $region105: #{_avbert_forward.1} parent=1 // pred_fallthru
      _
    // Predicated region
    $region106: #{_avbert_forward.1} parent=1 // pred_check
      _
    $region107: #{_avbert_forward.1} parent=1 // pred_check_branch
      %151 = sbr.rel (0) target = $region109
    $region108: #{_avbert_forward.1} parent=1 // pred_region
      %152 = dma.done [#allocation5], 16384
    $region109: #{_avbert_forward.1} parent=1 // pred_fallthru
      _
    // Predicated region
    $region110: #{_avbert_forward.1} parent=1 // pred_check
      _
    $region111: #{_avbert_forward.1} parent=1 // pred_check_branch
      %154 = sbr.rel (0) target = $region113
    $region112: #{_avbert_forward.1} parent=1 // pred_region
      %155 = dma.done [#allocation8], 16384
    $region113: #{_avbert_forward.1} parent=1 // pred_fallthru
      _
    // Predicated region
    $region114: #{_avbert_forward.1} parent=1 // pred_check
      _
    $region115: #{_avbert_forward.1} parent=1 // pred_check_branch
      %157 = sbr.rel (0) target = $region117
    $region116: #{_avbert_forward.1} parent=1 // pred_region
      %158 = dma.done [#allocation8], 16384
    $region117: #{_avbert_forward.1} parent=1 // pred_fallthru
      _
    // Predicated region
    $region118: #{_avbert_forward.1} parent=1 // pred_check
      _
    $region119: #{_avbert_forward.1} parent=1 // pred_check_branch
      %160 = sbr.rel (0) target = $region121
    $region120: #{_avbert_forward.1} parent=1 // pred_region
      %161 = dma.done [#allocation11], 16384
    $region121: #{_avbert_forward.1} parent=1 // pred_fallthru
      _
    %v162 = vld [vmem:[%s0] sm:$0xff]
    %v163 = vld [vmem:[%s0 + $0x8] sm:$0xff]
    %v164 = vld [vmem:[%s0 + $0x10] sm:$0xff]
    %v165 = vld [vmem:[%s0 + $0x18] sm:$0xff]
    %v166 = vld [vmem:[%s0 + $0x20] sm:$0xff]
    %v167 = vld [vmem:[%s0 + $0x28] sm:$0xff]
    %v168 = vld [vmem:[%s0 + $0x30] sm:$0xff]
    %v169 = vld [vmem:[%s0 + $0x38] sm:$0xff]
    %v170 = vld [vmem:[%s0 + $0x40] sm:$0xff]
    %v171 = vld [vmem:[%s0 + $0x48] sm:$0xff]
    %v172 = vld [vmem:[%s0 + $0x50] sm:$0xff]
    %v173 = vld [vmem:[%s0 + $0x58] sm:$0xff]
    %v174 = vld [vmem:[%s0 + $0x60] sm:$0xff]
    %v175 = vld [vmem:[%s0 + $0x68] sm:$0xff]
    %v176 = vld [vmem:[%s0 + $0x70] sm:$0xff]
    %v177 = vld [vmem:[%s0 + $0x78] sm:$0xff]
    %v178 = vld [vmem:[%s0 + $0x80] sm:$0xff]
    %v179 = vld [vmem:[%s0 + $0x88] sm:$0xff]
    %v180 = vld [vmem:[#allocation2] sm:$0xff]
    %v181 = vld [vmem:[#allocation2 + $0x8] sm:$0xff]
    %v182 = vld [vmem:[#allocation2 + $0x10] sm:$0xff]
    %v183 = vld [vmem:[#allocation2 + $0x18] sm:$0xff]
    %v184 = vld [vmem:[#allocation2 + $0x20] sm:$0xff]
    %v185 = vld [vmem:[#allocation2 + $0x28] sm:$0xff]
    %v186 = vld [vmem:[#allocation2 + $0x30] sm:$0xff]
    %v187 = vld [vmem:[#allocation2 + $0x38] sm:$0xff]
    %v188 = vld [vmem:[#allocation2 + $0x40] sm:$0xff]
    %v189 = vld [vmem:[#allocation2 + $0x48] sm:$0xff]
    %v190 = vld [vmem:[#allocation2 + $0x50] sm:$0xff]
    %v191 = vld [vmem:[#allocation2 + $0x58] sm:$0xff]
    %v192 = vld [vmem:[#allocation2 + $0x60] sm:$0xff]
    %v193 = vld [vmem:[#allocation2 + $0x68] sm:$0xff]
    %v194 = vld [vmem:[#allocation2 + $0x70] sm:$0xff]
    %v195 = vld [vmem:[#allocation2 + $0x78] sm:$0xff]
    %v196 = vld [vmem:[#allocation2 + $0x80] sm:$0xff]
    %v197 = vld [vmem:[#allocation2 + $0x88] sm:$0xff]
    %v198 = vld [vmem:[#allocation2 + $0x90] sm:$0xff]
    %v199 = vld [vmem:[#allocation2 + $0x98] sm:$0xff]
    %v200 = vld [vmem:[#allocation2 + $0xa0] sm:$0xff]
    %v201 = vld [vmem:[#allocation2 + $0xa8] sm:$0xff]
    %v202 = vld [vmem:[#allocation2 + $0xb0] sm:$0xff]
    %v203 = vld [vmem:[#allocation2 + $0xb8] sm:$0xff]
    %v204 = vld [vmem:[#allocation2 + $0xc0] sm:$0xff]
    %v205 = vld [vmem:[#allocation2 + $0xc8] sm:$0xff]
    %v206 = vld [vmem:[#allocation2 + $0xd0] sm:$0xff]
    %v207 = vld [vmem:[#allocation2 + $0xd8] sm:$0xff]
    %v208 = vld [vmem:[#allocation2 + $0xe0] sm:$0xff]
    %v209 = vld [vmem:[#allocation2 + $0xe8] sm:$0xff]
    %v210 = vld [vmem:[#allocation2 + $0xf0] sm:$0xff]
    %v211 = vld [vmem:[#allocation2 + $0xf8] sm:$0xff]
    %v212 = vld [vmem:[#allocation2 + $0x100] sm:$0xff]
    %v213 = vld [vmem:[#allocation2 + $0x108] sm:$0xff]
    %v214 = vld [vmem:[#allocation2 + $0x110] sm:$0xff]
    %v215 = vld [vmem:[#allocation2 + $0x118] sm:$0xff]
    %v216 = vld [vmem:[#allocation2 + $0x120] sm:$0xff]
    %v217 = vld [vmem:[#allocation2 + $0x128] sm:$0xff]
    %v218 = vld [vmem:[#allocation2 + $0x130] sm:$0xff]
    %v219 = vld [vmem:[#allocation2 + $0x138] sm:$0xff]
    %v220 = vld [vmem:[#allocation2 + $0x140] sm:$0xff]
    %v221 = vld [vmem:[#allocation2 + $0x148] sm:$0xff]
    %v222 = vld [vmem:[#allocation2 + $0x150] sm:$0xff]
    %v223 = vld [vmem:[#allocation2 + $0x158] sm:$0xff]
    %v224 = vld [vmem:[#allocation2 + $0x160] sm:$0xff]
    %v225 = vld [vmem:[#allocation2 + $0x168] sm:$0xff]
    %v226 = vld [vmem:[#allocation2 + $0x170] sm:$0xff]
    %v227 = vld [vmem:[#allocation2 + $0x178] sm:$0xff]
    %v228 = vld [vmem:[#allocation2 + $0x180] sm:$0xff]
    %v229 = vld [vmem:[#allocation2 + $0x188] sm:$0xff]
    %v230 = vld [vmem:[#allocation2 + $0x190] sm:$0xff]
    %v231 = vld [vmem:[#allocation2 + $0x198] sm:$0xff]
    %v232 = vld [vmem:[#allocation2 + $0x1a0] sm:$0xff]
    %v233 = vld [vmem:[#allocation2 + $0x1a8] sm:$0xff]
    %v234 = vld [vmem:[#allocation2 + $0x1b0] sm:$0xff]
    %v235 = vld [vmem:[#allocation2 + $0x1b8] sm:$0xff]
    %v236 = vld [vmem:[#allocation2 + $0x1c0] sm:$0xff]
    %v237 = vld [vmem:[#allocation2 + $0x1c8] sm:$0xff]
    %v238 = vld [vmem:[#allocation2 + $0x1d0] sm:$0xff]
    %v239 = vld [vmem:[#allocation2 + $0x1d8] sm:$0xff]
    %v240 = vld [vmem:[#allocation2 + $0x1e0] sm:$0xff]
    %v241 = vld [vmem:[#allocation2 + $0x1e8] sm:$0xff]
    %v242 = vld [vmem:[#allocation2 + $0x1f0] sm:$0xff]
    %v243 = vld [vmem:[#allocation2 + $0x1f8] sm:$0xff]
    %v244 = vld [vmem:[#allocation2 + $0x200] sm:$0xff]
    %v245 = vld [vmem:[#allocation2 + $0x208] sm:$0xff]
    %v246 = vld [vmem:[#allocation2 + $0x210] sm:$0xff]
    %v247 = vld [vmem:[#allocation2 + $0x218] sm:$0xff]
    %v248 = vld [vmem:[#allocation2 + $0x220] sm:$0xff]
    %v249 = vld [vmem:[#allocation2 + $0x228] sm:$0xff]
    %v250 = vld [vmem:[#allocation2 + $0x230] sm:$0xff]
    %v251 = vld [vmem:[#allocation2 + $0x238] sm:$0xff]
    %v252 = vld [vmem:[#allocation2 + $0x240] sm:$0xff]
    %v253 = vld [vmem:[#allocation2 + $0x248] sm:$0xff]
    %v254 = vld [vmem:[#allocation2 + $0x250] sm:$0xff]
    %v255 = vld [vmem:[#allocation2 + $0x258] sm:$0xff]
    %v256 = vld [vmem:[#allocation2 + $0x260] sm:$0xff]
    %v257 = vld [vmem:[#allocation2 + $0x268] sm:$0xff]
    %v258 = vld [vmem:[#allocation2 + $0x270] sm:$0xff]
    %v259 = vld [vmem:[#allocation2 + $0x278] sm:$0xff]
    %v260 = vld [vmem:[#allocation2 + $0x280] sm:$0xff]
    %v261 = vld [vmem:[#allocation2 + $0x288] sm:$0xff]
    %v262 = vld [vmem:[#allocation2 + $0x290] sm:$0xff]
    %v263 = vld [vmem:[#allocation2 + $0x298] sm:$0xff]
    %v264 = vld [vmem:[#allocation2 + $0x2a0] sm:$0xff]
    %v265 = vld [vmem:[#allocation2 + $0x2a8] sm:$0xff]
    %v266 = vld [vmem:[#allocation2 + $0x2b0] sm:$0xff]
    %v267 = vld [vmem:[#allocation2 + $0x2b8] sm:$0xff]
    %v268 = vld [vmem:[#allocation2 + $0x2c0] sm:$0xff]
    %v269 = vld [vmem:[#allocation2 + $0x2c8] sm:$0xff]
    %v270 = vld [vmem:[#allocation2 + $0x2d0] sm:$0xff]
    %v271 = vld [vmem:[#allocation2 + $0x2d8] sm:$0xff]
    %v272 = vld [vmem:[#allocation2 + $0x2e0] sm:$0xff]
    %v273 = vld [vmem:[#allocation2 + $0x2e8] sm:$0xff]
    %v274 = vld [vmem:[#allocation2 + $0x2f0] sm:$0xff]
    %v275 = vld [vmem:[#allocation2 + $0x2f8] sm:$0xff]
    %v276 = vld [vmem:[%s3] sm:$0x1]
    %v278 = vlaneseq
    %v279 = vshrl.u32 %v278, 7
    %v280 = vsub.s32 0, %v279
    %v281 = vrot.slane %v276, %v280
    %283 = vmatprep.subr.mxu0 0.0
    %284 = vmatpush1.msra.mxu0 %v180
    %285 = vmatprep.subr.mxu0 0.0
    %286 = vmatpush1.msra.mxu0 %v181
    %287 = vmatprep.subr.mxu0 0.0
    %288 = vmatpush1.msra.mxu0 %v182
    %289 = vmatprep.subr.mxu0 0.0
    %290 = vmatpush1.msra.mxu0 %v183
    %291 = vmatprep.subr.mxu0 0.0
    %292 = vmatpush1.msra.mxu0 %v184
    %293 = vmatprep.subr.mxu0 0.0
    %294 = vmatpush1.msra.mxu0 %v185
    %295 = vmatprep.subr.mxu0 0.0
    %296 = vmatpush1.msra.mxu0 %v186
    %297 = vmatprep.subr.mxu0 0.0
    %298 = vmatpush1.msra.mxu0 %v187
    %299 = vmatprep.subr.mxu0 0.0
    %300 = vmatpush1.msra.mxu0 %v188
    %301 = vmatprep.subr.mxu0 0.0
    %302 = vmatpush1.msra.mxu0 %v189
    %303 = vmatprep.subr.mxu0 0.0
    %304 = vmatpush1.msra.mxu0 %v190
    %305 = vmatprep.subr.mxu0 0.0
    %306 = vmatpush1.msra.mxu0 %v191
    %307 = vmatprep.subr.mxu0 0.0
    %308 = vmatpush1.msra.mxu0 %v192
    %309 = vmatprep.subr.mxu0 0.0
    %310 = vmatpush1.msra.mxu0 %v193
    %311 = vmatprep.subr.mxu0 0.0
    %312 = vmatpush1.msra.mxu0 %v194
    %313 = vmatprep.subr.mxu0 0.0
    %314 = vmatpush1.msra.mxu0 %v195
    %315 = vmatprep.subr.mxu0 0.0
    %316 = vmatpush1.msra.mxu0 %v196
    %317 = vmatprep.subr.mxu0 0.0
    %318 = vmatpush1.msra.mxu0 %v197
    %319 = vmatprep.subr.mxu0 0.0
    %320 = vmatpush1.msra.mxu0 %v198
    %321 = vmatprep.subr.mxu0 0.0
    %322 = vmatpush1.msra.mxu0 %v199
    %323 = vmatprep.subr.mxu0 0.0
    %324 = vmatpush1.msra.mxu0 %v200
    %325 = vmatprep.subr.mxu0 0.0
    %326 = vmatpush1.msra.mxu0 %v201
    %327 = vmatprep.subr.mxu0 0.0
    %328 = vmatpush1.msra.mxu0 %v202
    %329 = vmatprep.subr.mxu0 0.0
    %330 = vmatpush1.msra.mxu0 %v203
    %331 = vmatprep.subr.mxu0 0.0
    %332 = vmatpush1.msra.mxu0 %v204
    %333 = vmatprep.subr.mxu0 0.0
    %334 = vmatpush1.msra.mxu0 %v205
    %335 = vmatprep.subr.mxu0 0.0
    %336 = vmatpush1.msra.mxu0 %v206
    %337 = vmatprep.subr.mxu0 0.0
    %338 = vmatpush1.msra.mxu0 %v207
    %339 = vmatprep.subr.mxu0 0.0
    %340 = vmatpush1.msra.mxu0 %v208
    %341 = vmatprep.subr.mxu0 0.0
    %342 = vmatpush1.msra.mxu0 %v209
    %343 = vmatprep.subr.mxu0 0.0
    %344 = vmatpush1.msra.mxu0 %v210
    %345 = vmatprep.subr.mxu0 0.0
    %346 = vmatpush1.msra.mxu0 %v211
    %347 = vmatprep.mubr.f32.mxu0 %v163
    %348 = vmatmul.mubr.f32.gmra.mrb[0].mxu0 %v162
    %v349 = vpop.f32.mrb[0].mxu0
    %v350 = vadd.f32 %v281, %v349
    %v351 = vpop.f32.mrb[0].mxu0
    %352 = vmatprep.mubr.f32.mxu0 %v169
    %353 = vmatmul.mubr.f32.gmra.mrb[0].mxu0 %v168
    %v354 = vpop.f32.mrb[0].mxu0
    %v355 = vadd.f32 %v281, %v354
    %v356 = vpop.f32.mrb[0].mxu0
    %357 = vmatprep.mubr.f32.mxu0 %v175
    %358 = vmatmul.mubr.f32.gmra.mrb[0].mxu0 %v174
    %v359 = vpop.f32.mrb[0].mxu0
    %v360 = vadd.f32 %v281, %v359
    %v361 = vpop.f32.mrb[0].mxu0
    %362 = vdwg.mxu0
    %363 = vmatprep.subr.mxu0 0.0
    %364 = vmatpush1.msra.mxu0 %v212
    %365 = vmatprep.subr.mxu0 0.0
    %366 = vmatpush1.msra.mxu0 %v213
    %367 = vmatprep.subr.mxu0 0.0
    %368 = vmatpush1.msra.mxu0 %v214
    %369 = vmatprep.subr.mxu0 0.0
    %370 = vmatpush1.msra.mxu0 %v215
    %371 = vmatprep.subr.mxu0 0.0
    %372 = vmatpush1.msra.mxu0 %v216
    %373 = vmatprep.subr.mxu0 0.0
    %374 = vmatpush1.msra.mxu0 %v217
    %375 = vmatprep.subr.mxu0 0.0
    %376 = vmatpush1.msra.mxu0 %v218
    %377 = vmatprep.subr.mxu0 0.0
    %378 = vmatpush1.msra.mxu0 %v219
    %379 = vmatprep.subr.mxu0 0.0
    %380 = vmatpush1.msra.mxu0 %v220
    %381 = vmatprep.subr.mxu0 0.0
    %382 = vmatpush1.msra.mxu0 %v221
    %383 = vmatprep.subr.mxu0 0.0
    %384 = vmatpush1.msra.mxu0 %v222
    %385 = vmatprep.subr.mxu0 0.0
    %386 = vmatpush1.msra.mxu0 %v223
    %387 = vmatprep.subr.mxu0 0.0
    %388 = vmatpush1.msra.mxu0 %v224
    %389 = vmatprep.subr.mxu0 0.0
    %390 = vmatpush1.msra.mxu0 %v225
    %391 = vmatprep.subr.mxu0 0.0
    %392 = vmatpush1.msra.mxu0 %v226
    %393 = vmatprep.subr.mxu0 0.0
    %394 = vmatpush1.msra.mxu0 %v227
    %395 = vmatprep.subr.mxu0 0.0
    %396 = vmatpush1.msra.mxu0 %v228
    %397 = vmatprep.subr.mxu0 0.0
    %398 = vmatpush1.msra.mxu0 %v229
    %399 = vmatprep.subr.mxu0 0.0
    %400 = vmatpush1.msra.mxu0 %v230
    %401 = vmatprep.subr.mxu0 0.0
    %402 = vmatpush1.msra.mxu0 %v231
    %403 = vmatprep.subr.mxu0 0.0
    %404 = vmatpush1.msra.mxu0 %v232
    %405 = vmatprep.subr.mxu0 0.0
    %406 = vmatpush1.msra.mxu0 %v233
    %407 = vmatprep.subr.mxu0 0.0
    %408 = vmatpush1.msra.mxu0 %v234
    %409 = vmatprep.subr.mxu0 0.0
    %410 = vmatpush1.msra.mxu0 %v235
    %411 = vmatprep.subr.mxu0 0.0
    %412 = vmatpush1.msra.mxu0 %v236
    %413 = vmatprep.subr.mxu0 0.0
    %414 = vmatpush1.msra.mxu0 %v237
    %415 = vmatprep.subr.mxu0 0.0
    %416 = vmatpush1.msra.mxu0 %v238
    %417 = vmatprep.subr.mxu0 0.0
    %418 = vmatpush1.msra.mxu0 %v239
    %419 = vmatprep.subr.mxu0 0.0
    %420 = vmatpush1.msra.mxu0 %v240
    %421 = vmatprep.subr.mxu0 0.0
    %422 = vmatpush1.msra.mxu0 %v241
    %423 = vmatprep.subr.mxu0 0.0
    %424 = vmatpush1.msra.mxu0 %v242
    %425 = vmatprep.subr.mxu0 0.0
    %426 = vmatpush1.msra.mxu0 %v243
    %427 = vmatprep.mubr.f32.mxu0 %v165
    %428 = vmatmul.mubr.f32.gmra.mrb[0].mxu0 %v164
    %v429 = vpop.f32.mrb[0].mxu0
    %v430 = vadd.f32 %v350, %v429
    %v431 = vpop.f32.mrb[0].mxu0
    %432 = vmatprep.mubr.f32.mxu0 %v171
    %433 = vmatmul.mubr.f32.gmra.mrb[0].mxu0 %v170
    %v434 = vpop.f32.mrb[0].mxu0
    %v435 = vadd.f32 %v355, %v434
    %v436 = vpop.f32.mrb[0].mxu0
    %437 = vmatprep.mubr.f32.mxu0 %v177
    %438 = vmatmul.mubr.f32.gmra.mrb[0].mxu0 %v176
    %v439 = vpop.f32.mrb[0].mxu0
    %v440 = vadd.f32 %v360, %v439
    %v441 = vpop.f32.mrb[0].mxu0
    %442 = vdwg.mxu0
    %443 = vmatprep.subr.mxu0 0.0
    %444 = vmatpush1.msra.mxu0 %v244
    %445 = vmatprep.subr.mxu0 0.0
    %446 = vmatpush1.msra.mxu0 %v245
    %447 = vmatprep.subr.mxu0 0.0
    %448 = vmatpush1.msra.mxu0 %v246
    %449 = vmatprep.subr.mxu0 0.0
    %450 = vmatpush1.msra.mxu0 %v247
    %451 = vmatprep.subr.mxu0 0.0
    %452 = vmatpush1.msra.mxu0 %v248
    %453 = vmatprep.subr.mxu0 0.0
    %454 = vmatpush1.msra.mxu0 %v249
    %455 = vmatprep.subr.mxu0 0.0
    %456 = vmatpush1.msra.mxu0 %v250
    %457 = vmatprep.subr.mxu0 0.0
    %458 = vmatpush1.msra.mxu0 %v251
    %459 = vmatprep.subr.mxu0 0.0
    %460 = vmatpush1.msra.mxu0 %v252
    %461 = vmatprep.subr.mxu0 0.0
    %462 = vmatpush1.msra.mxu0 %v253
    %463 = vmatprep.subr.mxu0 0.0
    %464 = vmatpush1.msra.mxu0 %v254
    %465 = vmatprep.subr.mxu0 0.0
    %466 = vmatpush1.msra.mxu0 %v255
    %467 = vmatprep.subr.mxu0 0.0
    %468 = vmatpush1.msra.mxu0 %v256
    %469 = vmatprep.subr.mxu0 0.0
    %470 = vmatpush1.msra.mxu0 %v257
    %471 = vmatprep.subr.mxu0 0.0
    %472 = vmatpush1.msra.mxu0 %v258
    %473 = vmatprep.subr.mxu0 0.0
    %474 = vmatpush1.msra.mxu0 %v259
    %475 = vmatprep.subr.mxu0 0.0
    %476 = vmatpush1.msra.mxu0 %v260
    %477 = vmatprep.subr.mxu0 0.0
    %478 = vmatpush1.msra.mxu0 %v261
    %479 = vmatprep.subr.mxu0 0.0
    %480 = vmatpush1.msra.mxu0 %v262
    %481 = vmatprep.subr.mxu0 0.0
    %482 = vmatpush1.msra.mxu0 %v263
    %483 = vmatprep.subr.mxu0 0.0
    %484 = vmatpush1.msra.mxu0 %v264
    %485 = vmatprep.subr.mxu0 0.0
    %486 = vmatpush1.msra.mxu0 %v265
    %487 = vmatprep.subr.mxu0 0.0
    %488 = vmatpush1.msra.mxu0 %v266
    %489 = vmatprep.subr.mxu0 0.0
    %490 = vmatpush1.msra.mxu0 %v267
    %491 = vmatprep.subr.mxu0 0.0
    %492 = vmatpush1.msra.mxu0 %v268
    %493 = vmatprep.subr.mxu0 0.0
    %494 = vmatpush1.msra.mxu0 %v269
    %495 = vmatprep.subr.mxu0 0.0
    %496 = vmatpush1.msra.mxu0 %v270
    %497 = vmatprep.subr.mxu0 0.0
    %498 = vmatpush1.msra.mxu0 %v271
    %499 = vmatprep.subr.mxu0 0.0
    %500 = vmatpush1.msra.mxu0 %v272
    %501 = vmatprep.subr.mxu0 0.0
    %502 = vmatpush1.msra.mxu0 %v273
    %503 = vmatprep.subr.mxu0 0.0
    %504 = vmatpush1.msra.mxu0 %v274
    %505 = vmatprep.subr.mxu0 0.0
    %506 = vmatpush1.msra.mxu0 %v275
    %507 = vmatprep.mubr.f32.mxu0 %v167
    %508 = vmatmul.mubr.f32.gmra.mrb[0].mxu0 %v166
    %v509 = vpop.f32.mrb[0].mxu0
    %v510 = vadd.f32 %v430, %v509
    %v511 = vpop.f32.mrb[0].mxu0
    %512 = vmatprep.mubr.f32.mxu0 %v173
    %513 = vmatmul.mubr.f32.gmra.mrb[0].mxu0 %v172
    %v514 = vpop.f32.mrb[0].mxu0
    %v515 = vadd.f32 %v435, %v514
    %v516 = vpop.f32.mrb[0].mxu0
    %517 = vmatprep.mubr.f32.mxu0 %v179
    %518 = vmatmul.mubr.f32.gmra.mrb[0].mxu0 %v178
    %v519 = vpop.f32.mrb[0].mxu0
    %v520 = vadd.f32 %v440, %v519
    %v521 = vpop.f32.mrb[0].mxu0
    %522 = vdwg.mxu0
    %v523 = vtanh.pop %v510
    %v524 = vtanh.pop %v515
    %v525 = vtanh.pop %v520
    %526 = vst [vmem:[%s24] sm:$0xff] %v523
    %527 = vst [vmem:[%s24 + $0x8] sm:$0xff] %v524
    %528 = vst [vmem:[%s24 + $0x10] sm:$0xff] %v525
    %v529 = vld [vmem:[%s6] sm:$0xff]
    %v530 = vld [vmem:[%s6 + $0x8] sm:$0xff]
    %v531 = vld [vmem:[%s6 + $0x10] sm:$0xff]
    %v532 = vld [vmem:[%s6 + $0x18] sm:$0xff]
    %v533 = vld [vmem:[%s6 + $0x20] sm:$0xff]
    %v534 = vld [vmem:[%s6 + $0x28] sm:$0xff]
    %v535 = vld [vmem:[%s6 + $0x30] sm:$0xff]
    %v536 = vld [vmem:[%s6 + $0x38] sm:$0xff]
    %v537 = vld [vmem:[%s6 + $0x40] sm:$0xff]
    %v538 = vld [vmem:[%s6 + $0x48] sm:$0xff]
    %v539 = vld [vmem:[%s6 + $0x50] sm:$0xff]
    %v540 = vld [vmem:[%s6 + $0x58] sm:$0xff]
    %v541 = vld [vmem:[%s6 + $0x60] sm:$0xff]
    %v542 = vld [vmem:[%s6 + $0x68] sm:$0xff]
    %v543 = vld [vmem:[%s6 + $0x70] sm:$0xff]
    %v544 = vld [vmem:[%s6 + $0x78] sm:$0xff]
    %v545 = vld [vmem:[%s6 + $0x80] sm:$0xff]
    %v546 = vld [vmem:[%s6 + $0x88] sm:$0xff]
    %v547 = vld [vmem:[%s6 + $0x90] sm:$0xff]
    %v548 = vld [vmem:[%s6 + $0x98] sm:$0xff]
    %v549 = vld [vmem:[%s6 + $0xa0] sm:$0xff]
    %v550 = vld [vmem:[%s6 + $0xa8] sm:$0xff]
    %v551 = vld [vmem:[%s6 + $0xb0] sm:$0xff]
    %v552 = vld [vmem:[%s6 + $0xb8] sm:$0xff]
    %v553 = vld [vmem:[%s6 + $0xc0] sm:$0xff]
    %v554 = vld [vmem:[%s6 + $0xc8] sm:$0xff]
    %v555 = vld [vmem:[%s6 + $0xd0] sm:$0xff]
    %v556 = vld [vmem:[%s6 + $0xd8] sm:$0xff]
    %v557 = vld [vmem:[%s6 + $0xe0] sm:$0xff]
    %v558 = vld [vmem:[%s6 + $0xe8] sm:$0xff]
    %v559 = vld [vmem:[%s6 + $0xf0] sm:$0xff]
    %v560 = vld [vmem:[%s6 + $0xf8] sm:$0xff]
    %v561 = vld [vmem:[%s6 + $0x100] sm:$0xff]
    %v562 = vld [vmem:[%s6 + $0x108] sm:$0xff]
    %v563 = vld [vmem:[%s6 + $0x110] sm:$0xff]
    %v564 = vld [vmem:[%s6 + $0x118] sm:$0xff]
    %v565 = vld [vmem:[%s6 + $0x120] sm:$0xff]
    %v566 = vld [vmem:[%s6 + $0x128] sm:$0xff]
    %v567 = vld [vmem:[%s6 + $0x130] sm:$0xff]
    %v568 = vld [vmem:[%s6 + $0x138] sm:$0xff]
    %v569 = vld [vmem:[%s6 + $0x140] sm:$0xff]
    %v570 = vld [vmem:[%s6 + $0x148] sm:$0xff]
    %v571 = vld [vmem:[%s6 + $0x150] sm:$0xff]
    %v572 = vld [vmem:[%s6 + $0x158] sm:$0xff]
    %v573 = vld [vmem:[%s6 + $0x160] sm:$0xff]
    %v574 = vld [vmem:[%s6 + $0x168] sm:$0xff]
    %v575 = vld [vmem:[%s6 + $0x170] sm:$0xff]
    %v576 = vld [vmem:[%s6 + $0x178] sm:$0xff]
    %v577 = vld [vmem:[%s6 + $0x180] sm:$0xff]
    %v578 = vld [vmem:[%s6 + $0x188] sm:$0xff]
    %v579 = vld [vmem:[%s6 + $0x190] sm:$0xff]
    %v580 = vld [vmem:[%s6 + $0x198] sm:$0xff]
    %v581 = vld [vmem:[%s6 + $0x1a0] sm:$0xff]
    %v582 = vld [vmem:[%s6 + $0x1a8] sm:$0xff]
    %v583 = vld [vmem:[%s6 + $0x1b0] sm:$0xff]
    %v584 = vld [vmem:[%s6 + $0x1b8] sm:$0xff]
    %v585 = vld [vmem:[%s6 + $0x1c0] sm:$0xff]
    %v586 = vld [vmem:[%s6 + $0x1c8] sm:$0xff]
    %v587 = vld [vmem:[%s6 + $0x1d0] sm:$0xff]
    %v588 = vld [vmem:[%s6 + $0x1d8] sm:$0xff]
    %v589 = vld [vmem:[%s6 + $0x1e0] sm:$0xff]
    %v590 = vld [vmem:[%s6 + $0x1e8] sm:$0xff]
    %v591 = vld [vmem:[%s6 + $0x1f0] sm:$0xff]
    %v592 = vld [vmem:[%s6 + $0x1f8] sm:$0xff]
    %v593 = vld [vmem:[%s7] sm:$0xf]
    %v595 = vlaneseq
    %v596 = vshrl.u32 %v595, 7
    %v597 = vsub.s32 0, %v596
    %v598 = vrot.slane %v593, %v597
    %v599 = vlaneseq
    %v600 = vshrl.u32 %v599, 7
    %v601 = vsub.s32 1, %v600
    %v602 = vrot.slane %v593, %v601
    %v603 = vlaneseq
    %v604 = vshrl.u32 %v603, 7
    %v605 = vsub.s32 2, %v604
    %v606 = vrot.slane %v593, %v605
    %v607 = vlaneseq
    %v608 = vshrl.u32 %v607, 7
    %v609 = vsub.s32 3, %v608
    %v610 = vrot.slane %v593, %v609
    %615 = vmatprep.subr.mxu0 %v530
    %616 = vmatpush1.msra.mxu0 %v529
    %617 = vmatprep.subr.mxu0 %v534
    %618 = vmatpush1.msra.mxu0 %v533
    %619 = vmatprep.subr.mxu0 %v538
    %620 = vmatpush1.msra.mxu0 %v537
    %621 = vmatprep.subr.mxu0 %v542
    %622 = vmatpush1.msra.mxu0 %v541
    %623 = vmatprep.subr.mxu0 %v546
    %624 = vmatpush1.msra.mxu0 %v545
    %625 = vmatprep.subr.mxu0 %v550
    %626 = vmatpush1.msra.mxu0 %v549
    %627 = vmatprep.subr.mxu0 %v554
    %628 = vmatpush1.msra.mxu0 %v553
    %629 = vmatprep.subr.mxu0 %v558
    %630 = vmatpush1.msra.mxu0 %v557
    %631 = vmatprep.subr.mxu0 %v562
    %632 = vmatpush1.msra.mxu0 %v561
    %633 = vmatprep.subr.mxu0 %v566
    %634 = vmatpush1.msra.mxu0 %v565
    %635 = vmatprep.subr.mxu0 %v570
    %636 = vmatpush1.msra.mxu0 %v569
    %637 = vmatprep.subr.mxu0 %v574
    %638 = vmatpush1.msra.mxu0 %v573
    %639 = vmatprep.subr.mxu0 %v578
    %640 = vmatpush1.msra.mxu0 %v577
    %641 = vmatprep.subr.mxu0 %v582
    %642 = vmatpush1.msra.mxu0 %v581
    %643 = vmatprep.subr.mxu0 %v586
    %644 = vmatpush1.msra.mxu0 %v585
    %645 = vmatprep.subr.mxu0 %v590
    %646 = vmatpush1.msra.mxu0 %v589
    %647 = vmatprep.subr.mxu0 0.0
    %648 = vmatpush1.msra.mxu0 0.0
    %649 = vmatprep.subr.mxu0 0.0
    %650 = vmatpush1.msra.mxu0 0.0
    %651 = vmatprep.subr.mxu0 0.0
    %652 = vmatpush1.msra.mxu0 0.0
    %653 = vmatprep.subr.mxu0 0.0
    %654 = vmatpush1.msra.mxu0 0.0
    %655 = vmatprep.subr.mxu0 0.0
    %656 = vmatpush1.msra.mxu0 0.0
    %657 = vmatprep.subr.mxu0 0.0
    %658 = vmatpush1.msra.mxu0 0.0
    %659 = vmatprep.subr.mxu0 0.0
    %660 = vmatpush1.msra.mxu0 0.0
    %661 = vmatprep.subr.mxu0 0.0
    %662 = vmatpush1.msra.mxu0 0.0
    %663 = vmatprep.subr.mxu0 0.0
    %664 = vmatpush1.msra.mxu0 0.0
    %665 = vmatprep.subr.mxu0 0.0
    %666 = vmatpush1.msra.mxu0 0.0
    %667 = vmatprep.subr.mxu0 0.0
    %668 = vmatpush1.msra.mxu0 0.0
    %669 = vmatprep.subr.mxu0 0.0
    %670 = vmatpush1.msra.mxu0 0.0
    %671 = vmatprep.subr.mxu0 0.0
    %672 = vmatpush1.msra.mxu0 0.0
    %673 = vmatprep.subr.mxu0 0.0
    %674 = vmatpush1.msra.mxu0 0.0
    %675 = vmatprep.subr.mxu0 0.0
    %676 = vmatpush1.msra.mxu0 0.0
    %677 = vmatprep.subr.mxu0 0.0
    %678 = vmatpush1.msra.mxu0 0.0
    %679 = vmatprep.mubr.f32.mxu0 0.0
    %680 = vmatmul.mubr.f32.gmra.mrb[0].mxu0 %v523
    %v681 = vpop.f32.mrb[0].mxu0
    %v682 = vadd.f32 %v598, %v681
    %v683 = vpop.f32.mrb[0].mxu0
    %v684 = vadd.f32 %v602, %v683
    %685 = vmatprep.mubr.f32.mxu0 0.0
    %686 = vmatmul.mubr.f32.gmra.mrb[0].mxu0 %v524
    %v687 = vpop.f32.mrb[0].mxu0
    %v688 = vadd.f32 %v598, %v687
    %v689 = vpop.f32.mrb[0].mxu0
    %v690 = vadd.f32 %v602, %v689
    %691 = vmatprep.mubr.f32.mxu0 0.0
    %692 = vmatmul.mubr.f32.gmra.mrb[0].mxu0 %v525
    %v693 = vpop.f32.mrb[0].mxu0
    %v694 = vadd.f32 %v598, %v693
    %v695 = vpop.f32.mrb[0].mxu0
    %v696 = vadd.f32 %v602, %v695
    %697 = vdwg.mxu0
    %698 = vmatprep.subr.mxu0 %v532
    %699 = vmatpush1.msra.mxu0 %v531
    %700 = vmatprep.subr.mxu0 %v536
    %701 = vmatpush1.msra.mxu0 %v535
    %702 = vmatprep.subr.mxu0 %v540
    %703 = vmatpush1.msra.mxu0 %v539
    %704 = vmatprep.subr.mxu0 %v544
    %705 = vmatpush1.msra.mxu0 %v543
    %706 = vmatprep.subr.mxu0 %v548
    %707 = vmatpush1.msra.mxu0 %v547
    %708 = vmatprep.subr.mxu0 %v552
    %709 = vmatpush1.msra.mxu0 %v551
    %710 = vmatprep.subr.mxu0 %v556
    %711 = vmatpush1.msra.mxu0 %v555
    %712 = vmatprep.subr.mxu0 %v560
    %713 = vmatpush1.msra.mxu0 %v559
    %714 = vmatprep.subr.mxu0 %v564
    %715 = vmatpush1.msra.mxu0 %v563
    %716 = vmatprep.subr.mxu0 %v568
    %717 = vmatpush1.msra.mxu0 %v567
    %718 = vmatprep.subr.mxu0 %v572
    %719 = vmatpush1.msra.mxu0 %v571
    %720 = vmatprep.subr.mxu0 %v576
    %721 = vmatpush1.msra.mxu0 %v575
    %722 = vmatprep.subr.mxu0 %v580
    %723 = vmatpush1.msra.mxu0 %v579
    %724 = vmatprep.subr.mxu0 %v584
    %725 = vmatpush1.msra.mxu0 %v583
    %726 = vmatprep.subr.mxu0 %v588
    %727 = vmatpush1.msra.mxu0 %v587
    %728 = vmatprep.subr.mxu0 %v592
    %729 = vmatpush1.msra.mxu0 %v591
    %730 = vmatprep.subr.mxu0 0.0
    %731 = vmatpush1.msra.mxu0 0.0
    %732 = vmatprep.subr.mxu0 0.0
    %733 = vmatpush1.msra.mxu0 0.0
    %734 = vmatprep.subr.mxu0 0.0
    %735 = vmatpush1.msra.mxu0 0.0
    %736 = vmatprep.subr.mxu0 0.0
    %737 = vmatpush1.msra.mxu0 0.0
    %738 = vmatprep.subr.mxu0 0.0
    %739 = vmatpush1.msra.mxu0 0.0
    %740 = vmatprep.subr.mxu0 0.0
    %741 = vmatpush1.msra.mxu0 0.0
    %742 = vmatprep.subr.mxu0 0.0
    %743 = vmatpush1.msra.mxu0 0.0
    %744 = vmatprep.subr.mxu0 0.0
    %745 = vmatpush1.msra.mxu0 0.0
    %746 = vmatprep.subr.mxu0 0.0
    %747 = vmatpush1.msra.mxu0 0.0
    %748 = vmatprep.subr.mxu0 0.0
    %749 = vmatpush1.msra.mxu0 0.0
    %750 = vmatprep.subr.mxu0 0.0
    %751 = vmatpush1.msra.mxu0 0.0
    %752 = vmatprep.subr.mxu0 0.0
    %753 = vmatpush1.msra.mxu0 0.0
    %754 = vmatprep.subr.mxu0 0.0
    %755 = vmatpush1.msra.mxu0 0.0
    %756 = vmatprep.subr.mxu0 0.0
    %757 = vmatpush1.msra.mxu0 0.0
    %758 = vmatprep.subr.mxu0 0.0
    %759 = vmatpush1.msra.mxu0 0.0
    %760 = vmatprep.subr.mxu0 0.0
    %761 = vmatpush1.msra.mxu0 0.0
    %762 = vmatprep.mubr.f32.mxu0 0.0
    %763 = vmatmul.mubr.f32.gmra.mrb[0].mxu0 %v523
    %v764 = vpop.f32.mrb[0].mxu0
    %v765 = vadd.f32 %v606, %v764
    %v766 = vpop.f32.mrb[0].mxu0
    %v767 = vadd.f32 %v610, %v766
    %768 = vmatprep.mubr.f32.mxu0 0.0
    %769 = vmatmul.mubr.f32.gmra.mrb[0].mxu0 %v524
    %v770 = vpop.f32.mrb[0].mxu0
    %v771 = vadd.f32 %v606, %v770
    %v772 = vpop.f32.mrb[0].mxu0
    %v773 = vadd.f32 %v610, %v772
    %774 = vmatprep.mubr.f32.mxu0 0.0
    %775 = vmatmul.mubr.f32.gmra.mrb[0].mxu0 %v525
    %v776 = vpop.f32.mrb[0].mxu0
    %v777 = vadd.f32 %v606, %v776
    %v778 = vpop.f32.mrb[0].mxu0
    %v779 = vadd.f32 %v610, %v778
    %780 = vdwg.mxu0
    %v781 = vmul.f32 %v682, 0.5
    %v782 = vmul.f32 %v684, 0.5
    %v783 = vmul.f32 %v765, 0.5
    %v784 = vmul.f32 %v767, 0.5
    %v785 = vmul.f32 %v688, 0.5
    %v786 = vmul.f32 %v690, 0.5
    %v787 = vmul.f32 %v771, 0.5
    %v788 = vmul.f32 %v773, 0.5
    %v789 = vmul.f32 %v694, 0.5
    %v790 = vmul.f32 %v696, 0.5
    %v791 = vmul.f32 %v777, 0.5
    %v792 = vmul.f32 %v779, 0.5
    %v793 = vmul.f32 %v682, 0.044715
    %v794 = vmul.f32 %v684, 0.044715
    %v795 = vmul.f32 %v765, 0.044715
    %v796 = vmul.f32 %v767, 0.044715
    %v797 = vmul.f32 %v688, 0.044715
    %v798 = vmul.f32 %v690, 0.044715
    %v799 = vmul.f32 %v771, 0.044715
    %v800 = vmul.f32 %v773, 0.044715
    %v801 = vmul.f32 %v694, 0.044715
    %v802 = vmul.f32 %v696, 0.044715
    %v803 = vmul.f32 %v777, 0.044715
    %v804 = vmul.f32 %v779, 0.044715
    %v805 = vmul.f32 %v793, %v682
    %v806 = vmul.f32 %v794, %v684
    %v807 = vmul.f32 %v795, %v765
    %v808 = vmul.f32 %v796, %v767
    %v809 = vmul.f32 %v797, %v688
    %v810 = vmul.f32 %v798, %v690
    %v811 = vmul.f32 %v799, %v771
    %v812 = vmul.f32 %v800, %v773
    %v813 = vmul.f32 %v801, %v694
    %v814 = vmul.f32 %v802, %v696
    %v815 = vmul.f32 %v803, %v777
    %v816 = vmul.f32 %v804, %v779
    %v817 = vmul.f32 %v805, %v682
    %v818 = vmul.f32 %v806, %v684
    %v819 = vmul.f32 %v807, %v765
    %v820 = vmul.f32 %v808, %v767
    %v821 = vmul.f32 %v809, %v688
    %v822 = vmul.f32 %v810, %v690
    %v823 = vmul.f32 %v811, %v771
    %v824 = vmul.f32 %v812, %v773
    %v825 = vmul.f32 %v813, %v694
    %v826 = vmul.f32 %v814, %v696
    %v827 = vmul.f32 %v815, %v777
    %v828 = vmul.f32 %v816, %v779
    %v829 = vadd.f32 %v682, %v817
    %v830 = vadd.f32 %v684, %v818
    %v831 = vadd.f32 %v765, %v819
    %v832 = vadd.f32 %v767, %v820
    %v833 = vadd.f32 %v688, %v821
    %v834 = vadd.f32 %v690, %v822
    %v835 = vadd.f32 %v771, %v823
    %v836 = vadd.f32 %v773, %v824
    %v837 = vadd.f32 %v694, %v825
    %v838 = vadd.f32 %v696, %v826
    %v839 = vadd.f32 %v777, %v827
    %v840 = vadd.f32 %v779, %v828
    %v841 = vmul.f32 %v829, 0.7978846
    %v842 = vmul.f32 %v830, 0.7978846
    %v843 = vmul.f32 %v831, 0.7978846
    %v844 = vmul.f32 %v832, 0.7978846
    %v845 = vmul.f32 %v833, 0.7978846
    %v846 = vmul.f32 %v834, 0.7978846
    %v847 = vmul.f32 %v835, 0.7978846
    %v848 = vmul.f32 %v836, 0.7978846
    %v849 = vmul.f32 %v837, 0.7978846
    %v850 = vmul.f32 %v838, 0.7978846
    %v851 = vmul.f32 %v839, 0.7978846
    %v852 = vmul.f32 %v840, 0.7978846
    %v853 = vtanh.pop %v841
    %v854 = vtanh.pop %v842
    %v855 = vtanh.pop %v843
    %v856 = vtanh.pop %v844
    %v857 = vtanh.pop %v845
    %v858 = vtanh.pop %v846
    %v859 = vtanh.pop %v847
    %v860 = vtanh.pop %v848
    %v861 = vtanh.pop %v849
    %v862 = vtanh.pop %v850
    %v863 = vtanh.pop %v851
    %v864 = vtanh.pop %v852
    %v865 = vadd.f32 %v853, 1.0
    %v866 = vadd.f32 %v854, 1.0
    %v867 = vadd.f32 %v855, 1.0
    %v868 = vadd.f32 %v856, 1.0
    %v869 = vadd.f32 %v857, 1.0
    %v870 = vadd.f32 %v858, 1.0
    %v871 = vadd.f32 %v859, 1.0
    %v872 = vadd.f32 %v860, 1.0
    %v873 = vadd.f32 %v861, 1.0
    %v874 = vadd.f32 %v862, 1.0
    %v875 = vadd.f32 %v863, 1.0
    %v876 = vadd.f32 %v864, 1.0
    %v877 = vmul.f32 %v781, %v865
    %v878 = vmul.f32 %v782, %v866
    %v879 = vmul.f32 %v783, %v867
    %v880 = vmul.f32 %v784, %v868
    %v881 = vmul.f32 %v785, %v869
    %v882 = vmul.f32 %v786, %v870
    %v883 = vmul.f32 %v787, %v871
    %v884 = vmul.f32 %v788, %v872
    %v885 = vmul.f32 %v789, %v873
    %v886 = vmul.f32 %v790, %v874
    %v887 = vmul.f32 %v791, %v875
    %v888 = vmul.f32 %v792, %v876
    %v889 = vld [vmem:[#allocation4] sm:$0xff]
    %v890 = vld [vmem:[#allocation4 + $0x8] sm:$0xff]
    %v891 = vld [vmem:[#allocation4 + $0x10] sm:$0xff]
    %v892 = vld [vmem:[#allocation4 + $0x18] sm:$0xff]
    %v893 = vld [vmem:[#allocation4 + $0x20] sm:$0xff]
    %v894 = vld [vmem:[#allocation4 + $0x28] sm:$0xff]
    %v895 = vld [vmem:[#allocation4 + $0x30] sm:$0xff]
    %v896 = vld [vmem:[#allocation4 + $0x38] sm:$0xff]
    %v897 = vld [vmem:[#allocation4 + $0x40] sm:$0xff]
    %v898 = vld [vmem:[#allocation4 + $0x48] sm:$0xff]
    %v899 = vld [vmem:[#allocation4 + $0x50] sm:$0xff]
    %v900 = vld [vmem:[#allocation4 + $0x58] sm:$0xff]
    %v901 = vld [vmem:[#allocation4 + $0x60] sm:$0xff]
    %v902 = vld [vmem:[#allocation4 + $0x68] sm:$0xff]
    %v903 = vld [vmem:[#allocation4 + $0x70] sm:$0xff]
    %v904 = vld [vmem:[#allocation4 + $0x78] sm:$0xff]
    %v905 = vld [vmem:[#allocation4 + $0x80] sm:$0xff]
    %v906 = vld [vmem:[#allocation4 + $0x88] sm:$0xff]
    %v907 = vld [vmem:[#allocation4 + $0x90] sm:$0xff]
    %v908 = vld [vmem:[#allocation4 + $0x98] sm:$0xff]
    %v909 = vld [vmem:[#allocation4 + $0xa0] sm:$0xff]
    %v910 = vld [vmem:[#allocation4 + $0xa8] sm:$0xff]
    %v911 = vld [vmem:[#allocation4 + $0xb0] sm:$0xff]
    %v912 = vld [vmem:[#allocation4 + $0xb8] sm:$0xff]
    %v913 = vld [vmem:[#allocation4 + $0xc0] sm:$0xff]
    %v914 = vld [vmem:[#allocation4 + $0xc8] sm:$0xff]
    %v915 = vld [vmem:[#allocation4 + $0xd0] sm:$0xff]
    %v916 = vld [vmem:[#allocation4 + $0xd8] sm:$0xff]
    %v917 = vld [vmem:[#allocation4 + $0xe0] sm:$0xff]
    %v918 = vld [vmem:[#allocation4 + $0xe8] sm:$0xff]
    %v919 = vld [vmem:[#allocation4 + $0xf0] sm:$0xff]
    %v920 = vld [vmem:[#allocation4 + $0xf8] sm:$0xff]
    %v921 = vld [vmem:[#allocation4 + $0x100] sm:$0xff]
    %v922 = vld [vmem:[#allocation4 + $0x108] sm:$0xff]
    %v923 = vld [vmem:[#allocation4 + $0x110] sm:$0xff]
    %v924 = vld [vmem:[#allocation4 + $0x118] sm:$0xff]
    %v925 = vld [vmem:[#allocation4 + $0x120] sm:$0xff]
    %v926 = vld [vmem:[#allocation4 + $0x128] sm:$0xff]
    %v927 = vld [vmem:[#allocation4 + $0x130] sm:$0xff]
    %v928 = vld [vmem:[#allocation4 + $0x138] sm:$0xff]
    %v929 = vld [vmem:[#allocation4 + $0x140] sm:$0xff]
    %v930 = vld [vmem:[#allocation4 + $0x148] sm:$0xff]
    %v931 = vld [vmem:[#allocation4 + $0x150] sm:$0xff]
    %v932 = vld [vmem:[#allocation4 + $0x158] sm:$0xff]
    %v933 = vld [vmem:[#allocation4 + $0x160] sm:$0xff]
    %v934 = vld [vmem:[#allocation4 + $0x168] sm:$0xff]
    %v935 = vld [vmem:[#allocation4 + $0x170] sm:$0xff]
    %v936 = vld [vmem:[#allocation4 + $0x178] sm:$0xff]
    %v937 = vld [vmem:[#allocation4 + $0x180] sm:$0xff]
    %v938 = vld [vmem:[#allocation4 + $0x188] sm:$0xff]
    %v939 = vld [vmem:[#allocation4 + $0x190] sm:$0xff]
    %v940 = vld [vmem:[#allocation4 + $0x198] sm:$0xff]
    %v941 = vld [vmem:[#allocation4 + $0x1a0] sm:$0xff]
    %v942 = vld [vmem:[#allocation4 + $0x1a8] sm:$0xff]
    %v943 = vld [vmem:[#allocation4 + $0x1b0] sm:$0xff]
    %v944 = vld [vmem:[#allocation4 + $0x1b8] sm:$0xff]
    %v945 = vld [vmem:[#allocation4 + $0x1c0] sm:$0xff]
    %v946 = vld [vmem:[#allocation4 + $0x1c8] sm:$0xff]
    %v947 = vld [vmem:[#allocation4 + $0x1d0] sm:$0xff]
    %v948 = vld [vmem:[#allocation4 + $0x1d8] sm:$0xff]
    %v949 = vld [vmem:[#allocation4 + $0x1e0] sm:$0xff]
    %v950 = vld [vmem:[#allocation4 + $0x1e8] sm:$0xff]
    %v951 = vld [vmem:[#allocation4 + $0x1f0] sm:$0xff]
    %v952 = vld [vmem:[#allocation4 + $0x1f8] sm:$0xff]
    %v953 = vld [vmem:[%s9] sm:$0x1]
    %v955 = vlaneseq
    %v956 = vshrl.u32 %v955, 7
    %v957 = vsub.s32 0, %v956
    %v958 = vrot.slane %v953, %v957
    %960 = vmatprep.subr.mxu0 0.0
    %961 = vmatpush1.msra.mxu0 %v889
    %962 = vmatprep.subr.mxu0 0.0
    %963 = vmatpush1.msra.mxu0 %v890
    %964 = vmatprep.subr.mxu0 0.0
    %965 = vmatpush1.msra.mxu0 %v891
    %966 = vmatprep.subr.mxu0 0.0
    %967 = vmatpush1.msra.mxu0 %v892
    %968 = vmatprep.subr.mxu0 0.0
    %969 = vmatpush1.msra.mxu0 %v893
    %970 = vmatprep.subr.mxu0 0.0
    %971 = vmatpush1.msra.mxu0 %v894
    %972 = vmatprep.subr.mxu0 0.0
    %973 = vmatpush1.msra.mxu0 %v895
    %974 = vmatprep.subr.mxu0 0.0
    %975 = vmatpush1.msra.mxu0 %v896
    %976 = vmatprep.subr.mxu0 0.0
    %977 = vmatpush1.msra.mxu0 %v897
    %978 = vmatprep.subr.mxu0 0.0
    %979 = vmatpush1.msra.mxu0 %v898
    %980 = vmatprep.subr.mxu0 0.0
    %981 = vmatpush1.msra.mxu0 %v899
    %982 = vmatprep.subr.mxu0 0.0
    %983 = vmatpush1.msra.mxu0 %v900
    %984 = vmatprep.subr.mxu0 0.0
    %985 = vmatpush1.msra.mxu0 %v901
    %986 = vmatprep.subr.mxu0 0.0
    %987 = vmatpush1.msra.mxu0 %v902
    %988 = vmatprep.subr.mxu0 0.0
    %989 = vmatpush1.msra.mxu0 %v903
    %990 = vmatprep.subr.mxu0 0.0
    %991 = vmatpush1.msra.mxu0 %v904
    %992 = vmatprep.subr.mxu0 0.0
    %993 = vmatpush1.msra.mxu0 %v905
    %994 = vmatprep.subr.mxu0 0.0
    %995 = vmatpush1.msra.mxu0 %v906
    %996 = vmatprep.subr.mxu0 0.0
    %997 = vmatpush1.msra.mxu0 %v907
    %998 = vmatprep.subr.mxu0 0.0
    %999 = vmatpush1.msra.mxu0 %v908
    %1000 = vmatprep.subr.mxu0 0.0
    %1001 = vmatpush1.msra.mxu0 %v909
    %1002 = vmatprep.subr.mxu0 0.0
    %1003 = vmatpush1.msra.mxu0 %v910
    %1004 = vmatprep.subr.mxu0 0.0
    %1005 = vmatpush1.msra.mxu0 %v911
    %1006 = vmatprep.subr.mxu0 0.0
    %1007 = vmatpush1.msra.mxu0 %v912
    %1008 = vmatprep.subr.mxu0 0.0
    %1009 = vmatpush1.msra.mxu0 %v913
    %1010 = vmatprep.subr.mxu0 0.0
    %1011 = vmatpush1.msra.mxu0 %v914
    %1012 = vmatprep.subr.mxu0 0.0
    %1013 = vmatpush1.msra.mxu0 %v915
    %1014 = vmatprep.subr.mxu0 0.0
    %1015 = vmatpush1.msra.mxu0 %v916
    %1016 = vmatprep.subr.mxu0 0.0
    %1017 = vmatpush1.msra.mxu0 %v917
    %1018 = vmatprep.subr.mxu0 0.0
    %1019 = vmatpush1.msra.mxu0 %v918
    %1020 = vmatprep.subr.mxu0 0.0
    %1021 = vmatpush1.msra.mxu0 %v919
    %1022 = vmatprep.subr.mxu0 0.0
    %1023 = vmatpush1.msra.mxu0 %v920
    %1024 = vmatprep.mubr.f32.mxu0 %v878
    %1025 = vmatmul.mubr.f32.gmra.mrb[0].mxu0 %v877
    %v1026 = vpop.f32.mrb[0].mxu0
    %v1027 = vadd.f32 %v958, %v1026
    %v1028 = vpop.f32.mrb[0].mxu0
    %1029 = vmatprep.mubr.f32.mxu0 %v882
    %1030 = vmatmul.mubr.f32.gmra.mrb[0].mxu0 %v881
    %v1031 = vpop.f32.mrb[0].mxu0
    %v1032 = vadd.f32 %v958, %v1031
    %v1033 = vpop.f32.mrb[0].mxu0
    %1034 = vmatprep.mubr.f32.mxu0 %v886
    %1035 = vmatmul.mubr.f32.gmra.mrb[0].mxu0 %v885
    %v1036 = vpop.f32.mrb[0].mxu0
    %v1037 = vadd.f32 %v958, %v1036
    %v1038 = vpop.f32.mrb[0].mxu0
    %1039 = vdwg.mxu0
    %1040 = vmatprep.subr.mxu0 0.0
    %1041 = vmatpush1.msra.mxu0 %v921
    %1042 = vmatprep.subr.mxu0 0.0
    %1043 = vmatpush1.msra.mxu0 %v922
    %1044 = vmatprep.subr.mxu0 0.0
    %1045 = vmatpush1.msra.mxu0 %v923
    %1046 = vmatprep.subr.mxu0 0.0
    %1047 = vmatpush1.msra.mxu0 %v924
    %1048 = vmatprep.subr.mxu0 0.0
    %1049 = vmatpush1.msra.mxu0 %v925
    %1050 = vmatprep.subr.mxu0 0.0
    %1051 = vmatpush1.msra.mxu0 %v926
    %1052 = vmatprep.subr.mxu0 0.0
    %1053 = vmatpush1.msra.mxu0 %v927
    %1054 = vmatprep.subr.mxu0 0.0
    %1055 = vmatpush1.msra.mxu0 %v928
    %1056 = vmatprep.subr.mxu0 0.0
    %1057 = vmatpush1.msra.mxu0 %v929
    %1058 = vmatprep.subr.mxu0 0.0
    %1059 = vmatpush1.msra.mxu0 %v930
    %1060 = vmatprep.subr.mxu0 0.0
    %1061 = vmatpush1.msra.mxu0 %v931
    %1062 = vmatprep.subr.mxu0 0.0
    %1063 = vmatpush1.msra.mxu0 %v932
    %1064 = vmatprep.subr.mxu0 0.0
    %1065 = vmatpush1.msra.mxu0 %v933
    %1066 = vmatprep.subr.mxu0 0.0
    %1067 = vmatpush1.msra.mxu0 %v934
    %1068 = vmatprep.subr.mxu0 0.0
    %1069 = vmatpush1.msra.mxu0 %v935
    %1070 = vmatprep.subr.mxu0 0.0
    %1071 = vmatpush1.msra.mxu0 %v936
    %1072 = vmatprep.subr.mxu0 0.0
    %1073 = vmatpush1.msra.mxu0 %v937
    %1074 = vmatprep.subr.mxu0 0.0
    %1075 = vmatpush1.msra.mxu0 %v938
    %1076 = vmatprep.subr.mxu0 0.0
    %1077 = vmatpush1.msra.mxu0 %v939
    %1078 = vmatprep.subr.mxu0 0.0
    %1079 = vmatpush1.msra.mxu0 %v940
    %1080 = vmatprep.subr.mxu0 0.0
    %1081 = vmatpush1.msra.mxu0 %v941
    %1082 = vmatprep.subr.mxu0 0.0
    %1083 = vmatpush1.msra.mxu0 %v942
    %1084 = vmatprep.subr.mxu0 0.0
    %1085 = vmatpush1.msra.mxu0 %v943
    %1086 = vmatprep.subr.mxu0 0.0
    %1087 = vmatpush1.msra.mxu0 %v944
    %1088 = vmatprep.subr.mxu0 0.0
    %1089 = vmatpush1.msra.mxu0 %v945
    %1090 = vmatprep.subr.mxu0 0.0
    %1091 = vmatpush1.msra.mxu0 %v946
    %1092 = vmatprep.subr.mxu0 0.0
    %1093 = vmatpush1.msra.mxu0 %v947
    %1094 = vmatprep.subr.mxu0 0.0
    %1095 = vmatpush1.msra.mxu0 %v948
    %1096 = vmatprep.subr.mxu0 0.0
    %1097 = vmatpush1.msra.mxu0 %v949
    %1098 = vmatprep.subr.mxu0 0.0
    %1099 = vmatpush1.msra.mxu0 %v950
    %1100 = vmatprep.subr.mxu0 0.0
    %1101 = vmatpush1.msra.mxu0 %v951
    %1102 = vmatprep.subr.mxu0 0.0
    %1103 = vmatpush1.msra.mxu0 %v952
    %1104 = vmatprep.mubr.f32.mxu0 %v880
    %1105 = vmatmul.mubr.f32.gmra.mrb[0].mxu0 %v879
    %v1106 = vpop.f32.mrb[0].mxu0
    %v1107 = vadd.f32 %v1027, %v1106
    %v1108 = vpop.f32.mrb[0].mxu0
    %1109 = vmatprep.mubr.f32.mxu0 %v884
    %1110 = vmatmul.mubr.f32.gmra.mrb[0].mxu0 %v883
    %v1111 = vpop.f32.mrb[0].mxu0
    %v1112 = vadd.f32 %v1032, %v1111
    %v1113 = vpop.f32.mrb[0].mxu0
    %1114 = vmatprep.mubr.f32.mxu0 %v888
    %1115 = vmatmul.mubr.f32.gmra.mrb[0].mxu0 %v887
    %v1116 = vpop.f32.mrb[0].mxu0
    %v1117 = vadd.f32 %v1037, %v1116
    %v1118 = vpop.f32.mrb[0].mxu0
    %1119 = vdwg.mxu0
    %v1120 = vadd.f32 %v523, %v1107
    %v1121 = vadd.f32 %v524, %v1112
    %v1122 = vadd.f32 %v525, %v1117
    %1123 = vadd.xlane.f32.xlu0 %v1120
    %v1124 = vpop.xlane.xlu0 %1123
    %1125 = vadd.xlane.f32.xlu0 %v1121
    %v1126 = vpop.xlane.xlu0 %1125
    %1127 = vadd.xlane.f32.xlu0 %v1122
    %v1128 = vpop.xlane.xlu0 %1127
    %v1129 = vrcp.pop 128.0
    %v1130 = vmul.f32 %v1124, %v1129
    %v1131 = vmul.f32 %v1126, %v1129
    %v1132 = vmul.f32 %v1128, %v1129
    %v1133 = vsub.f32 %v1120, %v1130
    %v1134 = vsub.f32 %v1121, %v1131
    %v1135 = vsub.f32 %v1122, %v1132
    %v1136 = vmul.f32 %v1133, %v1133
    %v1137 = vmul.f32 %v1134, %v1134
    %v1138 = vmul.f32 %v1135, %v1135
    %1139 = vadd.xlane.f32.xlu0 %v1136
    %v1140 = vpop.xlane.xlu0 %1139
    %1141 = vadd.xlane.f32.xlu0 %v1137
    %v1142 = vpop.xlane.xlu0 %1141
    %1143 = vadd.xlane.f32.xlu0 %v1138
    %v1144 = vpop.xlane.xlu0 %1143
    %v1145 = vmul.f32 %v1140, %v1129
    %v1146 = vmul.f32 %v1142, %v1129
    %v1147 = vmul.f32 %v1144, %v1129
    %v1148 = vadd.f32 %v1145, 1e-05
    %v1149 = vadd.f32 %v1146, 1e-05
    %v1150 = vadd.f32 %v1147, 1e-05
    %v1151 = vrsqrt.pop %v1148
    %v1152 = vrsqrt.pop %v1149
    %v1153 = vrsqrt.pop %v1150
    %v1154 = vmul.f32 %v1133, %v1151
    %v1155 = vmul.f32 %v1134, %v1152
    %v1156 = vmul.f32 %v1135, %v1153
    %v1157 = vld [vmem:[%s10] sm:$0x1]
    %v1159 = vlaneseq
    %v1160 = vshrl.u32 %v1159, 7
    %v1161 = vsub.s32 0, %v1160
    %v1162 = vrot.slane %v1157, %v1161
    %v1164 = vmul.f32 %v1154, %v1162
    %v1165 = vmul.f32 %v1155, %v1162
    %v1166 = vmul.f32 %v1156, %v1162
    %v1167 = vld [vmem:[%s11] sm:$0x1]
    %v1169 = vlaneseq
    %v1170 = vshrl.u32 %v1169, 7
    %v1171 = vsub.s32 0, %v1170
    %v1172 = vrot.slane %v1167, %v1171
    %v1174 = vadd.f32 %v1164, %v1172
    %v1175 = vadd.f32 %v1165, %v1172
    %v1176 = vadd.f32 %v1166, %v1172
    %s1177 = scalar_lea.vmem %s24, 24
    %1178 = vst [vmem:[%s1177] sm:$0xff] %v1174
    %1179 = vst [vmem:[%s1177 + $0x8] sm:$0xff] %v1175
    %1180 = vst [vmem:[%s1177 + $0x10] sm:$0xff] %v1176
    %s1181 = scalar_lea.vmem %s6, 512
    %v1182 = vld [vmem:[%s1181] sm:$0xff]
    %v1183 = vld [vmem:[%s1181 + $0x8] sm:$0xff]
    %v1184 = vld [vmem:[%s1181 + $0x10] sm:$0xff]
    %v1185 = vld [vmem:[%s1181 + $0x18] sm:$0xff]
    %v1186 = vld [vmem:[%s1181 + $0x20] sm:$0xff]
    %v1187 = vld [vmem:[%s1181 + $0x28] sm:$0xff]
    %v1188 = vld [vmem:[%s1181 + $0x30] sm:$0xff]
    %v1189 = vld [vmem:[%s1181 + $0x38] sm:$0xff]
    %v1190 = vld [vmem:[%s1181 + $0x40] sm:$0xff]
    %v1191 = vld [vmem:[%s1181 + $0x48] sm:$0xff]
    %v1192 = vld [vmem:[%s1181 + $0x50] sm:$0xff]
    %v1193 = vld [vmem:[%s1181 + $0x58] sm:$0xff]
    %v1194 = vld [vmem:[%s1181 + $0x60] sm:$0xff]
    %v1195 = vld [vmem:[%s1181 + $0x68] sm:$0xff]
    %v1196 = vld [vmem:[%s1181 + $0x70] sm:$0xff]
    %v1197 = vld [vmem:[%s1181 + $0x78] sm:$0xff]
    %v1198 = vld [vmem:[%s1181 + $0x80] sm:$0xff]
    %v1199 = vld [vmem:[%s1181 + $0x88] sm:$0xff]
    %v1200 = vld [vmem:[%s1181 + $0x90] sm:$0xff]
    %v1201 = vld [vmem:[%s1181 + $0x98] sm:$0xff]
    %v1202 = vld [vmem:[%s1181 + $0xa0] sm:$0xff]
    %v1203 = vld [vmem:[%s1181 + $0xa8] sm:$0xff]
    %v1204 = vld [vmem:[%s1181 + $0xb0] sm:$0xff]
    %v1205 = vld [vmem:[%s1181 + $0xb8] sm:$0xff]
    %v1206 = vld [vmem:[%s1181 + $0xc0] sm:$0xff]
    %v1207 = vld [vmem:[%s1181 + $0xc8] sm:$0xff]
    %v1208 = vld [vmem:[%s1181 + $0xd0] sm:$0xff]
    %v1209 = vld [vmem:[%s1181 + $0xd8] sm:$0xff]
    %v1210 = vld [vmem:[%s1181 + $0xe0] sm:$0xff]
    %v1211 = vld [vmem:[%s1181 + $0xe8] sm:$0xff]
    %v1212 = vld [vmem:[%s1181 + $0xf0] sm:$0xff]
    %v1213 = vld [vmem:[%s1181 + $0xf8] sm:$0xff]
    %v1214 = vld [vmem:[%s1181 + $0x100] sm:$0xff]
    %v1215 = vld [vmem:[%s1181 + $0x108] sm:$0xff]
    %v1216 = vld [vmem:[%s1181 + $0x110] sm:$0xff]
    %v1217 = vld [vmem:[%s1181 + $0x118] sm:$0xff]
    %v1218 = vld [vmem:[%s1181 + $0x120] sm:$0xff]
    %v1219 = vld [vmem:[%s1181 + $0x128] sm:$0xff]
    %v1220 = vld [vmem:[%s1181 + $0x130] sm:$0xff]
    %v1221 = vld [vmem:[%s1181 + $0x138] sm:$0xff]
    %v1222 = vld [vmem:[%s1181 + $0x140] sm:$0xff]
    %v1223 = vld [vmem:[%s1181 + $0x148] sm:$0xff]
    %v1224 = vld [vmem:[%s1181 + $0x150] sm:$0xff]
    %v1225 = vld [vmem:[%s1181 + $0x158] sm:$0xff]
    %v1226 = vld [vmem:[%s1181 + $0x160] sm:$0xff]
    %v1227 = vld [vmem:[%s1181 + $0x168] sm:$0xff]
    %v1228 = vld [vmem:[%s1181 + $0x170] sm:$0xff]
    %v1229 = vld [vmem:[%s1181 + $0x178] sm:$0xff]
    %v1230 = vld [vmem:[%s1181 + $0x180] sm:$0xff]
    %v1231 = vld [vmem:[%s1181 + $0x188] sm:$0xff]
    %v1232 = vld [vmem:[%s1181 + $0x190] sm:$0xff]
    %v1233 = vld [vmem:[%s1181 + $0x198] sm:$0xff]
    %v1234 = vld [vmem:[%s1181 + $0x1a0] sm:$0xff]
    %v1235 = vld [vmem:[%s1181 + $0x1a8] sm:$0xff]
    %v1236 = vld [vmem:[%s1181 + $0x1b0] sm:$0xff]
    %v1237 = vld [vmem:[%s1181 + $0x1b8] sm:$0xff]
    %v1238 = vld [vmem:[%s1181 + $0x1c0] sm:$0xff]
    %v1239 = vld [vmem:[%s1181 + $0x1c8] sm:$0xff]
    %v1240 = vld [vmem:[%s1181 + $0x1d0] sm:$0xff]
    %v1241 = vld [vmem:[%s1181 + $0x1d8] sm:$0xff]
    %v1242 = vld [vmem:[%s1181 + $0x1e0] sm:$0xff]
    %v1243 = vld [vmem:[%s1181 + $0x1e8] sm:$0xff]
    %v1244 = vld [vmem:[%s1181 + $0x1f0] sm:$0xff]
    %v1245 = vld [vmem:[%s1181 + $0x1f8] sm:$0xff]
    %s1246 = scalar_lea.vmem %s7, 4
    %v1247 = vld [vmem:[%s1246] sm:$0xf]
    %v1249 = vlaneseq
    %v1250 = vshrl.u32 %v1249, 7
    %v1251 = vsub.s32 0, %v1250
    %v1252 = vrot.slane %v1247, %v1251
    %v1253 = vlaneseq
    %v1254 = vshrl.u32 %v1253, 7
    %v1255 = vsub.s32 1, %v1254
    %v1256 = vrot.slane %v1247, %v1255
    %v1257 = vlaneseq
    %v1258 = vshrl.u32 %v1257, 7
    %v1259 = vsub.s32 2, %v1258
    %v1260 = vrot.slane %v1247, %v1259
    %v1261 = vlaneseq
    %v1262 = vshrl.u32 %v1261, 7
    %v1263 = vsub.s32 3, %v1262
    %v1264 = vrot.slane %v1247, %v1263
    %1269 = vmatprep.subr.mxu0 %v1183
    %1270 = vmatpush1.msra.mxu0 %v1182
    %1271 = vmatprep.subr.mxu0 %v1187
    %1272 = vmatpush1.msra.mxu0 %v1186
    %1273 = vmatprep.subr.mxu0 %v1191
    %1274 = vmatpush1.msra.mxu0 %v1190
    %1275 = vmatprep.subr.mxu0 %v1195
    %1276 = vmatpush1.msra.mxu0 %v1194
    %1277 = vmatprep.subr.mxu0 %v1199
    %1278 = vmatpush1.msra.mxu0 %v1198
    %1279 = vmatprep.subr.mxu0 %v1203
    %1280 = vmatpush1.msra.mxu0 %v1202
    %1281 = vmatprep.subr.mxu0 %v1207
    %1282 = vmatpush1.msra.mxu0 %v1206
    %1283 = vmatprep.subr.mxu0 %v1211
    %1284 = vmatpush1.msra.mxu0 %v1210
    %1285 = vmatprep.subr.mxu0 %v1215
    %1286 = vmatpush1.msra.mxu0 %v1214
    %1287 = vmatprep.subr.mxu0 %v1219
    %1288 = vmatpush1.msra.mxu0 %v1218
    %1289 = vmatprep.subr.mxu0 %v1223
    %1290 = vmatpush1.msra.mxu0 %v1222
    %1291 = vmatprep.subr.mxu0 %v1227
    %1292 = vmatpush1.msra.mxu0 %v1226
    %1293 = vmatprep.subr.mxu0 %v1231
    %1294 = vmatpush1.msra.mxu0 %v1230
    %1295 = vmatprep.subr.mxu0 %v1235
    %1296 = vmatpush1.msra.mxu0 %v1234
    %1297 = vmatprep.subr.mxu0 %v1239
    %1298 = vmatpush1.msra.mxu0 %v1238
    %1299 = vmatprep.subr.mxu0 %v1243
    %1300 = vmatpush1.msra.mxu0 %v1242
    %1301 = vmatprep.subr.mxu0 0.0
    %1302 = vmatpush1.msra.mxu0 0.0
    %1303 = vmatprep.subr.mxu0 0.0
    %1304 = vmatpush1.msra.mxu0 0.0
    %1305 = vmatprep.subr.mxu0 0.0
    %1306 = vmatpush1.msra.mxu0 0.0
    %1307 = vmatprep.subr.mxu0 0.0
    %1308 = vmatpush1.msra.mxu0 0.0
    %1309 = vmatprep.subr.mxu0 0.0
    %1310 = vmatpush1.msra.mxu0 0.0
    %1311 = vmatprep.subr.mxu0 0.0
    %1312 = vmatpush1.msra.mxu0 0.0
    %1313 = vmatprep.subr.mxu0 0.0
    %1314 = vmatpush1.msra.mxu0 0.0
    %1315 = vmatprep.subr.mxu0 0.0
    %1316 = vmatpush1.msra.mxu0 0.0
    %1317 = vmatprep.subr.mxu0 0.0
    %1318 = vmatpush1.msra.mxu0 0.0
    %1319 = vmatprep.subr.mxu0 0.0
    %1320 = vmatpush1.msra.mxu0 0.0
    %1321 = vmatprep.subr.mxu0 0.0
    %1322 = vmatpush1.msra.mxu0 0.0
    %1323 = vmatprep.subr.mxu0 0.0
    %1324 = vmatpush1.msra.mxu0 0.0
    %1325 = vmatprep.subr.mxu0 0.0
    %1326 = vmatpush1.msra.mxu0 0.0
    %1327 = vmatprep.subr.mxu0 0.0
    %1328 = vmatpush1.msra.mxu0 0.0
    %1329 = vmatprep.subr.mxu0 0.0
    %1330 = vmatpush1.msra.mxu0 0.0
    %1331 = vmatprep.subr.mxu0 0.0
    %1332 = vmatpush1.msra.mxu0 0.0
    %1333 = vmatprep.mubr.f32.mxu0 0.0
    %1334 = vmatmul.mubr.f32.gmra.mrb[0].mxu0 %v1174
    %v1335 = vpop.f32.mrb[0].mxu0
    %v1336 = vadd.f32 %v1252, %v1335
    %v1337 = vpop.f32.mrb[0].mxu0
    %v1338 = vadd.f32 %v1256, %v1337
    %1339 = vmatprep.mubr.f32.mxu0 0.0
    %1340 = vmatmul.mubr.f32.gmra.mrb[0].mxu0 %v1175
    %v1341 = vpop.f32.mrb[0].mxu0
    %v1342 = vadd.f32 %v1252, %v1341
    %v1343 = vpop.f32.mrb[0].mxu0
    %v1344 = vadd.f32 %v1256, %v1343
    %1345 = vmatprep.mubr.f32.mxu0 0.0
    %1346 = vmatmul.mubr.f32.gmra.mrb[0].mxu0 %v1176
    %v1347 = vpop.f32.mrb[0].mxu0
    %v1348 = vadd.f32 %v1252, %v1347
    %v1349 = vpop.f32.mrb[0].mxu0
    %v1350 = vadd.f32 %v1256, %v1349
    %1351 = vdwg.mxu0
    %1352 = vmatprep.subr.mxu0 %v1185
    %1353 = vmatpush1.msra.mxu0 %v1184
    %1354 = vmatprep.subr.mxu0 %v1189
    %1355 = vmatpush1.msra.mxu0 %v1188
    %1356 = vmatprep.subr.mxu0 %v1193
    %1357 = vmatpush1.msra.mxu0 %v1192
    %1358 = vmatprep.subr.mxu0 %v1197
    %1359 = vmatpush1.msra.mxu0 %v1196
    %1360 = vmatprep.subr.mxu0 %v1201
    %1361 = vmatpush1.msra.mxu0 %v1200
    %1362 = vmatprep.subr.mxu0 %v1205
    %1363 = vmatpush1.msra.mxu0 %v1204
    %1364 = vmatprep.subr.mxu0 %v1209
    %1365 = vmatpush1.msra.mxu0 %v1208
    %1366 = vmatprep.subr.mxu0 %v1213
    %1367 = vmatpush1.msra.mxu0 %v1212
    %1368 = vmatprep.subr.mxu0 %v1217
    %1369 = vmatpush1.msra.mxu0 %v1216
    %1370 = vmatprep.subr.mxu0 %v1221
    %1371 = vmatpush1.msra.mxu0 %v1220
    %1372 = vmatprep.subr.mxu0 %v1225
    %1373 = vmatpush1.msra.mxu0 %v1224
    %1374 = vmatprep.subr.mxu0 %v1229
    %1375 = vmatpush1.msra.mxu0 %v1228
    %1376 = vmatprep.subr.mxu0 %v1233
    %1377 = vmatpush1.msra.mxu0 %v1232
    %1378 = vmatprep.subr.mxu0 %v1237
    %1379 = vmatpush1.msra.mxu0 %v1236
    %1380 = vmatprep.subr.mxu0 %v1241
    %1381 = vmatpush1.msra.mxu0 %v1240
    %1382 = vmatprep.subr.mxu0 %v1245
    %1383 = vmatpush1.msra.mxu0 %v1244
    %1384 = vmatprep.subr.mxu0 0.0
    %1385 = vmatpush1.msra.mxu0 0.0
    %1386 = vmatprep.subr.mxu0 0.0
    %1387 = vmatpush1.msra.mxu0 0.0
    %1388 = vmatprep.subr.mxu0 0.0
    %1389 = vmatpush1.msra.mxu0 0.0
    %1390 = vmatprep.subr.mxu0 0.0
    %1391 = vmatpush1.msra.mxu0 0.0
    %1392 = vmatprep.subr.mxu0 0.0
    %1393 = vmatpush1.msra.mxu0 0.0
    %1394 = vmatprep.subr.mxu0 0.0
    %1395 = vmatpush1.msra.mxu0 0.0
    %1396 = vmatprep.subr.mxu0 0.0
    %1397 = vmatpush1.msra.mxu0 0.0
    %1398 = vmatprep.subr.mxu0 0.0
    %1399 = vmatpush1.msra.mxu0 0.0
    %1400 = vmatprep.subr.mxu0 0.0
    %1401 = vmatpush1.msra.mxu0 0.0
    %1402 = vmatprep.subr.mxu0 0.0
    %1403 = vmatpush1.msra.mxu0 0.0
    %1404 = vmatprep.subr.mxu0 0.0
    %1405 = vmatpush1.msra.mxu0 0.0
    %1406 = vmatprep.subr.mxu0 0.0
    %1407 = vmatpush1.msra.mxu0 0.0
    %1408 = vmatprep.subr.mxu0 0.0
    %1409 = vmatpush1.msra.mxu0 0.0
    %1410 = vmatprep.subr.mxu0 0.0
    %1411 = vmatpush1.msra.mxu0 0.0
    %1412 = vmatprep.subr.mxu0 0.0
    %1413 = vmatpush1.msra.mxu0 0.0
    %1414 = vmatprep.subr.mxu0 0.0
    %1415 = vmatpush1.msra.mxu0 0.0
    %1416 = vmatprep.mubr.f32.mxu0 0.0
    %1417 = vmatmul.mubr.f32.gmra.mrb[0].mxu0 %v1174
    %v1418 = vpop.f32.mrb[0].mxu0
    %v1419 = vadd.f32 %v1260, %v1418
    %v1420 = vpop.f32.mrb[0].mxu0
    %v1421 = vadd.f32 %v1264, %v1420
    %1422 = vmatprep.mubr.f32.mxu0 0.0
    %1423 = vmatmul.mubr.f32.gmra.mrb[0].mxu0 %v1175
    %v1424 = vpop.f32.mrb[0].mxu0
    %v1425 = vadd.f32 %v1260, %v1424
    %v1426 = vpop.f32.mrb[0].mxu0
    %v1427 = vadd.f32 %v1264, %v1426
    %1428 = vmatprep.mubr.f32.mxu0 0.0
    %1429 = vmatmul.mubr.f32.gmra.mrb[0].mxu0 %v1176
    %v1430 = vpop.f32.mrb[0].mxu0
    %v1431 = vadd.f32 %v1260, %v1430
    %v1432 = vpop.f32.mrb[0].mxu0
    %v1433 = vadd.f32 %v1264, %v1432
    %1434 = vdwg.mxu0
    %v1435 = vmul.f32 %v1336, 0.5
    %v1436 = vmul.f32 %v1338, 0.5
    %v1437 = vmul.f32 %v1419, 0.5
    %v1438 = vmul.f32 %v1421, 0.5
    %v1439 = vmul.f32 %v1342, 0.5
    %v1440 = vmul.f32 %v1344, 0.5
    %v1441 = vmul.f32 %v1425, 0.5
    %v1442 = vmul.f32 %v1427, 0.5
    %v1443 = vmul.f32 %v1348, 0.5
    %v1444 = vmul.f32 %v1350, 0.5
    %v1445 = vmul.f32 %v1431, 0.5
    %v1446 = vmul.f32 %v1433, 0.5
    %v1447 = vmul.f32 %v1336, 0.044715
    %v1448 = vmul.f32 %v1338, 0.044715
    %v1449 = vmul.f32 %v1419, 0.044715
    %v1450 = vmul.f32 %v1421, 0.044715
    %v1451 = vmul.f32 %v1342, 0.044715
    %v1452 = vmul.f32 %v1344, 0.044715
    %v1453 = vmul.f32 %v1425, 0.044715
    %v1454 = vmul.f32 %v1427, 0.044715
    %v1455 = vmul.f32 %v1348, 0.044715
    %v1456 = vmul.f32 %v1350, 0.044715
    %v1457 = vmul.f32 %v1431, 0.044715
    %v1458 = vmul.f32 %v1433, 0.044715
    %v1459 = vmul.f32 %v1447, %v1336
    %v1460 = vmul.f32 %v1448, %v1338
    %v1461 = vmul.f32 %v1449, %v1419
    %v1462 = vmul.f32 %v1450, %v1421
    %v1463 = vmul.f32 %v1451, %v1342
    %v1464 = vmul.f32 %v1452, %v1344
    %v1465 = vmul.f32 %v1453, %v1425
    %v1466 = vmul.f32 %v1454, %v1427
    %v1467 = vmul.f32 %v1455, %v1348
    %v1468 = vmul.f32 %v1456, %v1350
    %v1469 = vmul.f32 %v1457, %v1431
    %v1470 = vmul.f32 %v1458, %v1433
    %v1471 = vmul.f32 %v1459, %v1336
    %v1472 = vmul.f32 %v1460, %v1338
    %v1473 = vmul.f32 %v1461, %v1419
    %v1474 = vmul.f32 %v1462, %v1421
    %v1475 = vmul.f32 %v1463, %v1342
    %v1476 = vmul.f32 %v1464, %v1344
    %v1477 = vmul.f32 %v1465, %v1425
    %v1478 = vmul.f32 %v1466, %v1427
    %v1479 = vmul.f32 %v1467, %v1348
    %v1480 = vmul.f32 %v1468, %v1350
    %v1481 = vmul.f32 %v1469, %v1431
    %v1482 = vmul.f32 %v1470, %v1433
    %v1483 = vadd.f32 %v1336, %v1471
    %v1484 = vadd.f32 %v1338, %v1472
    %v1485 = vadd.f32 %v1419, %v1473
    %v1486 = vadd.f32 %v1421, %v1474
    %v1487 = vadd.f32 %v1342, %v1475
    %v1488 = vadd.f32 %v1344, %v1476
    %v1489 = vadd.f32 %v1425, %v1477
    %v1490 = vadd.f32 %v1427, %v1478
    %v1491 = vadd.f32 %v1348, %v1479
    %v1492 = vadd.f32 %v1350, %v1480
    %v1493 = vadd.f32 %v1431, %v1481
    %v1494 = vadd.f32 %v1433, %v1482
    %v1495 = vmul.f32 %v1483, 0.7978846
    %v1496 = vmul.f32 %v1484, 0.7978846
    %v1497 = vmul.f32 %v1485, 0.7978846
    %v1498 = vmul.f32 %v1486, 0.7978846
    %v1499 = vmul.f32 %v1487, 0.7978846
    %v1500 = vmul.f32 %v1488, 0.7978846
    %v1501 = vmul.f32 %v1489, 0.7978846
    %v1502 = vmul.f32 %v1490, 0.7978846
    %v1503 = vmul.f32 %v1491, 0.7978846
    %v1504 = vmul.f32 %v1492, 0.7978846
    %v1505 = vmul.f32 %v1493, 0.7978846
    %v1506 = vmul.f32 %v1494, 0.7978846
    %v1507 = vtanh.pop %v1495
    %v1508 = vtanh.pop %v1496
    %v1509 = vtanh.pop %v1497
    %v1510 = vtanh.pop %v1498
    %v1511 = vtanh.pop %v1499
    %v1512 = vtanh.pop %v1500
    %v1513 = vtanh.pop %v1501
    %v1514 = vtanh.pop %v1502
    %v1515 = vtanh.pop %v1503
    %v1516 = vtanh.pop %v1504
    %v1517 = vtanh.pop %v1505
    %v1518 = vtanh.pop %v1506
    %v1519 = vadd.f32 %v1507, 1.0
    %v1520 = vadd.f32 %v1508, 1.0
    %v1521 = vadd.f32 %v1509, 1.0
    %v1522 = vadd.f32 %v1510, 1.0
    %v1523 = vadd.f32 %v1511, 1.0
    %v1524 = vadd.f32 %v1512, 1.0
    %v1525 = vadd.f32 %v1513, 1.0
    %v1526 = vadd.f32 %v1514, 1.0
    %v1527 = vadd.f32 %v1515, 1.0
    %v1528 = vadd.f32 %v1516, 1.0
    %v1529 = vadd.f32 %v1517, 1.0
    %v1530 = vadd.f32 %v1518, 1.0
    %v1531 = vmul.f32 %v1435, %v1519
    %v1532 = vmul.f32 %v1436, %v1520
    %v1533 = vmul.f32 %v1437, %v1521
    %v1534 = vmul.f32 %v1438, %v1522
    %v1535 = vmul.f32 %v1439, %v1523
    %v1536 = vmul.f32 %v1440, %v1524
    %v1537 = vmul.f32 %v1441, %v1525
    %v1538 = vmul.f32 %v1442, %v1526
    %v1539 = vmul.f32 %v1443, %v1527
    %v1540 = vmul.f32 %v1444, %v1528
    %v1541 = vmul.f32 %v1445, %v1529
    %v1542 = vmul.f32 %v1446, %v1530
    %s1543 = scalar_lea.vmem [#allocation4], 512
    %v1544 = vld [vmem:[%s1543] sm:$0xff]
    %v1545 = vld [vmem:[%s1543 + $0x8] sm:$0xff]
    %v1546 = vld [vmem:[%s1543 + $0x10] sm:$0xff]
    %v1547 = vld [vmem:[%s1543 + $0x18] sm:$0xff]
    %v1548 = vld [vmem:[%s1543 + $0x20] sm:$0xff]
    %v1549 = vld [vmem:[%s1543 + $0x28] sm:$0xff]
    %v1550 = vld [vmem:[%s1543 + $0x30] sm:$0xff]
    %v1551 = vld [vmem:[%s1543 + $0x38] sm:$0xff]
    %v1552 = vld [vmem:[%s1543 + $0x40] sm:$0xff]
    %v1553 = vld [vmem:[%s1543 + $0x48] sm:$0xff]
    %v1554 = vld [vmem:[%s1543 + $0x50] sm:$0xff]
    %v1555 = vld [vmem:[%s1543 + $0x58] sm:$0xff]
    %v1556 = vld [vmem:[%s1543 + $0x60] sm:$0xff]
    %v1557 = vld [vmem:[%s1543 + $0x68] sm:$0xff]
    %v1558 = vld [vmem:[%s1543 + $0x70] sm:$0xff]
    %v1559 = vld [vmem:[%s1543 + $0x78] sm:$0xff]
    %v1560 = vld [vmem:[%s1543 + $0x80] sm:$0xff]
    %v1561 = vld [vmem:[%s1543 + $0x88] sm:$0xff]
    %v1562 = vld [vmem:[%s1543 + $0x90] sm:$0xff]
    %v1563 = vld [vmem:[%s1543 + $0x98] sm:$0xff]
    %v1564 = vld [vmem:[%s1543 + $0xa0] sm:$0xff]
    %v1565 = vld [vmem:[%s1543 + $0xa8] sm:$0xff]
    %v1566 = vld [vmem:[%s1543 + $0xb0] sm:$0xff]
    %v1567 = vld [vmem:[%s1543 + $0xb8] sm:$0xff]
    %v1568 = vld [vmem:[%s1543 + $0xc0] sm:$0xff]
    %v1569 = vld [vmem:[%s1543 + $0xc8] sm:$0xff]
    %v1570 = vld [vmem:[%s1543 + $0xd0] sm:$0xff]
    %v1571 = vld [vmem:[%s1543 + $0xd8] sm:$0xff]
    %v1572 = vld [vmem:[%s1543 + $0xe0] sm:$0xff]
    %v1573 = vld [vmem:[%s1543 + $0xe8] sm:$0xff]
    %v1574 = vld [vmem:[%s1543 + $0xf0] sm:$0xff]
    %v1575 = vld [vmem:[%s1543 + $0xf8] sm:$0xff]
    %v1576 = vld [vmem:[%s1543 + $0x100] sm:$0xff]
    %v1577 = vld [vmem:[%s1543 + $0x108] sm:$0xff]
    %v1578 = vld [vmem:[%s1543 + $0x110] sm:$0xff]
    %v1579 = vld [vmem:[%s1543 + $0x118] sm:$0xff]
    %v1580 = vld [vmem:[%s1543 + $0x120] sm:$0xff]
    %v1581 = vld [vmem:[%s1543 + $0x128] sm:$0xff]
    %v1582 = vld [vmem:[%s1543 + $0x130] sm:$0xff]
    %v1583 = vld [vmem:[%s1543 + $0x138] sm:$0xff]
    %v1584 = vld [vmem:[%s1543 + $0x140] sm:$0xff]
    %v1585 = vld [vmem:[%s1543 + $0x148] sm:$0xff]
    %v1586 = vld [vmem:[%s1543 + $0x150] sm:$0xff]
    %v1587 = vld [vmem:[%s1543 + $0x158] sm:$0xff]
    %v1588 = vld [vmem:[%s1543 + $0x160] sm:$0xff]
    %v1589 = vld [vmem:[%s1543 + $0x168] sm:$0xff]
    %v1590 = vld [vmem:[%s1543 + $0x170] sm:$0xff]
    %v1591 = vld [vmem:[%s1543 + $0x178] sm:$0xff]
    %v1592 = vld [vmem:[%s1543 + $0x180] sm:$0xff]
    %v1593 = vld [vmem:[%s1543 + $0x188] sm:$0xff]
    %v1594 = vld [vmem:[%s1543 + $0x190] sm:$0xff]
    %v1595 = vld [vmem:[%s1543 + $0x198] sm:$0xff]
    %v1596 = vld [vmem:[%s1543 + $0x1a0] sm:$0xff]
    %v1597 = vld [vmem:[%s1543 + $0x1a8] sm:$0xff]
    %v1598 = vld [vmem:[%s1543 + $0x1b0] sm:$0xff]
    %v1599 = vld [vmem:[%s1543 + $0x1b8] sm:$0xff]
    %v1600 = vld [vmem:[%s1543 + $0x1c0] sm:$0xff]
    %v1601 = vld [vmem:[%s1543 + $0x1c8] sm:$0xff]
    %v1602 = vld [vmem:[%s1543 + $0x1d0] sm:$0xff]
    %v1603 = vld [vmem:[%s1543 + $0x1d8] sm:$0xff]
    %v1604 = vld [vmem:[%s1543 + $0x1e0] sm:$0xff]
    %v1605 = vld [vmem:[%s1543 + $0x1e8] sm:$0xff]
    %v1606 = vld [vmem:[%s1543 + $0x1f0] sm:$0xff]
    %v1607 = vld [vmem:[%s1543 + $0x1f8] sm:$0xff]
    %s1608 = scalar_lea.vmem %s9, 1
    %v1609 = vld [vmem:[%s1608] sm:$0x1]
    %v1611 = vlaneseq
    %v1612 = vshrl.u32 %v1611, 7
    %v1613 = vsub.s32 0, %v1612
    %v1614 = vrot.slane %v1609, %v1613
    %1616 = vmatprep.subr.mxu0 0.0
    %1617 = vmatpush1.msra.mxu0 %v1544
    %1618 = vmatprep.subr.mxu0 0.0
    %1619 = vmatpush1.msra.mxu0 %v1545
    %1620 = vmatprep.subr.mxu0 0.0
    %1621 = vmatpush1.msra.mxu0 %v1546
    %1622 = vmatprep.subr.mxu0 0.0
    %1623 = vmatpush1.msra.mxu0 %v1547
    %1624 = vmatprep.subr.mxu0 0.0
    %1625 = vmatpush1.msra.mxu0 %v1548
    %1626 = vmatprep.subr.mxu0 0.0
    %1627 = vmatpush1.msra.mxu0 %v1549
    %1628 = vmatprep.subr.mxu0 0.0
    %1629 = vmatpush1.msra.mxu0 %v1550
    %1630 = vmatprep.subr.mxu0 0.0
    %1631 = vmatpush1.msra.mxu0 %v1551
    %1632 = vmatprep.subr.mxu0 0.0
    %1633 = vmatpush1.msra.mxu0 %v1552
    %1634 = vmatprep.subr.mxu0 0.0
    %1635 = vmatpush1.msra.mxu0 %v1553
    %1636 = vmatprep.subr.mxu0 0.0
    %1637 = vmatpush1.msra.mxu0 %v1554
    %1638 = vmatprep.subr.mxu0 0.0
    %1639 = vmatpush1.msra.mxu0 %v1555
    %1640 = vmatprep.subr.mxu0 0.0
    %1641 = vmatpush1.msra.mxu0 %v1556
    %1642 = vmatprep.subr.mxu0 0.0
    %1643 = vmatpush1.msra.mxu0 %v1557
    %1644 = vmatprep.subr.mxu0 0.0
    %1645 = vmatpush1.msra.mxu0 %v1558
    %1646 = vmatprep.subr.mxu0 0.0
    %1647 = vmatpush1.msra.mxu0 %v1559
    %1648 = vmatprep.subr.mxu0 0.0
    %1649 = vmatpush1.msra.mxu0 %v1560
    %1650 = vmatprep.subr.mxu0 0.0
    %1651 = vmatpush1.msra.mxu0 %v1561
    %1652 = vmatprep.subr.mxu0 0.0
    %1653 = vmatpush1.msra.mxu0 %v1562
    %1654 = vmatprep.subr.mxu0 0.0
    %1655 = vmatpush1.msra.mxu0 %v1563
    %1656 = vmatprep.subr.mxu0 0.0
    %1657 = vmatpush1.msra.mxu0 %v1564
    %1658 = vmatprep.subr.mxu0 0.0
    %1659 = vmatpush1.msra.mxu0 %v1565
    %1660 = vmatprep.subr.mxu0 0.0
    %1661 = vmatpush1.msra.mxu0 %v1566
    %1662 = vmatprep.subr.mxu0 0.0
    %1663 = vmatpush1.msra.mxu0 %v1567
    %1664 = vmatprep.subr.mxu0 0.0
    %1665 = vmatpush1.msra.mxu0 %v1568
    %1666 = vmatprep.subr.mxu0 0.0
    %1667 = vmatpush1.msra.mxu0 %v1569
    %1668 = vmatprep.subr.mxu0 0.0
    %1669 = vmatpush1.msra.mxu0 %v1570
    %1670 = vmatprep.subr.mxu0 0.0
    %1671 = vmatpush1.msra.mxu0 %v1571
    %1672 = vmatprep.subr.mxu0 0.0
    %1673 = vmatpush1.msra.mxu0 %v1572
    %1674 = vmatprep.subr.mxu0 0.0
    %1675 = vmatpush1.msra.mxu0 %v1573
    %1676 = vmatprep.subr.mxu0 0.0
    %1677 = vmatpush1.msra.mxu0 %v1574
    %1678 = vmatprep.subr.mxu0 0.0
    %1679 = vmatpush1.msra.mxu0 %v1575
    %1680 = vmatprep.mubr.f32.mxu0 %v1532
    %1681 = vmatmul.mubr.f32.gmra.mrb[0].mxu0 %v1531
    %v1682 = vpop.f32.mrb[0].mxu0
    %v1683 = vadd.f32 %v1614, %v1682
    %v1684 = vpop.f32.mrb[0].mxu0
    %1685 = vmatprep.mubr.f32.mxu0 %v1536
    %1686 = vmatmul.mubr.f32.gmra.mrb[0].mxu0 %v1535
    %v1687 = vpop.f32.mrb[0].mxu0
    %v1688 = vadd.f32 %v1614, %v1687
    %v1689 = vpop.f32.mrb[0].mxu0
    %1690 = vmatprep.mubr.f32.mxu0 %v1540
    %1691 = vmatmul.mubr.f32.gmra.mrb[0].mxu0 %v1539
    %v1692 = vpop.f32.mrb[0].mxu0
    %v1693 = vadd.f32 %v1614, %v1692
    %v1694 = vpop.f32.mrb[0].mxu0
    %1695 = vdwg.mxu0
    %1696 = vmatprep.subr.mxu0 0.0
    %1697 = vmatpush1.msra.mxu0 %v1576
    %1698 = vmatprep.subr.mxu0 0.0
    %1699 = vmatpush1.msra.mxu0 %v1577
    %1700 = vmatprep.subr.mxu0 0.0
    %1701 = vmatpush1.msra.mxu0 %v1578
    %1702 = vmatprep.subr.mxu0 0.0
    %1703 = vmatpush1.msra.mxu0 %v1579
    %1704 = vmatprep.subr.mxu0 0.0
    %1705 = vmatpush1.msra.mxu0 %v1580
    %1706 = vmatprep.subr.mxu0 0.0
    %1707 = vmatpush1.msra.mxu0 %v1581
    %1708 = vmatprep.subr.mxu0 0.0
    %1709 = vmatpush1.msra.mxu0 %v1582
    %1710 = vmatprep.subr.mxu0 0.0
    %1711 = vmatpush1.msra.mxu0 %v1583
    %1712 = vmatprep.subr.mxu0 0.0
    %1713 = vmatpush1.msra.mxu0 %v1584
    %1714 = vmatprep.subr.mxu0 0.0
    %1715 = vmatpush1.msra.mxu0 %v1585
    %1716 = vmatprep.subr.mxu0 0.0
    %1717 = vmatpush1.msra.mxu0 %v1586
    %1718 = vmatprep.subr.mxu0 0.0
    %1719 = vmatpush1.msra.mxu0 %v1587
    %1720 = vmatprep.subr.mxu0 0.0
    %1721 = vmatpush1.msra.mxu0 %v1588
    %1722 = vmatprep.subr.mxu0 0.0
    %1723 = vmatpush1.msra.mxu0 %v1589
    %1724 = vmatprep.subr.mxu0 0.0
    %1725 = vmatpush1.msra.mxu0 %v1590
    %1726 = vmatprep.subr.mxu0 0.0
    %1727 = vmatpush1.msra.mxu0 %v1591
    %1728 = vmatprep.subr.mxu0 0.0
    %1729 = vmatpush1.msra.mxu0 %v1592
    %1730 = vmatprep.subr.mxu0 0.0
    %1731 = vmatpush1.msra.mxu0 %v1593
    %1732 = vmatprep.subr.mxu0 0.0
    %1733 = vmatpush1.msra.mxu0 %v1594
    %1734 = vmatprep.subr.mxu0 0.0
    %1735 = vmatpush1.msra.mxu0 %v1595
    %1736 = vmatprep.subr.mxu0 0.0
    %1737 = vmatpush1.msra.mxu0 %v1596
    %1738 = vmatprep.subr.mxu0 0.0
    %1739 = vmatpush1.msra.mxu0 %v1597
    %1740 = vmatprep.subr.mxu0 0.0
    %1741 = vmatpush1.msra.mxu0 %v1598
    %1742 = vmatprep.subr.mxu0 0.0
    %1743 = vmatpush1.msra.mxu0 %v1599
    %1744 = vmatprep.subr.mxu0 0.0
    %1745 = vmatpush1.msra.mxu0 %v1600
    %1746 = vmatprep.subr.mxu0 0.0
    %1747 = vmatpush1.msra.mxu0 %v1601
    %1748 = vmatprep.subr.mxu0 0.0
    %1749 = vmatpush1.msra.mxu0 %v1602
    %1750 = vmatprep.subr.mxu0 0.0
    %1751 = vmatpush1.msra.mxu0 %v1603
    %1752 = vmatprep.subr.mxu0 0.0
    %1753 = vmatpush1.msra.mxu0 %v1604
    %1754 = vmatprep.subr.mxu0 0.0
    %1755 = vmatpush1.msra.mxu0 %v1605
    %1756 = vmatprep.subr.mxu0 0.0
    %1757 = vmatpush1.msra.mxu0 %v1606
    %1758 = vmatprep.subr.mxu0 0.0
    %1759 = vmatpush1.msra.mxu0 %v1607
    %1760 = vmatprep.mubr.f32.mxu0 %v1534
    %1761 = vmatmul.mubr.f32.gmra.mrb[0].mxu0 %v1533
    %v1762 = vpop.f32.mrb[0].mxu0
    %v1763 = vadd.f32 %v1683, %v1762
    %v1764 = vpop.f32.mrb[0].mxu0
    %1765 = vmatprep.mubr.f32.mxu0 %v1538
    %1766 = vmatmul.mubr.f32.gmra.mrb[0].mxu0 %v1537
    %v1767 = vpop.f32.mrb[0].mxu0
    %v1768 = vadd.f32 %v1688, %v1767
    %v1769 = vpop.f32.mrb[0].mxu0
    %1770 = vmatprep.mubr.f32.mxu0 %v1542
    %1771 = vmatmul.mubr.f32.gmra.mrb[0].mxu0 %v1541
    %v1772 = vpop.f32.mrb[0].mxu0
    %v1773 = vadd.f32 %v1693, %v1772
    %v1774 = vpop.f32.mrb[0].mxu0
    %1775 = vdwg.mxu0
    %v1776 = vadd.f32 %v1174, %v1763
    %v1777 = vadd.f32 %v1175, %v1768
    %v1778 = vadd.f32 %v1176, %v1773
    %1779 = vadd.xlane.f32.xlu0 %v1776
    %v1780 = vpop.xlane.xlu0 %1779
    %1781 = vadd.xlane.f32.xlu0 %v1777
    %v1782 = vpop.xlane.xlu0 %1781
    %1783 = vadd.xlane.f32.xlu0 %v1778
    %v1784 = vpop.xlane.xlu0 %1783
    %v1785 = vmul.f32 %v1780, %v1129
    %v1786 = vmul.f32 %v1782, %v1129
    %v1787 = vmul.f32 %v1784, %v1129
    %v1788 = vsub.f32 %v1776, %v1785
    %v1789 = vsub.f32 %v1777, %v1786
    %v1790 = vsub.f32 %v1778, %v1787
    %v1791 = vmul.f32 %v1788, %v1788
    %v1792 = vmul.f32 %v1789, %v1789
    %v1793 = vmul.f32 %v1790, %v1790
    %1794 = vadd.xlane.f32.xlu0 %v1791
    %v1795 = vpop.xlane.xlu0 %1794
    %1796 = vadd.xlane.f32.xlu0 %v1792
    %v1797 = vpop.xlane.xlu0 %1796
    %1798 = vadd.xlane.f32.xlu0 %v1793
    %v1799 = vpop.xlane.xlu0 %1798
    %v1800 = vmul.f32 %v1795, %v1129
    %v1801 = vmul.f32 %v1797, %v1129
    %v1802 = vmul.f32 %v1799, %v1129
    %v1803 = vadd.f32 %v1800, 1e-05
    %v1804 = vadd.f32 %v1801, 1e-05
    %v1805 = vadd.f32 %v1802, 1e-05
    %v1806 = vrsqrt.pop %v1803
    %v1807 = vrsqrt.pop %v1804
    %v1808 = vrsqrt.pop %v1805
    %v1809 = vmul.f32 %v1788, %v1806
    %v1810 = vmul.f32 %v1789, %v1807
    %v1811 = vmul.f32 %v1790, %v1808
    %s1812 = scalar_lea.vmem %s10, 1
    %v1813 = vld [vmem:[%s1812] sm:$0x1]
    %v1815 = vlaneseq
    %v1816 = vshrl.u32 %v1815, 7
    %v1817 = vsub.s32 0, %v1816
    %v1818 = vrot.slane %v1813, %v1817
    %v1820 = vmul.f32 %v1809, %v1818
    %v1821 = vmul.f32 %v1810, %v1818
    %v1822 = vmul.f32 %v1811, %v1818
    %s1823 = scalar_lea.vmem %s11, 1
    %v1824 = vld [vmem:[%s1823] sm:$0x1]
    %v1826 = vlaneseq
    %v1827 = vshrl.u32 %v1826, 7
    %v1828 = vsub.s32 0, %v1827
    %v1829 = vrot.slane %v1824, %v1828
    %v1831 = vadd.f32 %v1820, %v1829
    %v1832 = vadd.f32 %v1821, %v1829
    %v1833 = vadd.f32 %v1822, %v1829
    %s1834 = scalar_lea.vmem %s24, 48
    %1835 = vst [vmem:[%s1834] sm:$0xff] %v1831
    %1836 = vst [vmem:[%s1834 + $0x8] sm:$0xff] %v1832
    %1837 = vst [vmem:[%s1834 + $0x10] sm:$0xff] %v1833
    %v1838 = vld [vmem:[%s1] sm:$0xff]
    %v1839 = vld [vmem:[%s1 + $0x8] sm:$0xff]
    %v1840 = vld [vmem:[%s4] sm:$0xff]
    %v1841 = vld [vmem:[%s4 + $0x8] sm:$0xff]
    %v1842 = vld [vmem:[%s4 + $0x10] sm:$0xff]
    %v1843 = vld [vmem:[%s4 + $0x18] sm:$0xff]
    %v1844 = vld [vmem:[%s4 + $0x20] sm:$0xff]
    %v1845 = vld [vmem:[%s4 + $0x28] sm:$0xff]
    %v1846 = vld [vmem:[%s4 + $0x30] sm:$0xff]
    %v1847 = vld [vmem:[%s4 + $0x38] sm:$0xff]
    %v1848 = vld [vmem:[%s4 + $0x40] sm:$0xff]
    %v1849 = vld [vmem:[%s4 + $0x48] sm:$0xff]
    %v1850 = vld [vmem:[%s4 + $0x50] sm:$0xff]
    %v1851 = vld [vmem:[%s4 + $0x58] sm:$0xff]
    %v1852 = vld [vmem:[%s4 + $0x60] sm:$0xff]
    %v1853 = vld [vmem:[%s4 + $0x68] sm:$0xff]
    %v1854 = vld [vmem:[%s4 + $0x70] sm:$0xff]
    %v1855 = vld [vmem:[%s4 + $0x78] sm:$0xff]
    %v1856 = vld [vmem:[%s5] sm:$0x1]
    %v1858 = vlaneseq
    %v1859 = vshrl.u32 %v1858, 7
    %v1860 = vsub.s32 0, %v1859
    %v1861 = vrot.slane %v1856, %v1860
    %1863 = vmatprep.subr.mxu0 0.0
    %1864 = vmatpush1.msra.mxu0 %v1840
    %1865 = vmatprep.subr.mxu0 0.0
    %1866 = vmatpush1.msra.mxu0 %v1841
    %1867 = vmatprep.subr.mxu0 0.0
    %1868 = vmatpush1.msra.mxu0 %v1842
    %1869 = vmatprep.subr.mxu0 0.0
    %1870 = vmatpush1.msra.mxu0 %v1843
    %1871 = vmatprep.subr.mxu0 0.0
    %1872 = vmatpush1.msra.mxu0 %v1844
    %1873 = vmatprep.subr.mxu0 0.0
    %1874 = vmatpush1.msra.mxu0 %v1845
    %1875 = vmatprep.subr.mxu0 0.0
    %1876 = vmatpush1.msra.mxu0 %v1846
    %1877 = vmatprep.subr.mxu0 0.0
    %1878 = vmatpush1.msra.mxu0 %v1847
    %1879 = vmatprep.subr.mxu0 0.0
    %1880 = vmatpush1.msra.mxu0 %v1848
    %1881 = vmatprep.subr.mxu0 0.0
    %1882 = vmatpush1.msra.mxu0 %v1849
    %1883 = vmatprep.subr.mxu0 0.0
    %1884 = vmatpush1.msra.mxu0 %v1850
    %1885 = vmatprep.subr.mxu0 0.0
    %1886 = vmatpush1.msra.mxu0 %v1851
    %1887 = vmatprep.subr.mxu0 0.0
    %1888 = vmatpush1.msra.mxu0 %v1852
    %1889 = vmatprep.subr.mxu0 0.0
    %1890 = vmatpush1.msra.mxu0 %v1853
    %1891 = vmatprep.subr.mxu0 0.0
    %1892 = vmatpush1.msra.mxu0 %v1854
    %1893 = vmatprep.subr.mxu0 0.0
    %1894 = vmatpush1.msra.mxu0 %v1855
    %1895 = vmatprep.subr.mxu0 0.0
    %1896 = vmatpush1.msra.mxu0 0.0
    %1897 = vmatprep.subr.mxu0 0.0
    %1898 = vmatpush1.msra.mxu0 0.0
    %1899 = vmatprep.subr.mxu0 0.0
    %1900 = vmatpush1.msra.mxu0 0.0
    %1901 = vmatprep.subr.mxu0 0.0
    %1902 = vmatpush1.msra.mxu0 0.0
    %1903 = vmatprep.subr.mxu0 0.0
    %1904 = vmatpush1.msra.mxu0 0.0
    %1905 = vmatprep.subr.mxu0 0.0
    %1906 = vmatpush1.msra.mxu0 0.0
    %1907 = vmatprep.subr.mxu0 0.0
    %1908 = vmatpush1.msra.mxu0 0.0
    %1909 = vmatprep.subr.mxu0 0.0
    %1910 = vmatpush1.msra.mxu0 0.0
    %1911 = vmatprep.subr.mxu0 0.0
    %1912 = vmatpush1.msra.mxu0 0.0
    %1913 = vmatprep.subr.mxu0 0.0
    %1914 = vmatpush1.msra.mxu0 0.0
    %1915 = vmatprep.subr.mxu0 0.0
    %1916 = vmatpush1.msra.mxu0 0.0
    %1917 = vmatprep.subr.mxu0 0.0
    %1918 = vmatpush1.msra.mxu0 0.0
    %1919 = vmatprep.subr.mxu0 0.0
    %1920 = vmatpush1.msra.mxu0 0.0
    %1921 = vmatprep.subr.mxu0 0.0
    %1922 = vmatpush1.msra.mxu0 0.0
    %1923 = vmatprep.subr.mxu0 0.0
    %1924 = vmatpush1.msra.mxu0 0.0
    %1925 = vmatprep.subr.mxu0 0.0
    %1926 = vmatpush1.msra.mxu0 0.0
    %1927 = vmatprep.mubr.f32.mxu0 0.0
    %1928 = vmatmul.mubr.f32.gmra.mrb[0].mxu0 %v1838
    %v1929 = vpop.f32.mrb[0].mxu0
    %v1930 = vadd.f32 %v1861, %v1929
    %v1931 = vpop.f32.mrb[0].mxu0
    %1932 = vmatprep.mubr.f32.mxu0 0.0
    %1933 = vmatmul.mubr.f32.gmra.mrb[0].mxu0 %v1839
    %v1934 = vpop.f32.mrb[0].mxu0
    %v1935 = vadd.f32 %v1861, %v1934
    %v1936 = vpop.f32.mrb[0].mxu0
    %1937 = vdwg.mxu0
    %v1938 = vtanh.pop %v1930
    %v1939 = vtanh.pop %v1935
    %1940 = vst [vmem:[%s25] sm:$0xff] %v1938
    %1941 = vst [vmem:[%s25 + $0x8] sm:$0xff] %v1939
    %v1942 = vld [vmem:[#allocation6] sm:$0xff]
    %v1943 = vld [vmem:[#allocation6 + $0x8] sm:$0xff]
    %v1944 = vld [vmem:[#allocation6 + $0x10] sm:$0xff]
    %v1945 = vld [vmem:[#allocation6 + $0x18] sm:$0xff]
    %v1946 = vld [vmem:[#allocation6 + $0x20] sm:$0xff]
    %v1947 = vld [vmem:[#allocation6 + $0x28] sm:$0xff]
    %v1948 = vld [vmem:[#allocation6 + $0x30] sm:$0xff]
    %v1949 = vld [vmem:[#allocation6 + $0x38] sm:$0xff]
    %v1950 = vld [vmem:[#allocation6 + $0x40] sm:$0xff]
    %v1951 = vld [vmem:[#allocation6 + $0x48] sm:$0xff]
    %v1952 = vld [vmem:[#allocation6 + $0x50] sm:$0xff]
    %v1953 = vld [vmem:[#allocation6 + $0x58] sm:$0xff]
    %v1954 = vld [vmem:[#allocation6 + $0x60] sm:$0xff]
    %v1955 = vld [vmem:[#allocation6 + $0x68] sm:$0xff]
    %v1956 = vld [vmem:[#allocation6 + $0x70] sm:$0xff]
    %v1957 = vld [vmem:[#allocation6 + $0x78] sm:$0xff]
    %v1958 = vld [vmem:[#allocation6 + $0x80] sm:$0xff]
    %v1959 = vld [vmem:[#allocation6 + $0x88] sm:$0xff]
    %v1960 = vld [vmem:[#allocation6 + $0x90] sm:$0xff]
    %v1961 = vld [vmem:[#allocation6 + $0x98] sm:$0xff]
    %v1962 = vld [vmem:[#allocation6 + $0xa0] sm:$0xff]
    %v1963 = vld [vmem:[#allocation6 + $0xa8] sm:$0xff]
    %v1964 = vld [vmem:[#allocation6 + $0xb0] sm:$0xff]
    %v1965 = vld [vmem:[#allocation6 + $0xb8] sm:$0xff]
    %v1966 = vld [vmem:[#allocation6 + $0xc0] sm:$0xff]
    %v1967 = vld [vmem:[#allocation6 + $0xc8] sm:$0xff]
    %v1968 = vld [vmem:[#allocation6 + $0xd0] sm:$0xff]
    %v1969 = vld [vmem:[#allocation6 + $0xd8] sm:$0xff]
    %v1970 = vld [vmem:[#allocation6 + $0xe0] sm:$0xff]
    %v1971 = vld [vmem:[#allocation6 + $0xe8] sm:$0xff]
    %v1972 = vld [vmem:[#allocation6 + $0xf0] sm:$0xff]
    %v1973 = vld [vmem:[#allocation6 + $0xf8] sm:$0xff]
    %v1974 = vld [vmem:[#allocation6 + $0x100] sm:$0xff]
    %v1975 = vld [vmem:[#allocation6 + $0x108] sm:$0xff]
    %v1976 = vld [vmem:[#allocation6 + $0x110] sm:$0xff]
    %v1977 = vld [vmem:[#allocation6 + $0x118] sm:$0xff]
    %v1978 = vld [vmem:[#allocation6 + $0x120] sm:$0xff]
    %v1979 = vld [vmem:[#allocation6 + $0x128] sm:$0xff]
    %v1980 = vld [vmem:[#allocation6 + $0x130] sm:$0xff]
    %v1981 = vld [vmem:[#allocation6 + $0x138] sm:$0xff]
    %v1982 = vld [vmem:[#allocation6 + $0x140] sm:$0xff]
    %v1983 = vld [vmem:[#allocation6 + $0x148] sm:$0xff]
    %v1984 = vld [vmem:[#allocation6 + $0x150] sm:$0xff]
    %v1985 = vld [vmem:[#allocation6 + $0x158] sm:$0xff]
    %v1986 = vld [vmem:[#allocation6 + $0x160] sm:$0xff]
    %v1987 = vld [vmem:[#allocation6 + $0x168] sm:$0xff]
    %v1988 = vld [vmem:[#allocation6 + $0x170] sm:$0xff]
    %v1989 = vld [vmem:[#allocation6 + $0x178] sm:$0xff]
    %v1990 = vld [vmem:[#allocation6 + $0x180] sm:$0xff]
    %v1991 = vld [vmem:[#allocation6 + $0x188] sm:$0xff]
    %v1992 = vld [vmem:[#allocation6 + $0x190] sm:$0xff]
    %v1993 = vld [vmem:[#allocation6 + $0x198] sm:$0xff]
    %v1994 = vld [vmem:[#allocation6 + $0x1a0] sm:$0xff]
    %v1995 = vld [vmem:[#allocation6 + $0x1a8] sm:$0xff]
    %v1996 = vld [vmem:[#allocation6 + $0x1b0] sm:$0xff]
    %v1997 = vld [vmem:[#allocation6 + $0x1b8] sm:$0xff]
    %v1998 = vld [vmem:[#allocation6 + $0x1c0] sm:$0xff]
    %v1999 = vld [vmem:[#allocation6 + $0x1c8] sm:$0xff]
    %v2000 = vld [vmem:[#allocation6 + $0x1d0] sm:$0xff]
    %v2001 = vld [vmem:[#allocation6 + $0x1d8] sm:$0xff]
    %v2002 = vld [vmem:[#allocation6 + $0x1e0] sm:$0xff]
    %v2003 = vld [vmem:[#allocation6 + $0x1e8] sm:$0xff]
    %v2004 = vld [vmem:[#allocation6 + $0x1f0] sm:$0xff]
    %v2005 = vld [vmem:[#allocation6 + $0x1f8] sm:$0xff]
    %v2006 = vld [vmem:[%s13] sm:$0xf]
    %v2008 = vlaneseq
    %v2009 = vshrl.u32 %v2008, 7
    %v2010 = vsub.s32 0, %v2009
    %v2011 = vrot.slane %v2006, %v2010
    %v2012 = vlaneseq
    %v2013 = vshrl.u32 %v2012, 7
    %v2014 = vsub.s32 1, %v2013
    %v2015 = vrot.slane %v2006, %v2014
    %v2016 = vlaneseq
    %v2017 = vshrl.u32 %v2016, 7
    %v2018 = vsub.s32 2, %v2017
    %v2019 = vrot.slane %v2006, %v2018
    %v2020 = vlaneseq
    %v2021 = vshrl.u32 %v2020, 7
    %v2022 = vsub.s32 3, %v2021
    %v2023 = vrot.slane %v2006, %v2022
    %2028 = vmatprep.subr.mxu0 %v1943
    %2029 = vmatpush1.msra.mxu0 %v1942
    %2030 = vmatprep.subr.mxu0 %v1947
    %2031 = vmatpush1.msra.mxu0 %v1946
    %2032 = vmatprep.subr.mxu0 %v1951
    %2033 = vmatpush1.msra.mxu0 %v1950
    %2034 = vmatprep.subr.mxu0 %v1955
    %2035 = vmatpush1.msra.mxu0 %v1954
    %2036 = vmatprep.subr.mxu0 %v1959
    %2037 = vmatpush1.msra.mxu0 %v1958
    %2038 = vmatprep.subr.mxu0 %v1963
    %2039 = vmatpush1.msra.mxu0 %v1962
    %2040 = vmatprep.subr.mxu0 %v1967
    %2041 = vmatpush1.msra.mxu0 %v1966
    %2042 = vmatprep.subr.mxu0 %v1971
    %2043 = vmatpush1.msra.mxu0 %v1970
    %2044 = vmatprep.subr.mxu0 %v1975
    %2045 = vmatpush1.msra.mxu0 %v1974
    %2046 = vmatprep.subr.mxu0 %v1979
    %2047 = vmatpush1.msra.mxu0 %v1978
    %2048 = vmatprep.subr.mxu0 %v1983
    %2049 = vmatpush1.msra.mxu0 %v1982
    %2050 = vmatprep.subr.mxu0 %v1987
    %2051 = vmatpush1.msra.mxu0 %v1986
    %2052 = vmatprep.subr.mxu0 %v1991
    %2053 = vmatpush1.msra.mxu0 %v1990
    %2054 = vmatprep.subr.mxu0 %v1995
    %2055 = vmatpush1.msra.mxu0 %v1994
    %2056 = vmatprep.subr.mxu0 %v1999
    %2057 = vmatpush1.msra.mxu0 %v1998
    %2058 = vmatprep.subr.mxu0 %v2003
    %2059 = vmatpush1.msra.mxu0 %v2002
    %2060 = vmatprep.subr.mxu0 0.0
    %2061 = vmatpush1.msra.mxu0 0.0
    %2062 = vmatprep.subr.mxu0 0.0
    %2063 = vmatpush1.msra.mxu0 0.0
    %2064 = vmatprep.subr.mxu0 0.0
    %2065 = vmatpush1.msra.mxu0 0.0
    %2066 = vmatprep.subr.mxu0 0.0
    %2067 = vmatpush1.msra.mxu0 0.0
    %2068 = vmatprep.subr.mxu0 0.0
    %2069 = vmatpush1.msra.mxu0 0.0
    %2070 = vmatprep.subr.mxu0 0.0
    %2071 = vmatpush1.msra.mxu0 0.0
    %2072 = vmatprep.subr.mxu0 0.0
    %2073 = vmatpush1.msra.mxu0 0.0
    %2074 = vmatprep.subr.mxu0 0.0
    %2075 = vmatpush1.msra.mxu0 0.0
    %2076 = vmatprep.subr.mxu0 0.0
    %2077 = vmatpush1.msra.mxu0 0.0
    %2078 = vmatprep.subr.mxu0 0.0
    %2079 = vmatpush1.msra.mxu0 0.0
    %2080 = vmatprep.subr.mxu0 0.0
    %2081 = vmatpush1.msra.mxu0 0.0
    %2082 = vmatprep.subr.mxu0 0.0
    %2083 = vmatpush1.msra.mxu0 0.0
    %2084 = vmatprep.subr.mxu0 0.0
    %2085 = vmatpush1.msra.mxu0 0.0
    %2086 = vmatprep.subr.mxu0 0.0
    %2087 = vmatpush1.msra.mxu0 0.0
    %2088 = vmatprep.subr.mxu0 0.0
    %2089 = vmatpush1.msra.mxu0 0.0
    %2090 = vmatprep.subr.mxu0 0.0
    %2091 = vmatpush1.msra.mxu0 0.0
    %2092 = vmatprep.mubr.f32.mxu0 0.0
    %2093 = vmatmul.mubr.f32.gmra.mrb[0].mxu0 %v1938
    %v2094 = vpop.f32.mrb[0].mxu0
    %v2095 = vadd.f32 %v2011, %v2094
    %v2096 = vpop.f32.mrb[0].mxu0
    %v2097 = vadd.f32 %v2015, %v2096
    %2098 = vmatprep.mubr.f32.mxu0 0.0
    %2099 = vmatmul.mubr.f32.gmra.mrb[0].mxu0 %v1939
    %v2100 = vpop.f32.mrb[0].mxu0
    %v2101 = vadd.f32 %v2011, %v2100
    %v2102 = vpop.f32.mrb[0].mxu0
    %v2103 = vadd.f32 %v2015, %v2102
    %2104 = vdwg.mxu0
    %2105 = vmatprep.subr.mxu0 %v1945
    %2106 = vmatpush1.msra.mxu0 %v1944
    %2107 = vmatprep.subr.mxu0 %v1949
    %2108 = vmatpush1.msra.mxu0 %v1948
    %2109 = vmatprep.subr.mxu0 %v1953
    %2110 = vmatpush1.msra.mxu0 %v1952
    %2111 = vmatprep.subr.mxu0 %v1957
    %2112 = vmatpush1.msra.mxu0 %v1956
    %2113 = vmatprep.subr.mxu0 %v1961
    %2114 = vmatpush1.msra.mxu0 %v1960
    %2115 = vmatprep.subr.mxu0 %v1965
    %2116 = vmatpush1.msra.mxu0 %v1964
    %2117 = vmatprep.subr.mxu0 %v1969
    %2118 = vmatpush1.msra.mxu0 %v1968
    %2119 = vmatprep.subr.mxu0 %v1973
    %2120 = vmatpush1.msra.mxu0 %v1972
    %2121 = vmatprep.subr.mxu0 %v1977
    %2122 = vmatpush1.msra.mxu0 %v1976
    %2123 = vmatprep.subr.mxu0 %v1981
    %2124 = vmatpush1.msra.mxu0 %v1980
    %2125 = vmatprep.subr.mxu0 %v1985
    %2126 = vmatpush1.msra.mxu0 %v1984
    %2127 = vmatprep.subr.mxu0 %v1989
    %2128 = vmatpush1.msra.mxu0 %v1988
    %2129 = vmatprep.subr.mxu0 %v1993
    %2130 = vmatpush1.msra.mxu0 %v1992
    %2131 = vmatprep.subr.mxu0 %v1997
    %2132 = vmatpush1.msra.mxu0 %v1996
    %2133 = vmatprep.subr.mxu0 %v2001
    %2134 = vmatpush1.msra.mxu0 %v2000
    %2135 = vmatprep.subr.mxu0 %v2005
    %2136 = vmatpush1.msra.mxu0 %v2004
    %2137 = vmatprep.subr.mxu0 0.0
    %2138 = vmatpush1.msra.mxu0 0.0
    %2139 = vmatprep.subr.mxu0 0.0
    %2140 = vmatpush1.msra.mxu0 0.0
    %2141 = vmatprep.subr.mxu0 0.0
    %2142 = vmatpush1.msra.mxu0 0.0
    %2143 = vmatprep.subr.mxu0 0.0
    %2144 = vmatpush1.msra.mxu0 0.0
    %2145 = vmatprep.subr.mxu0 0.0
    %2146 = vmatpush1.msra.mxu0 0.0
    %2147 = vmatprep.subr.mxu0 0.0
    %2148 = vmatpush1.msra.mxu0 0.0
    %2149 = vmatprep.subr.mxu0 0.0
    %2150 = vmatpush1.msra.mxu0 0.0
    %2151 = vmatprep.subr.mxu0 0.0
    %2152 = vmatpush1.msra.mxu0 0.0
    %2153 = vmatprep.subr.mxu0 0.0
    %2154 = vmatpush1.msra.mxu0 0.0
    %2155 = vmatprep.subr.mxu0 0.0
    %2156 = vmatpush1.msra.mxu0 0.0
    %2157 = vmatprep.subr.mxu0 0.0
    %2158 = vmatpush1.msra.mxu0 0.0
    %2159 = vmatprep.subr.mxu0 0.0
    %2160 = vmatpush1.msra.mxu0 0.0
    %2161 = vmatprep.subr.mxu0 0.0
    %2162 = vmatpush1.msra.mxu0 0.0
    %2163 = vmatprep.subr.mxu0 0.0
    %2164 = vmatpush1.msra.mxu0 0.0
    %2165 = vmatprep.subr.mxu0 0.0
    %2166 = vmatpush1.msra.mxu0 0.0
    %2167 = vmatprep.subr.mxu0 0.0
    %2168 = vmatpush1.msra.mxu0 0.0
    %2169 = vmatprep.mubr.f32.mxu0 0.0
    %2170 = vmatmul.mubr.f32.gmra.mrb[0].mxu0 %v1938
    %v2171 = vpop.f32.mrb[0].mxu0
    %v2172 = vadd.f32 %v2019, %v2171
    %v2173 = vpop.f32.mrb[0].mxu0
    %v2174 = vadd.f32 %v2023, %v2173
    %2175 = vmatprep.mubr.f32.mxu0 0.0
    %2176 = vmatmul.mubr.f32.gmra.mrb[0].mxu0 %v1939
    %v2177 = vpop.f32.mrb[0].mxu0
    %v2178 = vadd.f32 %v2019, %v2177
    %v2179 = vpop.f32.mrb[0].mxu0
    %v2180 = vadd.f32 %v2023, %v2179
    %2181 = vdwg.mxu0
    %v2182 = vmul.f32 %v2095, 0.5
    %v2183 = vmul.f32 %v2097, 0.5
    %v2184 = vmul.f32 %v2172, 0.5
    %v2185 = vmul.f32 %v2174, 0.5
    %v2186 = vmul.f32 %v2101, 0.5
    %v2187 = vmul.f32 %v2103, 0.5
    %v2188 = vmul.f32 %v2178, 0.5
    %v2189 = vmul.f32 %v2180, 0.5
    %v2190 = vmul.f32 %v2095, 0.044715
    %v2191 = vmul.f32 %v2097, 0.044715
    %v2192 = vmul.f32 %v2172, 0.044715
    %v2193 = vmul.f32 %v2174, 0.044715
    %v2194 = vmul.f32 %v2101, 0.044715
    %v2195 = vmul.f32 %v2103, 0.044715
    %v2196 = vmul.f32 %v2178, 0.044715
    %v2197 = vmul.f32 %v2180, 0.044715
    %v2198 = vmul.f32 %v2190, %v2095
    %v2199 = vmul.f32 %v2191, %v2097
    %v2200 = vmul.f32 %v2192, %v2172
    %v2201 = vmul.f32 %v2193, %v2174
    %v2202 = vmul.f32 %v2194, %v2101
    %v2203 = vmul.f32 %v2195, %v2103
    %v2204 = vmul.f32 %v2196, %v2178
    %v2205 = vmul.f32 %v2197, %v2180
    %v2206 = vmul.f32 %v2198, %v2095
    %v2207 = vmul.f32 %v2199, %v2097
    %v2208 = vmul.f32 %v2200, %v2172
    %v2209 = vmul.f32 %v2201, %v2174
    %v2210 = vmul.f32 %v2202, %v2101
    %v2211 = vmul.f32 %v2203, %v2103
    %v2212 = vmul.f32 %v2204, %v2178
    %v2213 = vmul.f32 %v2205, %v2180
    %v2214 = vadd.f32 %v2095, %v2206
    %v2215 = vadd.f32 %v2097, %v2207
    %v2216 = vadd.f32 %v2172, %v2208
    %v2217 = vadd.f32 %v2174, %v2209
    %v2218 = vadd.f32 %v2101, %v2210
    %v2219 = vadd.f32 %v2103, %v2211
    %v2220 = vadd.f32 %v2178, %v2212
    %v2221 = vadd.f32 %v2180, %v2213
    %v2222 = vmul.f32 %v2214, 0.7978846
    %v2223 = vmul.f32 %v2215, 0.7978846
    %v2224 = vmul.f32 %v2216, 0.7978846
    %v2225 = vmul.f32 %v2217, 0.7978846
    %v2226 = vmul.f32 %v2218, 0.7978846
    %v2227 = vmul.f32 %v2219, 0.7978846
    %v2228 = vmul.f32 %v2220, 0.7978846
    %v2229 = vmul.f32 %v2221, 0.7978846
    %v2230 = vtanh.pop %v2222
    %v2231 = vtanh.pop %v2223
    %v2232 = vtanh.pop %v2224
    %v2233 = vtanh.pop %v2225
    %v2234 = vtanh.pop %v2226
    %v2235 = vtanh.pop %v2227
    %v2236 = vtanh.pop %v2228
    %v2237 = vtanh.pop %v2229
    %v2238 = vadd.f32 %v2230, 1.0
    %v2239 = vadd.f32 %v2231, 1.0
    %v2240 = vadd.f32 %v2232, 1.0
    %v2241 = vadd.f32 %v2233, 1.0
    %v2242 = vadd.f32 %v2234, 1.0
    %v2243 = vadd.f32 %v2235, 1.0
    %v2244 = vadd.f32 %v2236, 1.0
    %v2245 = vadd.f32 %v2237, 1.0
    %v2246 = vmul.f32 %v2182, %v2238
    %v2247 = vmul.f32 %v2183, %v2239
    %v2248 = vmul.f32 %v2184, %v2240
    %v2249 = vmul.f32 %v2185, %v2241
    %v2250 = vmul.f32 %v2186, %v2242
    %v2251 = vmul.f32 %v2187, %v2243
    %v2252 = vmul.f32 %v2188, %v2244
    %v2253 = vmul.f32 %v2189, %v2245
    %v2254 = vld [vmem:[#allocation7] sm:$0xff]
    %v2255 = vld [vmem:[#allocation7 + $0x8] sm:$0xff]
    %v2256 = vld [vmem:[#allocation7 + $0x10] sm:$0xff]
    %v2257 = vld [vmem:[#allocation7 + $0x18] sm:$0xff]
    %v2258 = vld [vmem:[#allocation7 + $0x20] sm:$0xff]
    %v2259 = vld [vmem:[#allocation7 + $0x28] sm:$0xff]
    %v2260 = vld [vmem:[#allocation7 + $0x30] sm:$0xff]
    %v2261 = vld [vmem:[#allocation7 + $0x38] sm:$0xff]
    %v2262 = vld [vmem:[#allocation7 + $0x40] sm:$0xff]
    %v2263 = vld [vmem:[#allocation7 + $0x48] sm:$0xff]
    %v2264 = vld [vmem:[#allocation7 + $0x50] sm:$0xff]
    %v2265 = vld [vmem:[#allocation7 + $0x58] sm:$0xff]
    %v2266 = vld [vmem:[#allocation7 + $0x60] sm:$0xff]
    %v2267 = vld [vmem:[#allocation7 + $0x68] sm:$0xff]
    %v2268 = vld [vmem:[#allocation7 + $0x70] sm:$0xff]
    %v2269 = vld [vmem:[#allocation7 + $0x78] sm:$0xff]
    %v2270 = vld [vmem:[#allocation7 + $0x80] sm:$0xff]
    %v2271 = vld [vmem:[#allocation7 + $0x88] sm:$0xff]
    %v2272 = vld [vmem:[#allocation7 + $0x90] sm:$0xff]
    %v2273 = vld [vmem:[#allocation7 + $0x98] sm:$0xff]
    %v2274 = vld [vmem:[#allocation7 + $0xa0] sm:$0xff]
    %v2275 = vld [vmem:[#allocation7 + $0xa8] sm:$0xff]
    %v2276 = vld [vmem:[#allocation7 + $0xb0] sm:$0xff]
    %v2277 = vld [vmem:[#allocation7 + $0xb8] sm:$0xff]
    %v2278 = vld [vmem:[#allocation7 + $0xc0] sm:$0xff]
    %v2279 = vld [vmem:[#allocation7 + $0xc8] sm:$0xff]
    %v2280 = vld [vmem:[#allocation7 + $0xd0] sm:$0xff]
    %v2281 = vld [vmem:[#allocation7 + $0xd8] sm:$0xff]
    %v2282 = vld [vmem:[#allocation7 + $0xe0] sm:$0xff]
    %v2283 = vld [vmem:[#allocation7 + $0xe8] sm:$0xff]
    %v2284 = vld [vmem:[#allocation7 + $0xf0] sm:$0xff]
    %v2285 = vld [vmem:[#allocation7 + $0xf8] sm:$0xff]
    %v2286 = vld [vmem:[#allocation7 + $0x100] sm:$0xff]
    %v2287 = vld [vmem:[#allocation7 + $0x108] sm:$0xff]
    %v2288 = vld [vmem:[#allocation7 + $0x110] sm:$0xff]
    %v2289 = vld [vmem:[#allocation7 + $0x118] sm:$0xff]
    %v2290 = vld [vmem:[#allocation7 + $0x120] sm:$0xff]
    %v2291 = vld [vmem:[#allocation7 + $0x128] sm:$0xff]
    %v2292 = vld [vmem:[#allocation7 + $0x130] sm:$0xff]
    %v2293 = vld [vmem:[#allocation7 + $0x138] sm:$0xff]
    %v2294 = vld [vmem:[#allocation7 + $0x140] sm:$0xff]
    %v2295 = vld [vmem:[#allocation7 + $0x148] sm:$0xff]
    %v2296 = vld [vmem:[#allocation7 + $0x150] sm:$0xff]
    %v2297 = vld [vmem:[#allocation7 + $0x158] sm:$0xff]
    %v2298 = vld [vmem:[#allocation7 + $0x160] sm:$0xff]
    %v2299 = vld [vmem:[#allocation7 + $0x168] sm:$0xff]
    %v2300 = vld [vmem:[#allocation7 + $0x170] sm:$0xff]
    %v2301 = vld [vmem:[#allocation7 + $0x178] sm:$0xff]
    %v2302 = vld [vmem:[#allocation7 + $0x180] sm:$0xff]
    %v2303 = vld [vmem:[#allocation7 + $0x188] sm:$0xff]
    %v2304 = vld [vmem:[#allocation7 + $0x190] sm:$0xff]
    %v2305 = vld [vmem:[#allocation7 + $0x198] sm:$0xff]
    %v2306 = vld [vmem:[#allocation7 + $0x1a0] sm:$0xff]
    %v2307 = vld [vmem:[#allocation7 + $0x1a8] sm:$0xff]
    %v2308 = vld [vmem:[#allocation7 + $0x1b0] sm:$0xff]
    %v2309 = vld [vmem:[#allocation7 + $0x1b8] sm:$0xff]
    %v2310 = vld [vmem:[#allocation7 + $0x1c0] sm:$0xff]
    %v2311 = vld [vmem:[#allocation7 + $0x1c8] sm:$0xff]
    %v2312 = vld [vmem:[#allocation7 + $0x1d0] sm:$0xff]
    %v2313 = vld [vmem:[#allocation7 + $0x1d8] sm:$0xff]
    %v2314 = vld [vmem:[#allocation7 + $0x1e0] sm:$0xff]
    %v2315 = vld [vmem:[#allocation7 + $0x1e8] sm:$0xff]
    %v2316 = vld [vmem:[#allocation7 + $0x1f0] sm:$0xff]
    %v2317 = vld [vmem:[#allocation7 + $0x1f8] sm:$0xff]
    %v2318 = vld [vmem:[%s15] sm:$0x1]
    %v2320 = vlaneseq
    %v2321 = vshrl.u32 %v2320, 7
    %v2322 = vsub.s32 0, %v2321
    %v2323 = vrot.slane %v2318, %v2322
    %2325 = vmatprep.subr.mxu0 0.0
    %2326 = vmatpush1.msra.mxu0 %v2254
    %2327 = vmatprep.subr.mxu0 0.0
    %2328 = vmatpush1.msra.mxu0 %v2255
    %2329 = vmatprep.subr.mxu0 0.0
    %2330 = vmatpush1.msra.mxu0 %v2256
    %2331 = vmatprep.subr.mxu0 0.0
    %2332 = vmatpush1.msra.mxu0 %v2257
    %2333 = vmatprep.subr.mxu0 0.0
    %2334 = vmatpush1.msra.mxu0 %v2258
    %2335 = vmatprep.subr.mxu0 0.0
    %2336 = vmatpush1.msra.mxu0 %v2259
    %2337 = vmatprep.subr.mxu0 0.0
    %2338 = vmatpush1.msra.mxu0 %v2260
    %2339 = vmatprep.subr.mxu0 0.0
    %2340 = vmatpush1.msra.mxu0 %v2261
    %2341 = vmatprep.subr.mxu0 0.0
    %2342 = vmatpush1.msra.mxu0 %v2262
    %2343 = vmatprep.subr.mxu0 0.0
    %2344 = vmatpush1.msra.mxu0 %v2263
    %2345 = vmatprep.subr.mxu0 0.0
    %2346 = vmatpush1.msra.mxu0 %v2264
    %2347 = vmatprep.subr.mxu0 0.0
    %2348 = vmatpush1.msra.mxu0 %v2265
    %2349 = vmatprep.subr.mxu0 0.0
    %2350 = vmatpush1.msra.mxu0 %v2266
    %2351 = vmatprep.subr.mxu0 0.0
    %2352 = vmatpush1.msra.mxu0 %v2267
    %2353 = vmatprep.subr.mxu0 0.0
    %2354 = vmatpush1.msra.mxu0 %v2268
    %2355 = vmatprep.subr.mxu0 0.0
    %2356 = vmatpush1.msra.mxu0 %v2269
    %2357 = vmatprep.subr.mxu0 0.0
    %2358 = vmatpush1.msra.mxu0 %v2270
    %2359 = vmatprep.subr.mxu0 0.0
    %2360 = vmatpush1.msra.mxu0 %v2271
    %2361 = vmatprep.subr.mxu0 0.0
    %2362 = vmatpush1.msra.mxu0 %v2272
    %2363 = vmatprep.subr.mxu0 0.0
    %2364 = vmatpush1.msra.mxu0 %v2273
    %2365 = vmatprep.subr.mxu0 0.0
    %2366 = vmatpush1.msra.mxu0 %v2274
    %2367 = vmatprep.subr.mxu0 0.0
    %2368 = vmatpush1.msra.mxu0 %v2275
    %2369 = vmatprep.subr.mxu0 0.0
    %2370 = vmatpush1.msra.mxu0 %v2276
    %2371 = vmatprep.subr.mxu0 0.0
    %2372 = vmatpush1.msra.mxu0 %v2277
    %2373 = vmatprep.subr.mxu0 0.0
    %2374 = vmatpush1.msra.mxu0 %v2278
    %2375 = vmatprep.subr.mxu0 0.0
    %2376 = vmatpush1.msra.mxu0 %v2279
    %2377 = vmatprep.subr.mxu0 0.0
    %2378 = vmatpush1.msra.mxu0 %v2280
    %2379 = vmatprep.subr.mxu0 0.0
    %2380 = vmatpush1.msra.mxu0 %v2281
    %2381 = vmatprep.subr.mxu0 0.0
    %2382 = vmatpush1.msra.mxu0 %v2282
    %2383 = vmatprep.subr.mxu0 0.0
    %2384 = vmatpush1.msra.mxu0 %v2283
    %2385 = vmatprep.subr.mxu0 0.0
    %2386 = vmatpush1.msra.mxu0 %v2284
    %2387 = vmatprep.subr.mxu0 0.0
    %2388 = vmatpush1.msra.mxu0 %v2285
    %2389 = vmatprep.mubr.f32.mxu0 %v2247
    %2390 = vmatmul.mubr.f32.gmra.mrb[0].mxu0 %v2246
    %v2391 = vpop.f32.mrb[0].mxu0
    %v2392 = vadd.f32 %v2323, %v2391
    %v2393 = vpop.f32.mrb[0].mxu0
    %2394 = vmatprep.mubr.f32.mxu0 %v2251
    %2395 = vmatmul.mubr.f32.gmra.mrb[0].mxu0 %v2250
    %v2396 = vpop.f32.mrb[0].mxu0
    %v2397 = vadd.f32 %v2323, %v2396
    %v2398 = vpop.f32.mrb[0].mxu0
    %2399 = vdwg.mxu0
    %2400 = vmatprep.subr.mxu0 0.0
    %2401 = vmatpush1.msra.mxu0 %v2286
    %2402 = vmatprep.subr.mxu0 0.0
    %2403 = vmatpush1.msra.mxu0 %v2287
    %2404 = vmatprep.subr.mxu0 0.0
    %2405 = vmatpush1.msra.mxu0 %v2288
    %2406 = vmatprep.subr.mxu0 0.0
    %2407 = vmatpush1.msra.mxu0 %v2289
    %2408 = vmatprep.subr.mxu0 0.0
    %2409 = vmatpush1.msra.mxu0 %v2290
    %2410 = vmatprep.subr.mxu0 0.0
    %2411 = vmatpush1.msra.mxu0 %v2291
    %2412 = vmatprep.subr.mxu0 0.0
    %2413 = vmatpush1.msra.mxu0 %v2292
    %2414 = vmatprep.subr.mxu0 0.0
    %2415 = vmatpush1.msra.mxu0 %v2293
    %2416 = vmatprep.subr.mxu0 0.0
    %2417 = vmatpush1.msra.mxu0 %v2294
    %2418 = vmatprep.subr.mxu0 0.0
    %2419 = vmatpush1.msra.mxu0 %v2295
    %2420 = vmatprep.subr.mxu0 0.0
    %2421 = vmatpush1.msra.mxu0 %v2296
    %2422 = vmatprep.subr.mxu0 0.0
    %2423 = vmatpush1.msra.mxu0 %v2297
    %2424 = vmatprep.subr.mxu0 0.0
    %2425 = vmatpush1.msra.mxu0 %v2298
    %2426 = vmatprep.subr.mxu0 0.0
    %2427 = vmatpush1.msra.mxu0 %v2299
    %2428 = vmatprep.subr.mxu0 0.0
    %2429 = vmatpush1.msra.mxu0 %v2300
    %2430 = vmatprep.subr.mxu0 0.0
    %2431 = vmatpush1.msra.mxu0 %v2301
    %2432 = vmatprep.subr.mxu0 0.0
    %2433 = vmatpush1.msra.mxu0 %v2302
    %2434 = vmatprep.subr.mxu0 0.0
    %2435 = vmatpush1.msra.mxu0 %v2303
    %2436 = vmatprep.subr.mxu0 0.0
    %2437 = vmatpush1.msra.mxu0 %v2304
    %2438 = vmatprep.subr.mxu0 0.0
    %2439 = vmatpush1.msra.mxu0 %v2305
    %2440 = vmatprep.subr.mxu0 0.0
    %2441 = vmatpush1.msra.mxu0 %v2306
    %2442 = vmatprep.subr.mxu0 0.0
    %2443 = vmatpush1.msra.mxu0 %v2307
    %2444 = vmatprep.subr.mxu0 0.0
    %2445 = vmatpush1.msra.mxu0 %v2308
    %2446 = vmatprep.subr.mxu0 0.0
    %2447 = vmatpush1.msra.mxu0 %v2309
    %2448 = vmatprep.subr.mxu0 0.0
    %2449 = vmatpush1.msra.mxu0 %v2310
    %2450 = vmatprep.subr.mxu0 0.0
    %2451 = vmatpush1.msra.mxu0 %v2311
    %2452 = vmatprep.subr.mxu0 0.0
    %2453 = vmatpush1.msra.mxu0 %v2312
    %2454 = vmatprep.subr.mxu0 0.0
    %2455 = vmatpush1.msra.mxu0 %v2313
    %2456 = vmatprep.subr.mxu0 0.0
    %2457 = vmatpush1.msra.mxu0 %v2314
    %2458 = vmatprep.subr.mxu0 0.0
    %2459 = vmatpush1.msra.mxu0 %v2315
    %2460 = vmatprep.subr.mxu0 0.0
    %2461 = vmatpush1.msra.mxu0 %v2316
    %2462 = vmatprep.subr.mxu0 0.0
    %2463 = vmatpush1.msra.mxu0 %v2317
    %2464 = vmatprep.mubr.f32.mxu0 %v2249
    %2465 = vmatmul.mubr.f32.gmra.mrb[0].mxu0 %v2248
    %v2466 = vpop.f32.mrb[0].mxu0
    %v2467 = vadd.f32 %v2392, %v2466
    %v2468 = vpop.f32.mrb[0].mxu0
    %2469 = vmatprep.mubr.f32.mxu0 %v2253
    %2470 = vmatmul.mubr.f32.gmra.mrb[0].mxu0 %v2252
    %v2471 = vpop.f32.mrb[0].mxu0
    %v2472 = vadd.f32 %v2397, %v2471
    %v2473 = vpop.f32.mrb[0].mxu0
    %2474 = vdwg.mxu0
    %v2475 = vadd.f32 %v1938, %v2467
    %v2476 = vadd.f32 %v1939, %v2472
    %2477 = vadd.xlane.f32.xlu0 %v2475
    %v2478 = vpop.xlane.xlu0 %2477
    %2479 = vadd.xlane.f32.xlu0 %v2476
    %v2480 = vpop.xlane.xlu0 %2479
    %v2481 = vmul.f32 %v2478, %v1129
    %v2482 = vmul.f32 %v2480, %v1129
    %v2483 = vsub.f32 %v2475, %v2481
    %v2484 = vsub.f32 %v2476, %v2482
    %v2485 = vmul.f32 %v2483, %v2483
    %v2486 = vmul.f32 %v2484, %v2484
    %2487 = vadd.xlane.f32.xlu0 %v2485
    %v2488 = vpop.xlane.xlu0 %2487
    %2489 = vadd.xlane.f32.xlu0 %v2486
    %v2490 = vpop.xlane.xlu0 %2489
    %v2491 = vmul.f32 %v2488, %v1129
    %v2492 = vmul.f32 %v2490, %v1129
    %v2493 = vadd.f32 %v2491, 1e-05
    %v2494 = vadd.f32 %v2492, 1e-05
    %v2495 = vrsqrt.pop %v2493
    %v2496 = vrsqrt.pop %v2494
    %v2497 = vmul.f32 %v2483, %v2495
    %v2498 = vmul.f32 %v2484, %v2496
    %v2499 = vld [vmem:[%s16] sm:$0x1]
    %v2501 = vlaneseq
    %v2502 = vshrl.u32 %v2501, 7
    %v2503 = vsub.s32 0, %v2502
    %v2504 = vrot.slane %v2499, %v2503
    %v2506 = vmul.f32 %v2497, %v2504
    %v2507 = vmul.f32 %v2498, %v2504
    %v2508 = vld [vmem:[%s17] sm:$0x1]
    %v2510 = vlaneseq
    %v2511 = vshrl.u32 %v2510, 7
    %v2512 = vsub.s32 0, %v2511
    %v2513 = vrot.slane %v2508, %v2512
    %v2515 = vadd.f32 %v2506, %v2513
    %v2516 = vadd.f32 %v2507, %v2513
    %s2517 = scalar_lea.vmem %s25, 16
    %2518 = vst [vmem:[%s2517] sm:$0xff] %v2515
    %2519 = vst [vmem:[%s2517 + $0x8] sm:$0xff] %v2516
    %s2520 = scalar_lea.vmem [#allocation6], 512
    %v2521 = vld [vmem:[%s2520] sm:$0xff]
    %v2522 = vld [vmem:[%s2520 + $0x8] sm:$0xff]
    %v2523 = vld [vmem:[%s2520 + $0x10] sm:$0xff]
    %v2524 = vld [vmem:[%s2520 + $0x18] sm:$0xff]
    %v2525 = vld [vmem:[%s2520 + $0x20] sm:$0xff]
    %v2526 = vld [vmem:[%s2520 + $0x28] sm:$0xff]
    %v2527 = vld [vmem:[%s2520 + $0x30] sm:$0xff]
    %v2528 = vld [vmem:[%s2520 + $0x38] sm:$0xff]
    %v2529 = vld [vmem:[%s2520 + $0x40] sm:$0xff]
    %v2530 = vld [vmem:[%s2520 + $0x48] sm:$0xff]
    %v2531 = vld [vmem:[%s2520 + $0x50] sm:$0xff]
    %v2532 = vld [vmem:[%s2520 + $0x58] sm:$0xff]
    %v2533 = vld [vmem:[%s2520 + $0x60] sm:$0xff]
    %v2534 = vld [vmem:[%s2520 + $0x68] sm:$0xff]
    %v2535 = vld [vmem:[%s2520 + $0x70] sm:$0xff]
    %v2536 = vld [vmem:[%s2520 + $0x78] sm:$0xff]
    %v2537 = vld [vmem:[%s2520 + $0x80] sm:$0xff]
    %v2538 = vld [vmem:[%s2520 + $0x88] sm:$0xff]
    %v2539 = vld [vmem:[%s2520 + $0x90] sm:$0xff]
    %v2540 = vld [vmem:[%s2520 + $0x98] sm:$0xff]
    %v2541 = vld [vmem:[%s2520 + $0xa0] sm:$0xff]
    %v2542 = vld [vmem:[%s2520 + $0xa8] sm:$0xff]
    %v2543 = vld [vmem:[%s2520 + $0xb0] sm:$0xff]
    %v2544 = vld [vmem:[%s2520 + $0xb8] sm:$0xff]
    %v2545 = vld [vmem:[%s2520 + $0xc0] sm:$0xff]
    %v2546 = vld [vmem:[%s2520 + $0xc8] sm:$0xff]
    %v2547 = vld [vmem:[%s2520 + $0xd0] sm:$0xff]
    %v2548 = vld [vmem:[%s2520 + $0xd8] sm:$0xff]
    %v2549 = vld [vmem:[%s2520 + $0xe0] sm:$0xff]
    %v2550 = vld [vmem:[%s2520 + $0xe8] sm:$0xff]
    %v2551 = vld [vmem:[%s2520 + $0xf0] sm:$0xff]
    %v2552 = vld [vmem:[%s2520 + $0xf8] sm:$0xff]
    %v2553 = vld [vmem:[%s2520 + $0x100] sm:$0xff]
    %v2554 = vld [vmem:[%s2520 + $0x108] sm:$0xff]
    %v2555 = vld [vmem:[%s2520 + $0x110] sm:$0xff]
    %v2556 = vld [vmem:[%s2520 + $0x118] sm:$0xff]
    %v2557 = vld [vmem:[%s2520 + $0x120] sm:$0xff]
    %v2558 = vld [vmem:[%s2520 + $0x128] sm:$0xff]
    %v2559 = vld [vmem:[%s2520 + $0x130] sm:$0xff]
    %v2560 = vld [vmem:[%s2520 + $0x138] sm:$0xff]
    %v2561 = vld [vmem:[%s2520 + $0x140] sm:$0xff]
    %v2562 = vld [vmem:[%s2520 + $0x148] sm:$0xff]
    %v2563 = vld [vmem:[%s2520 + $0x150] sm:$0xff]
    %v2564 = vld [vmem:[%s2520 + $0x158] sm:$0xff]
    %v2565 = vld [vmem:[%s2520 + $0x160] sm:$0xff]
    %v2566 = vld [vmem:[%s2520 + $0x168] sm:$0xff]
    %v2567 = vld [vmem:[%s2520 + $0x170] sm:$0xff]
    %v2568 = vld [vmem:[%s2520 + $0x178] sm:$0xff]
    %v2569 = vld [vmem:[%s2520 + $0x180] sm:$0xff]
    %v2570 = vld [vmem:[%s2520 + $0x188] sm:$0xff]
    %v2571 = vld [vmem:[%s2520 + $0x190] sm:$0xff]
    %v2572 = vld [vmem:[%s2520 + $0x198] sm:$0xff]
    %v2573 = vld [vmem:[%s2520 + $0x1a0] sm:$0xff]
    %v2574 = vld [vmem:[%s2520 + $0x1a8] sm:$0xff]
    %v2575 = vld [vmem:[%s2520 + $0x1b0] sm:$0xff]
    %v2576 = vld [vmem:[%s2520 + $0x1b8] sm:$0xff]
    %v2577 = vld [vmem:[%s2520 + $0x1c0] sm:$0xff]
    %v2578 = vld [vmem:[%s2520 + $0x1c8] sm:$0xff]
    %v2579 = vld [vmem:[%s2520 + $0x1d0] sm:$0xff]
    %v2580 = vld [vmem:[%s2520 + $0x1d8] sm:$0xff]
    %v2581 = vld [vmem:[%s2520 + $0x1e0] sm:$0xff]
    %v2582 = vld [vmem:[%s2520 + $0x1e8] sm:$0xff]
    %v2583 = vld [vmem:[%s2520 + $0x1f0] sm:$0xff]
    %v2584 = vld [vmem:[%s2520 + $0x1f8] sm:$0xff]
    %s2585 = scalar_lea.vmem %s13, 4
    %v2586 = vld [vmem:[%s2585] sm:$0xf]
    %v2588 = vlaneseq
    %v2589 = vshrl.u32 %v2588, 7
    %v2590 = vsub.s32 0, %v2589
    %v2591 = vrot.slane %v2586, %v2590
    %v2592 = vlaneseq
    %v2593 = vshrl.u32 %v2592, 7
    %v2594 = vsub.s32 1, %v2593
    %v2595 = vrot.slane %v2586, %v2594
    %v2596 = vlaneseq
    %v2597 = vshrl.u32 %v2596, 7
    %v2598 = vsub.s32 2, %v2597
    %v2599 = vrot.slane %v2586, %v2598
    %v2600 = vlaneseq
    %v2601 = vshrl.u32 %v2600, 7
    %v2602 = vsub.s32 3, %v2601
    %v2603 = vrot.slane %v2586, %v2602
    %2608 = vmatprep.subr.mxu0 %v2522
    %2609 = vmatpush1.msra.mxu0 %v2521
    %2610 = vmatprep.subr.mxu0 %v2526
    %2611 = vmatpush1.msra.mxu0 %v2525
    %2612 = vmatprep.subr.mxu0 %v2530
    %2613 = vmatpush1.msra.mxu0 %v2529
    %2614 = vmatprep.subr.mxu0 %v2534
    %2615 = vmatpush1.msra.mxu0 %v2533
    %2616 = vmatprep.subr.mxu0 %v2538
    %2617 = vmatpush1.msra.mxu0 %v2537
    %2618 = vmatprep.subr.mxu0 %v2542
    %2619 = vmatpush1.msra.mxu0 %v2541
    %2620 = vmatprep.subr.mxu0 %v2546
    %2621 = vmatpush1.msra.mxu0 %v2545
    %2622 = vmatprep.subr.mxu0 %v2550
    %2623 = vmatpush1.msra.mxu0 %v2549
    %2624 = vmatprep.subr.mxu0 %v2554
    %2625 = vmatpush1.msra.mxu0 %v2553
    %2626 = vmatprep.subr.mxu0 %v2558
    %2627 = vmatpush1.msra.mxu0 %v2557
    %2628 = vmatprep.subr.mxu0 %v2562
    %2629 = vmatpush1.msra.mxu0 %v2561
    %2630 = vmatprep.subr.mxu0 %v2566
    %2631 = vmatpush1.msra.mxu0 %v2565
    %2632 = vmatprep.subr.mxu0 %v2570
    %2633 = vmatpush1.msra.mxu0 %v2569
    %2634 = vmatprep.subr.mxu0 %v2574
    %2635 = vmatpush1.msra.mxu0 %v2573
    %2636 = vmatprep.subr.mxu0 %v2578
    %2637 = vmatpush1.msra.mxu0 %v2577
    %2638 = vmatprep.subr.mxu0 %v2582
    %2639 = vmatpush1.msra.mxu0 %v2581
    %2640 = vmatprep.subr.mxu0 0.0
    %2641 = vmatpush1.msra.mxu0 0.0
    %2642 = vmatprep.subr.mxu0 0.0
    %2643 = vmatpush1.msra.mxu0 0.0
    %2644 = vmatprep.subr.mxu0 0.0
    %2645 = vmatpush1.msra.mxu0 0.0
    %2646 = vmatprep.subr.mxu0 0.0
    %2647 = vmatpush1.msra.mxu0 0.0
    %2648 = vmatprep.subr.mxu0 0.0
    %2649 = vmatpush1.msra.mxu0 0.0
    %2650 = vmatprep.subr.mxu0 0.0
    %2651 = vmatpush1.msra.mxu0 0.0
    %2652 = vmatprep.subr.mxu0 0.0
    %2653 = vmatpush1.msra.mxu0 0.0
    %2654 = vmatprep.subr.mxu0 0.0
    %2655 = vmatpush1.msra.mxu0 0.0
    %2656 = vmatprep.subr.mxu0 0.0
    %2657 = vmatpush1.msra.mxu0 0.0
    %2658 = vmatprep.subr.mxu0 0.0
    %2659 = vmatpush1.msra.mxu0 0.0
    %2660 = vmatprep.subr.mxu0 0.0
    %2661 = vmatpush1.msra.mxu0 0.0
    %2662 = vmatprep.subr.mxu0 0.0
    %2663 = vmatpush1.msra.mxu0 0.0
    %2664 = vmatprep.subr.mxu0 0.0
    %2665 = vmatpush1.msra.mxu0 0.0
    %2666 = vmatprep.subr.mxu0 0.0
    %2667 = vmatpush1.msra.mxu0 0.0
    %2668 = vmatprep.subr.mxu0 0.0
    %2669 = vmatpush1.msra.mxu0 0.0
    %2670 = vmatprep.subr.mxu0 0.0
    %2671 = vmatpush1.msra.mxu0 0.0
    %2672 = vmatprep.mubr.f32.mxu0 0.0
    %2673 = vmatmul.mubr.f32.gmra.mrb[0].mxu0 %v2515
    %v2674 = vpop.f32.mrb[0].mxu0
    %v2675 = vadd.f32 %v2591, %v2674
    %v2676 = vpop.f32.mrb[0].mxu0
    %v2677 = vadd.f32 %v2595, %v2676
    %2678 = vmatprep.mubr.f32.mxu0 0.0
    %2679 = vmatmul.mubr.f32.gmra.mrb[0].mxu0 %v2516
    %v2680 = vpop.f32.mrb[0].mxu0
    %v2681 = vadd.f32 %v2591, %v2680
    %v2682 = vpop.f32.mrb[0].mxu0
    %v2683 = vadd.f32 %v2595, %v2682
    %2684 = vdwg.mxu0
    %2685 = vmatprep.subr.mxu0 %v2524
    %2686 = vmatpush1.msra.mxu0 %v2523
    %2687 = vmatprep.subr.mxu0 %v2528
    %2688 = vmatpush1.msra.mxu0 %v2527
    %2689 = vmatprep.subr.mxu0 %v2532
    %2690 = vmatpush1.msra.mxu0 %v2531
    %2691 = vmatprep.subr.mxu0 %v2536
    %2692 = vmatpush1.msra.mxu0 %v2535
    %2693 = vmatprep.subr.mxu0 %v2540
    %2694 = vmatpush1.msra.mxu0 %v2539
    %2695 = vmatprep.subr.mxu0 %v2544
    %2696 = vmatpush1.msra.mxu0 %v2543
    %2697 = vmatprep.subr.mxu0 %v2548
    %2698 = vmatpush1.msra.mxu0 %v2547
    %2699 = vmatprep.subr.mxu0 %v2552
    %2700 = vmatpush1.msra.mxu0 %v2551
    %2701 = vmatprep.subr.mxu0 %v2556
    %2702 = vmatpush1.msra.mxu0 %v2555
    %2703 = vmatprep.subr.mxu0 %v2560
    %2704 = vmatpush1.msra.mxu0 %v2559
    %2705 = vmatprep.subr.mxu0 %v2564
    %2706 = vmatpush1.msra.mxu0 %v2563
    %2707 = vmatprep.subr.mxu0 %v2568
    %2708 = vmatpush1.msra.mxu0 %v2567
    %2709 = vmatprep.subr.mxu0 %v2572
    %2710 = vmatpush1.msra.mxu0 %v2571
    %2711 = vmatprep.subr.mxu0 %v2576
    %2712 = vmatpush1.msra.mxu0 %v2575
    %2713 = vmatprep.subr.mxu0 %v2580
    %2714 = vmatpush1.msra.mxu0 %v2579
    %2715 = vmatprep.subr.mxu0 %v2584
    %2716 = vmatpush1.msra.mxu0 %v2583
    %2717 = vmatprep.subr.mxu0 0.0
    %2718 = vmatpush1.msra.mxu0 0.0
    %2719 = vmatprep.subr.mxu0 0.0
    %2720 = vmatpush1.msra.mxu0 0.0
    %2721 = vmatprep.subr.mxu0 0.0
    %2722 = vmatpush1.msra.mxu0 0.0
    %2723 = vmatprep.subr.mxu0 0.0
    %2724 = vmatpush1.msra.mxu0 0.0
    %2725 = vmatprep.subr.mxu0 0.0
    %2726 = vmatpush1.msra.mxu0 0.0
    %2727 = vmatprep.subr.mxu0 0.0
    %2728 = vmatpush1.msra.mxu0 0.0
    %2729 = vmatprep.subr.mxu0 0.0
    %2730 = vmatpush1.msra.mxu0 0.0
    %2731 = vmatprep.subr.mxu0 0.0
    %2732 = vmatpush1.msra.mxu0 0.0
    %2733 = vmatprep.subr.mxu0 0.0
    %2734 = vmatpush1.msra.mxu0 0.0
    %2735 = vmatprep.subr.mxu0 0.0
    %2736 = vmatpush1.msra.mxu0 0.0
    %2737 = vmatprep.subr.mxu0 0.0
    %2738 = vmatpush1.msra.mxu0 0.0
    %2739 = vmatprep.subr.mxu0 0.0
    %2740 = vmatpush1.msra.mxu0 0.0
    %2741 = vmatprep.subr.mxu0 0.0
    %2742 = vmatpush1.msra.mxu0 0.0
    %2743 = vmatprep.subr.mxu0 0.0
    %2744 = vmatpush1.msra.mxu0 0.0
    %2745 = vmatprep.subr.mxu0 0.0
    %2746 = vmatpush1.msra.mxu0 0.0
    %2747 = vmatprep.subr.mxu0 0.0
    %2748 = vmatpush1.msra.mxu0 0.0
    %2749 = vmatprep.mubr.f32.mxu0 0.0
    %2750 = vmatmul.mubr.f32.gmra.mrb[0].mxu0 %v2515
    %v2751 = vpop.f32.mrb[0].mxu0
    %v2752 = vadd.f32 %v2599, %v2751
    %v2753 = vpop.f32.mrb[0].mxu0
    %v2754 = vadd.f32 %v2603, %v2753
    %2755 = vmatprep.mubr.f32.mxu0 0.0
    %2756 = vmatmul.mubr.f32.gmra.mrb[0].mxu0 %v2516
    %v2757 = vpop.f32.mrb[0].mxu0
    %v2758 = vadd.f32 %v2599, %v2757
    %v2759 = vpop.f32.mrb[0].mxu0
    %v2760 = vadd.f32 %v2603, %v2759
    %2761 = vdwg.mxu0
    %v2762 = vmul.f32 %v2675, 0.5
    %v2763 = vmul.f32 %v2677, 0.5
    %v2764 = vmul.f32 %v2752, 0.5
    %v2765 = vmul.f32 %v2754, 0.5
    %v2766 = vmul.f32 %v2681, 0.5
    %v2767 = vmul.f32 %v2683, 0.5
    %v2768 = vmul.f32 %v2758, 0.5
    %v2769 = vmul.f32 %v2760, 0.5
    %v2770 = vmul.f32 %v2675, 0.044715
    %v2771 = vmul.f32 %v2677, 0.044715
    %v2772 = vmul.f32 %v2752, 0.044715
    %v2773 = vmul.f32 %v2754, 0.044715
    %v2774 = vmul.f32 %v2681, 0.044715
    %v2775 = vmul.f32 %v2683, 0.044715
    %v2776 = vmul.f32 %v2758, 0.044715
    %v2777 = vmul.f32 %v2760, 0.044715
    %v2778 = vmul.f32 %v2770, %v2675
    %v2779 = vmul.f32 %v2771, %v2677
    %v2780 = vmul.f32 %v2772, %v2752
    %v2781 = vmul.f32 %v2773, %v2754
    %v2782 = vmul.f32 %v2774, %v2681
    %v2783 = vmul.f32 %v2775, %v2683
    %v2784 = vmul.f32 %v2776, %v2758
    %v2785 = vmul.f32 %v2777, %v2760
    %v2786 = vmul.f32 %v2778, %v2675
    %v2787 = vmul.f32 %v2779, %v2677
    %v2788 = vmul.f32 %v2780, %v2752
    %v2789 = vmul.f32 %v2781, %v2754
    %v2790 = vmul.f32 %v2782, %v2681
    %v2791 = vmul.f32 %v2783, %v2683
    %v2792 = vmul.f32 %v2784, %v2758
    %v2793 = vmul.f32 %v2785, %v2760
    %v2794 = vadd.f32 %v2675, %v2786
    %v2795 = vadd.f32 %v2677, %v2787
    %v2796 = vadd.f32 %v2752, %v2788
    %v2797 = vadd.f32 %v2754, %v2789
    %v2798 = vadd.f32 %v2681, %v2790
    %v2799 = vadd.f32 %v2683, %v2791
    %v2800 = vadd.f32 %v2758, %v2792
    %v2801 = vadd.f32 %v2760, %v2793
    %v2802 = vmul.f32 %v2794, 0.7978846
    %v2803 = vmul.f32 %v2795, 0.7978846
    %v2804 = vmul.f32 %v2796, 0.7978846
    %v2805 = vmul.f32 %v2797, 0.7978846
    %v2806 = vmul.f32 %v2798, 0.7978846
    %v2807 = vmul.f32 %v2799, 0.7978846
    %v2808 = vmul.f32 %v2800, 0.7978846
    %v2809 = vmul.f32 %v2801, 0.7978846
    %v2810 = vtanh.pop %v2802
    %v2811 = vtanh.pop %v2803
    %v2812 = vtanh.pop %v2804
    %v2813 = vtanh.pop %v2805
    %v2814 = vtanh.pop %v2806
    %v2815 = vtanh.pop %v2807
    %v2816 = vtanh.pop %v2808
    %v2817 = vtanh.pop %v2809
    %v2818 = vadd.f32 %v2810, 1.0
    %v2819 = vadd.f32 %v2811, 1.0
    %v2820 = vadd.f32 %v2812, 1.0
    %v2821 = vadd.f32 %v2813, 1.0
    %v2822 = vadd.f32 %v2814, 1.0
    %v2823 = vadd.f32 %v2815, 1.0
    %v2824 = vadd.f32 %v2816, 1.0
    %v2825 = vadd.f32 %v2817, 1.0
    %v2826 = vmul.f32 %v2762, %v2818
    %v2827 = vmul.f32 %v2763, %v2819
    %v2828 = vmul.f32 %v2764, %v2820
    %v2829 = vmul.f32 %v2765, %v2821
    %v2830 = vmul.f32 %v2766, %v2822
    %v2831 = vmul.f32 %v2767, %v2823
    %v2832 = vmul.f32 %v2768, %v2824
    %v2833 = vmul.f32 %v2769, %v2825
    %s2834 = scalar_lea.vmem [#allocation7], 512
    %v2835 = vld [vmem:[%s2834] sm:$0xff]
    %v2836 = vld [vmem:[%s2834 + $0x8] sm:$0xff]
    %v2837 = vld [vmem:[%s2834 + $0x10] sm:$0xff]
    %v2838 = vld [vmem:[%s2834 + $0x18] sm:$0xff]
    %v2839 = vld [vmem:[%s2834 + $0x20] sm:$0xff]
    %v2840 = vld [vmem:[%s2834 + $0x28] sm:$0xff]
    %v2841 = vld [vmem:[%s2834 + $0x30] sm:$0xff]
    %v2842 = vld [vmem:[%s2834 + $0x38] sm:$0xff]
    %v2843 = vld [vmem:[%s2834 + $0x40] sm:$0xff]
    %v2844 = vld [vmem:[%s2834 + $0x48] sm:$0xff]
    %v2845 = vld [vmem:[%s2834 + $0x50] sm:$0xff]
    %v2846 = vld [vmem:[%s2834 + $0x58] sm:$0xff]
    %v2847 = vld [vmem:[%s2834 + $0x60] sm:$0xff]
    %v2848 = vld [vmem:[%s2834 + $0x68] sm:$0xff]
    %v2849 = vld [vmem:[%s2834 + $0x70] sm:$0xff]
    %v2850 = vld [vmem:[%s2834 + $0x78] sm:$0xff]
    %v2851 = vld [vmem:[%s2834 + $0x80] sm:$0xff]
    %v2852 = vld [vmem:[%s2834 + $0x88] sm:$0xff]
    %v2853 = vld [vmem:[%s2834 + $0x90] sm:$0xff]
    %v2854 = vld [vmem:[%s2834 + $0x98] sm:$0xff]
    %v2855 = vld [vmem:[%s2834 + $0xa0] sm:$0xff]
    %v2856 = vld [vmem:[%s2834 + $0xa8] sm:$0xff]
    %v2857 = vld [vmem:[%s2834 + $0xb0] sm:$0xff]
    %v2858 = vld [vmem:[%s2834 + $0xb8] sm:$0xff]
    %v2859 = vld [vmem:[%s2834 + $0xc0] sm:$0xff]
    %v2860 = vld [vmem:[%s2834 + $0xc8] sm:$0xff]
    %v2861 = vld [vmem:[%s2834 + $0xd0] sm:$0xff]
    %v2862 = vld [vmem:[%s2834 + $0xd8] sm:$0xff]
    %v2863 = vld [vmem:[%s2834 + $0xe0] sm:$0xff]
    %v2864 = vld [vmem:[%s2834 + $0xe8] sm:$0xff]
    %v2865 = vld [vmem:[%s2834 + $0xf0] sm:$0xff]
    %v2866 = vld [vmem:[%s2834 + $0xf8] sm:$0xff]
    %v2867 = vld [vmem:[%s2834 + $0x100] sm:$0xff]
    %v2868 = vld [vmem:[%s2834 + $0x108] sm:$0xff]
    %v2869 = vld [vmem:[%s2834 + $0x110] sm:$0xff]
    %v2870 = vld [vmem:[%s2834 + $0x118] sm:$0xff]
    %v2871 = vld [vmem:[%s2834 + $0x120] sm:$0xff]
    %v2872 = vld [vmem:[%s2834 + $0x128] sm:$0xff]
    %v2873 = vld [vmem:[%s2834 + $0x130] sm:$0xff]
    %v2874 = vld [vmem:[%s2834 + $0x138] sm:$0xff]
    %v2875 = vld [vmem:[%s2834 + $0x140] sm:$0xff]
    %v2876 = vld [vmem:[%s2834 + $0x148] sm:$0xff]
    %v2877 = vld [vmem:[%s2834 + $0x150] sm:$0xff]
    %v2878 = vld [vmem:[%s2834 + $0x158] sm:$0xff]
    %v2879 = vld [vmem:[%s2834 + $0x160] sm:$0xff]
    %v2880 = vld [vmem:[%s2834 + $0x168] sm:$0xff]
    %v2881 = vld [vmem:[%s2834 + $0x170] sm:$0xff]
    %v2882 = vld [vmem:[%s2834 + $0x178] sm:$0xff]
    %v2883 = vld [vmem:[%s2834 + $0x180] sm:$0xff]
    %v2884 = vld [vmem:[%s2834 + $0x188] sm:$0xff]
    %v2885 = vld [vmem:[%s2834 + $0x190] sm:$0xff]
    %v2886 = vld [vmem:[%s2834 + $0x198] sm:$0xff]
    %v2887 = vld [vmem:[%s2834 + $0x1a0] sm:$0xff]
    %v2888 = vld [vmem:[%s2834 + $0x1a8] sm:$0xff]
    %v2889 = vld [vmem:[%s2834 + $0x1b0] sm:$0xff]
    %v2890 = vld [vmem:[%s2834 + $0x1b8] sm:$0xff]
    %v2891 = vld [vmem:[%s2834 + $0x1c0] sm:$0xff]
    %v2892 = vld [vmem:[%s2834 + $0x1c8] sm:$0xff]
    %v2893 = vld [vmem:[%s2834 + $0x1d0] sm:$0xff]
    %v2894 = vld [vmem:[%s2834 + $0x1d8] sm:$0xff]
    %v2895 = vld [vmem:[%s2834 + $0x1e0] sm:$0xff]
    %v2896 = vld [vmem:[%s2834 + $0x1e8] sm:$0xff]
    %v2897 = vld [vmem:[%s2834 + $0x1f0] sm:$0xff]
    %v2898 = vld [vmem:[%s2834 + $0x1f8] sm:$0xff]
    %s2899 = scalar_lea.vmem %s15, 1
    %v2900 = vld [vmem:[%s2899] sm:$0x1]
    %v2902 = vlaneseq
    %v2903 = vshrl.u32 %v2902, 7
    %v2904 = vsub.s32 0, %v2903
    %v2905 = vrot.slane %v2900, %v2904
    %2907 = vmatprep.subr.mxu0 0.0
    %2908 = vmatpush1.msra.mxu0 %v2835
    %2909 = vmatprep.subr.mxu0 0.0
    %2910 = vmatpush1.msra.mxu0 %v2836
    %2911 = vmatprep.subr.mxu0 0.0
    %2912 = vmatpush1.msra.mxu0 %v2837
    %2913 = vmatprep.subr.mxu0 0.0
    %2914 = vmatpush1.msra.mxu0 %v2838
    %2915 = vmatprep.subr.mxu0 0.0
    %2916 = vmatpush1.msra.mxu0 %v2839
    %2917 = vmatprep.subr.mxu0 0.0
    %2918 = vmatpush1.msra.mxu0 %v2840
    %2919 = vmatprep.subr.mxu0 0.0
    %2920 = vmatpush1.msra.mxu0 %v2841
    %2921 = vmatprep.subr.mxu0 0.0
    %2922 = vmatpush1.msra.mxu0 %v2842
    %2923 = vmatprep.subr.mxu0 0.0
    %2924 = vmatpush1.msra.mxu0 %v2843
    %2925 = vmatprep.subr.mxu0 0.0
    %2926 = vmatpush1.msra.mxu0 %v2844
    %2927 = vmatprep.subr.mxu0 0.0
    %2928 = vmatpush1.msra.mxu0 %v2845
    %2929 = vmatprep.subr.mxu0 0.0
    %2930 = vmatpush1.msra.mxu0 %v2846
    %2931 = vmatprep.subr.mxu0 0.0
    %2932 = vmatpush1.msra.mxu0 %v2847
    %2933 = vmatprep.subr.mxu0 0.0
    %2934 = vmatpush1.msra.mxu0 %v2848
    %2935 = vmatprep.subr.mxu0 0.0
    %2936 = vmatpush1.msra.mxu0 %v2849
    %2937 = vmatprep.subr.mxu0 0.0
    %2938 = vmatpush1.msra.mxu0 %v2850
    %2939 = vmatprep.subr.mxu0 0.0
    %2940 = vmatpush1.msra.mxu0 %v2851
    %2941 = vmatprep.subr.mxu0 0.0
    %2942 = vmatpush1.msra.mxu0 %v2852
    %2943 = vmatprep.subr.mxu0 0.0
    %2944 = vmatpush1.msra.mxu0 %v2853
    %2945 = vmatprep.subr.mxu0 0.0
    %2946 = vmatpush1.msra.mxu0 %v2854
    %2947 = vmatprep.subr.mxu0 0.0
    %2948 = vmatpush1.msra.mxu0 %v2855
    %2949 = vmatprep.subr.mxu0 0.0
    %2950 = vmatpush1.msra.mxu0 %v2856
    %2951 = vmatprep.subr.mxu0 0.0
    %2952 = vmatpush1.msra.mxu0 %v2857
    %2953 = vmatprep.subr.mxu0 0.0
    %2954 = vmatpush1.msra.mxu0 %v2858
    %2955 = vmatprep.subr.mxu0 0.0
    %2956 = vmatpush1.msra.mxu0 %v2859
    %2957 = vmatprep.subr.mxu0 0.0
    %2958 = vmatpush1.msra.mxu0 %v2860
    %2959 = vmatprep.subr.mxu0 0.0
    %2960 = vmatpush1.msra.mxu0 %v2861
    %2961 = vmatprep.subr.mxu0 0.0
    %2962 = vmatpush1.msra.mxu0 %v2862
    %2963 = vmatprep.subr.mxu0 0.0
    %2964 = vmatpush1.msra.mxu0 %v2863
    %2965 = vmatprep.subr.mxu0 0.0
    %2966 = vmatpush1.msra.mxu0 %v2864
    %2967 = vmatprep.subr.mxu0 0.0
    %2968 = vmatpush1.msra.mxu0 %v2865
    %2969 = vmatprep.subr.mxu0 0.0
    %2970 = vmatpush1.msra.mxu0 %v2866
    %2971 = vmatprep.mubr.f32.mxu0 %v2827
    %2972 = vmatmul.mubr.f32.gmra.mrb[0].mxu0 %v2826
    %v2973 = vpop.f32.mrb[0].mxu0
    %v2974 = vadd.f32 %v2905, %v2973
    %v2975 = vpop.f32.mrb[0].mxu0
    %2976 = vmatprep.mubr.f32.mxu0 %v2831
    %2977 = vmatmul.mubr.f32.gmra.mrb[0].mxu0 %v2830
    %v2978 = vpop.f32.mrb[0].mxu0
    %v2979 = vadd.f32 %v2905, %v2978
    %v2980 = vpop.f32.mrb[0].mxu0
    %2981 = vdwg.mxu0
    %2982 = vmatprep.subr.mxu0 0.0
    %2983 = vmatpush1.msra.mxu0 %v2867
    %2984 = vmatprep.subr.mxu0 0.0
    %2985 = vmatpush1.msra.mxu0 %v2868
    %2986 = vmatprep.subr.mxu0 0.0
    %2987 = vmatpush1.msra.mxu0 %v2869
    %2988 = vmatprep.subr.mxu0 0.0
    %2989 = vmatpush1.msra.mxu0 %v2870
    %2990 = vmatprep.subr.mxu0 0.0
    %2991 = vmatpush1.msra.mxu0 %v2871
    %2992 = vmatprep.subr.mxu0 0.0
    %2993 = vmatpush1.msra.mxu0 %v2872
    %2994 = vmatprep.subr.mxu0 0.0
    %2995 = vmatpush1.msra.mxu0 %v2873
    %2996 = vmatprep.subr.mxu0 0.0
    %2997 = vmatpush1.msra.mxu0 %v2874
    %2998 = vmatprep.subr.mxu0 0.0
    %2999 = vmatpush1.msra.mxu0 %v2875
    %3000 = vmatprep.subr.mxu0 0.0
    %3001 = vmatpush1.msra.mxu0 %v2876
    %3002 = vmatprep.subr.mxu0 0.0
    %3003 = vmatpush1.msra.mxu0 %v2877
    %3004 = vmatprep.subr.mxu0 0.0
    %3005 = vmatpush1.msra.mxu0 %v2878
    %3006 = vmatprep.subr.mxu0 0.0
    %3007 = vmatpush1.msra.mxu0 %v2879
    %3008 = vmatprep.subr.mxu0 0.0
    %3009 = vmatpush1.msra.mxu0 %v2880
    %3010 = vmatprep.subr.mxu0 0.0
    %3011 = vmatpush1.msra.mxu0 %v2881
    %3012 = vmatprep.subr.mxu0 0.0
    %3013 = vmatpush1.msra.mxu0 %v2882
    %3014 = vmatprep.subr.mxu0 0.0
    %3015 = vmatpush1.msra.mxu0 %v2883
    %3016 = vmatprep.subr.mxu0 0.0
    %3017 = vmatpush1.msra.mxu0 %v2884
    %3018 = vmatprep.subr.mxu0 0.0
    %3019 = vmatpush1.msra.mxu0 %v2885
    %3020 = vmatprep.subr.mxu0 0.0
    %3021 = vmatpush1.msra.mxu0 %v2886
    %3022 = vmatprep.subr.mxu0 0.0
    %3023 = vmatpush1.msra.mxu0 %v2887
    %3024 = vmatprep.subr.mxu0 0.0
    %3025 = vmatpush1.msra.mxu0 %v2888
    %3026 = vmatprep.subr.mxu0 0.0
    %3027 = vmatpush1.msra.mxu0 %v2889
    %3028 = vmatprep.subr.mxu0 0.0
    %3029 = vmatpush1.msra.mxu0 %v2890
    %3030 = vmatprep.subr.mxu0 0.0
    %3031 = vmatpush1.msra.mxu0 %v2891
    %3032 = vmatprep.subr.mxu0 0.0
    %3033 = vmatpush1.msra.mxu0 %v2892
    %3034 = vmatprep.subr.mxu0 0.0
    %3035 = vmatpush1.msra.mxu0 %v2893
    %3036 = vmatprep.subr.mxu0 0.0
    %3037 = vmatpush1.msra.mxu0 %v2894
    %3038 = vmatprep.subr.mxu0 0.0
    %3039 = vmatpush1.msra.mxu0 %v2895
    %3040 = vmatprep.subr.mxu0 0.0
    %3041 = vmatpush1.msra.mxu0 %v2896
    %3042 = vmatprep.subr.mxu0 0.0
    %3043 = vmatpush1.msra.mxu0 %v2897
    %3044 = vmatprep.subr.mxu0 0.0
    %3045 = vmatpush1.msra.mxu0 %v2898
    %3046 = vmatprep.mubr.f32.mxu0 %v2829
    %3047 = vmatmul.mubr.f32.gmra.mrb[0].mxu0 %v2828
    %v3048 = vpop.f32.mrb[0].mxu0
    %v3049 = vadd.f32 %v2974, %v3048
    %v3050 = vpop.f32.mrb[0].mxu0
    %3051 = vmatprep.mubr.f32.mxu0 %v2833
    %3052 = vmatmul.mubr.f32.gmra.mrb[0].mxu0 %v2832
    %v3053 = vpop.f32.mrb[0].mxu0
    %v3054 = vadd.f32 %v2979, %v3053
    %v3055 = vpop.f32.mrb[0].mxu0
    %3056 = vdwg.mxu0
    %v3057 = vadd.f32 %v2515, %v3049
    %v3058 = vadd.f32 %v2516, %v3054
    %3059 = vadd.xlane.f32.xlu0 %v3057
    %v3060 = vpop.xlane.xlu0 %3059
    %3061 = vadd.xlane.f32.xlu0 %v3058
    %v3062 = vpop.xlane.xlu0 %3061
    %v3063 = vmul.f32 %v3060, %v1129
    %v3064 = vmul.f32 %v3062, %v1129
    %v3065 = vsub.f32 %v3057, %v3063
    %v3066 = vsub.f32 %v3058, %v3064
    %v3067 = vmul.f32 %v3065, %v3065
    %v3068 = vmul.f32 %v3066, %v3066
    %3069 = vadd.xlane.f32.xlu0 %v3067
    %v3070 = vpop.xlane.xlu0 %3069
    %3071 = vadd.xlane.f32.xlu0 %v3068
    %v3072 = vpop.xlane.xlu0 %3071
    %v3073 = vmul.f32 %v3070, %v1129
    %v3074 = vmul.f32 %v3072, %v1129
    %v3075 = vadd.f32 %v3073, 1e-05
    %v3076 = vadd.f32 %v3074, 1e-05
    %v3077 = vrsqrt.pop %v3075
    %v3078 = vrsqrt.pop %v3076
    %v3079 = vmul.f32 %v3065, %v3077
    %v3080 = vmul.f32 %v3066, %v3078
    %s3081 = scalar_lea.vmem %s16, 1
    %v3082 = vld [vmem:[%s3081] sm:$0x1]
    %v3084 = vlaneseq
    %v3085 = vshrl.u32 %v3084, 7
    %v3086 = vsub.s32 0, %v3085
    %v3087 = vrot.slane %v3082, %v3086
    %v3089 = vmul.f32 %v3079, %v3087
    %v3090 = vmul.f32 %v3080, %v3087
    %s3091 = scalar_lea.vmem %s17, 1
    %v3092 = vld [vmem:[%s3091] sm:$0x1]
    %v3094 = vlaneseq
    %v3095 = vshrl.u32 %v3094, 7
    %v3096 = vsub.s32 0, %v3095
    %v3097 = vrot.slane %v3092, %v3096
    %v3099 = vadd.f32 %v3089, %v3097
    %v3100 = vadd.f32 %v3090, %v3097
    %s3101 = scalar_lea.vmem %s25, 32
    %3102 = vst [vmem:[%s3101] sm:$0xff] %v3099
    %3103 = vst [vmem:[%s3101 + $0x8] sm:$0xff] %v3100
    %3104 = vst [vmem:[%s26] sm:$0xff] %v1831
    %3105 = vst [vmem:[%s26 + $0x8] sm:$0xff] %v1832
    %3106 = vst [vmem:[%s26 + $0x10] sm:$0xff] %v1833
    %3107 = vst [vmem:[%s26 + $0x18] sm:$0xff] %v3099
    %3108 = vst [vmem:[%s26 + $0x20] sm:$0xff] %v3100
    %v3109 = vld [vmem:[#allocation9] sm:$0xff]
    %v3110 = vld [vmem:[#allocation9 + $0x8] sm:$0xff]
    %v3111 = vld [vmem:[#allocation9 + $0x10] sm:$0xff]
    %v3112 = vld [vmem:[#allocation9 + $0x18] sm:$0xff]
    %v3113 = vld [vmem:[#allocation9 + $0x20] sm:$0xff]
    %v3114 = vld [vmem:[#allocation9 + $0x28] sm:$0xff]
    %v3115 = vld [vmem:[#allocation9 + $0x30] sm:$0xff]
    %v3116 = vld [vmem:[#allocation9 + $0x38] sm:$0xff]
    %v3117 = vld [vmem:[#allocation9 + $0x40] sm:$0xff]
    %v3118 = vld [vmem:[#allocation9 + $0x48] sm:$0xff]
    %v3119 = vld [vmem:[#allocation9 + $0x50] sm:$0xff]
    %v3120 = vld [vmem:[#allocation9 + $0x58] sm:$0xff]
    %v3121 = vld [vmem:[#allocation9 + $0x60] sm:$0xff]
    %v3122 = vld [vmem:[#allocation9 + $0x68] sm:$0xff]
    %v3123 = vld [vmem:[#allocation9 + $0x70] sm:$0xff]
    %v3124 = vld [vmem:[#allocation9 + $0x78] sm:$0xff]
    %v3125 = vld [vmem:[#allocation9 + $0x80] sm:$0xff]
    %v3126 = vld [vmem:[#allocation9 + $0x88] sm:$0xff]
    %v3127 = vld [vmem:[#allocation9 + $0x90] sm:$0xff]
    %v3128 = vld [vmem:[#allocation9 + $0x98] sm:$0xff]
    %v3129 = vld [vmem:[#allocation9 + $0xa0] sm:$0xff]
    %v3130 = vld [vmem:[#allocation9 + $0xa8] sm:$0xff]
    %v3131 = vld [vmem:[#allocation9 + $0xb0] sm:$0xff]
    %v3132 = vld [vmem:[#allocation9 + $0xb8] sm:$0xff]
    %v3133 = vld [vmem:[#allocation9 + $0xc0] sm:$0xff]
    %v3134 = vld [vmem:[#allocation9 + $0xc8] sm:$0xff]
    %v3135 = vld [vmem:[#allocation9 + $0xd0] sm:$0xff]
    %v3136 = vld [vmem:[#allocation9 + $0xd8] sm:$0xff]
    %v3137 = vld [vmem:[#allocation9 + $0xe0] sm:$0xff]
    %v3138 = vld [vmem:[#allocation9 + $0xe8] sm:$0xff]
    %v3139 = vld [vmem:[#allocation9 + $0xf0] sm:$0xff]
    %v3140 = vld [vmem:[#allocation9 + $0xf8] sm:$0xff]
    %v3141 = vld [vmem:[#allocation9 + $0x100] sm:$0xff]
    %v3142 = vld [vmem:[#allocation9 + $0x108] sm:$0xff]
    %v3143 = vld [vmem:[#allocation9 + $0x110] sm:$0xff]
    %v3144 = vld [vmem:[#allocation9 + $0x118] sm:$0xff]
    %v3145 = vld [vmem:[#allocation9 + $0x120] sm:$0xff]
    %v3146 = vld [vmem:[#allocation9 + $0x128] sm:$0xff]
    %v3147 = vld [vmem:[#allocation9 + $0x130] sm:$0xff]
    %v3148 = vld [vmem:[#allocation9 + $0x138] sm:$0xff]
    %v3149 = vld [vmem:[#allocation9 + $0x140] sm:$0xff]
    %v3150 = vld [vmem:[#allocation9 + $0x148] sm:$0xff]
    %v3151 = vld [vmem:[#allocation9 + $0x150] sm:$0xff]
    %v3152 = vld [vmem:[#allocation9 + $0x158] sm:$0xff]
    %v3153 = vld [vmem:[#allocation9 + $0x160] sm:$0xff]
    %v3154 = vld [vmem:[#allocation9 + $0x168] sm:$0xff]
    %v3155 = vld [vmem:[#allocation9 + $0x170] sm:$0xff]
    %v3156 = vld [vmem:[#allocation9 + $0x178] sm:$0xff]
    %v3157 = vld [vmem:[#allocation9 + $0x180] sm:$0xff]
    %v3158 = vld [vmem:[#allocation9 + $0x188] sm:$0xff]
    %v3159 = vld [vmem:[#allocation9 + $0x190] sm:$0xff]
    %v3160 = vld [vmem:[#allocation9 + $0x198] sm:$0xff]
    %v3161 = vld [vmem:[#allocation9 + $0x1a0] sm:$0xff]
    %v3162 = vld [vmem:[#allocation9 + $0x1a8] sm:$0xff]
    %v3163 = vld [vmem:[#allocation9 + $0x1b0] sm:$0xff]
    %v3164 = vld [vmem:[#allocation9 + $0x1b8] sm:$0xff]
    %v3165 = vld [vmem:[#allocation9 + $0x1c0] sm:$0xff]
    %v3166 = vld [vmem:[#allocation9 + $0x1c8] sm:$0xff]
    %v3167 = vld [vmem:[#allocation9 + $0x1d0] sm:$0xff]
    %v3168 = vld [vmem:[#allocation9 + $0x1d8] sm:$0xff]
    %v3169 = vld [vmem:[#allocation9 + $0x1e0] sm:$0xff]
    %v3170 = vld [vmem:[#allocation9 + $0x1e8] sm:$0xff]
    %v3171 = vld [vmem:[#allocation9 + $0x1f0] sm:$0xff]
    %v3172 = vld [vmem:[#allocation9 + $0x1f8] sm:$0xff]
    %v3173 = vld [vmem:[%s19] sm:$0xf]
    %v3175 = vlaneseq
    %v3176 = vshrl.u32 %v3175, 7
    %v3177 = vsub.s32 0, %v3176
    %v3178 = vrot.slane %v3173, %v3177
    %v3179 = vlaneseq
    %v3180 = vshrl.u32 %v3179, 7
    %v3181 = vsub.s32 1, %v3180
    %v3182 = vrot.slane %v3173, %v3181
    %v3183 = vlaneseq
    %v3184 = vshrl.u32 %v3183, 7
    %v3185 = vsub.s32 2, %v3184
    %v3186 = vrot.slane %v3173, %v3185
    %v3187 = vlaneseq
    %v3188 = vshrl.u32 %v3187, 7
    %v3189 = vsub.s32 3, %v3188
    %v3190 = vrot.slane %v3173, %v3189
    %3195 = vmatprep.subr.mxu0 %v3110
    %3196 = vmatpush1.msra.mxu0 %v3109
    %3197 = vmatprep.subr.mxu0 %v3114
    %3198 = vmatpush1.msra.mxu0 %v3113
    %3199 = vmatprep.subr.mxu0 %v3118
    %3200 = vmatpush1.msra.mxu0 %v3117
    %3201 = vmatprep.subr.mxu0 %v3122
    %3202 = vmatpush1.msra.mxu0 %v3121
    %3203 = vmatprep.subr.mxu0 %v3126
    %3204 = vmatpush1.msra.mxu0 %v3125
    %3205 = vmatprep.subr.mxu0 %v3130
    %3206 = vmatpush1.msra.mxu0 %v3129
    %3207 = vmatprep.subr.mxu0 %v3134
    %3208 = vmatpush1.msra.mxu0 %v3133
    %3209 = vmatprep.subr.mxu0 %v3138
    %3210 = vmatpush1.msra.mxu0 %v3137
    %3211 = vmatprep.subr.mxu0 %v3142
    %3212 = vmatpush1.msra.mxu0 %v3141
    %3213 = vmatprep.subr.mxu0 %v3146
    %3214 = vmatpush1.msra.mxu0 %v3145
    %3215 = vmatprep.subr.mxu0 %v3150
    %3216 = vmatpush1.msra.mxu0 %v3149
    %3217 = vmatprep.subr.mxu0 %v3154
    %3218 = vmatpush1.msra.mxu0 %v3153
    %3219 = vmatprep.subr.mxu0 %v3158
    %3220 = vmatpush1.msra.mxu0 %v3157
    %3221 = vmatprep.subr.mxu0 %v3162
    %3222 = vmatpush1.msra.mxu0 %v3161
    %3223 = vmatprep.subr.mxu0 %v3166
    %3224 = vmatpush1.msra.mxu0 %v3165
    %3225 = vmatprep.subr.mxu0 %v3170
    %3226 = vmatpush1.msra.mxu0 %v3169
    %3227 = vmatprep.subr.mxu0 0.0
    %3228 = vmatpush1.msra.mxu0 0.0
    %3229 = vmatprep.subr.mxu0 0.0
    %3230 = vmatpush1.msra.mxu0 0.0
    %3231 = vmatprep.subr.mxu0 0.0
    %3232 = vmatpush1.msra.mxu0 0.0
    %3233 = vmatprep.subr.mxu0 0.0
    %3234 = vmatpush1.msra.mxu0 0.0
    %3235 = vmatprep.subr.mxu0 0.0
    %3236 = vmatpush1.msra.mxu0 0.0
    %3237 = vmatprep.subr.mxu0 0.0
    %3238 = vmatpush1.msra.mxu0 0.0
    %3239 = vmatprep.subr.mxu0 0.0
    %3240 = vmatpush1.msra.mxu0 0.0
    %3241 = vmatprep.subr.mxu0 0.0
    %3242 = vmatpush1.msra.mxu0 0.0
    %3243 = vmatprep.subr.mxu0 0.0
    %3244 = vmatpush1.msra.mxu0 0.0
    %3245 = vmatprep.subr.mxu0 0.0
    %3246 = vmatpush1.msra.mxu0 0.0
    %3247 = vmatprep.subr.mxu0 0.0
    %3248 = vmatpush1.msra.mxu0 0.0
    %3249 = vmatprep.subr.mxu0 0.0
    %3250 = vmatpush1.msra.mxu0 0.0
    %3251 = vmatprep.subr.mxu0 0.0
    %3252 = vmatpush1.msra.mxu0 0.0
    %3253 = vmatprep.subr.mxu0 0.0
    %3254 = vmatpush1.msra.mxu0 0.0
    %3255 = vmatprep.subr.mxu0 0.0
    %3256 = vmatpush1.msra.mxu0 0.0
    %3257 = vmatprep.subr.mxu0 0.0
    %3258 = vmatpush1.msra.mxu0 0.0
    %3259 = vmatprep.mubr.f32.mxu0 0.0
    %3260 = vmatmul.mubr.f32.gmra.mrb[0].mxu0 %v1831
    %v3261 = vpop.f32.mrb[0].mxu0
    %v3262 = vadd.f32 %v3178, %v3261
    %v3263 = vpop.f32.mrb[0].mxu0
    %v3264 = vadd.f32 %v3182, %v3263
    %3265 = vmatprep.mubr.f32.mxu0 0.0
    %3266 = vmatmul.mubr.f32.gmra.mrb[0].mxu0 %v1832
    %v3267 = vpop.f32.mrb[0].mxu0
    %v3268 = vadd.f32 %v3178, %v3267
    %v3269 = vpop.f32.mrb[0].mxu0
    %v3270 = vadd.f32 %v3182, %v3269
    %3271 = vmatprep.mubr.f32.mxu0 0.0
    %3272 = vmatmul.mubr.f32.gmra.mrb[0].mxu0 %v1833
    %v3273 = vpop.f32.mrb[0].mxu0
    %v3274 = vadd.f32 %v3178, %v3273
    %v3275 = vpop.f32.mrb[0].mxu0
    %v3276 = vadd.f32 %v3182, %v3275
    %3277 = vmatprep.mubr.f32.mxu0 0.0
    %3278 = vmatmul.mubr.f32.gmra.mrb[0].mxu0 %v3099
    %v3279 = vpop.f32.mrb[0].mxu0
    %v3280 = vadd.f32 %v3178, %v3279
    %v3281 = vpop.f32.mrb[0].mxu0
    %v3282 = vadd.f32 %v3182, %v3281
    %3283 = vmatprep.mubr.f32.mxu0 0.0
    %3284 = vmatmul.mubr.f32.gmra.mrb[0].mxu0 %v3100
    %v3285 = vpop.f32.mrb[0].mxu0
    %v3286 = vadd.f32 %v3178, %v3285
    %v3287 = vpop.f32.mrb[0].mxu0
    %v3288 = vadd.f32 %v3182, %v3287
    %3289 = vdwg.mxu0
    %3290 = vmatprep.subr.mxu0 %v3112
    %3291 = vmatpush1.msra.mxu0 %v3111
    %3292 = vmatprep.subr.mxu0 %v3116
    %3293 = vmatpush1.msra.mxu0 %v3115
    %3294 = vmatprep.subr.mxu0 %v3120
    %3295 = vmatpush1.msra.mxu0 %v3119
    %3296 = vmatprep.subr.mxu0 %v3124
    %3297 = vmatpush1.msra.mxu0 %v3123
    %3298 = vmatprep.subr.mxu0 %v3128
    %3299 = vmatpush1.msra.mxu0 %v3127
    %3300 = vmatprep.subr.mxu0 %v3132
    %3301 = vmatpush1.msra.mxu0 %v3131
    %3302 = vmatprep.subr.mxu0 %v3136
    %3303 = vmatpush1.msra.mxu0 %v3135
    %3304 = vmatprep.subr.mxu0 %v3140
    %3305 = vmatpush1.msra.mxu0 %v3139
    %3306 = vmatprep.subr.mxu0 %v3144
    %3307 = vmatpush1.msra.mxu0 %v3143
    %3308 = vmatprep.subr.mxu0 %v3148
    %3309 = vmatpush1.msra.mxu0 %v3147
    %3310 = vmatprep.subr.mxu0 %v3152
    %3311 = vmatpush1.msra.mxu0 %v3151
    %3312 = vmatprep.subr.mxu0 %v3156
    %3313 = vmatpush1.msra.mxu0 %v3155
    %3314 = vmatprep.subr.mxu0 %v3160
    %3315 = vmatpush1.msra.mxu0 %v3159
    %3316 = vmatprep.subr.mxu0 %v3164
    %3317 = vmatpush1.msra.mxu0 %v3163
    %3318 = vmatprep.subr.mxu0 %v3168
    %3319 = vmatpush1.msra.mxu0 %v3167
    %3320 = vmatprep.subr.mxu0 %v3172
    %3321 = vmatpush1.msra.mxu0 %v3171
    %3322 = vmatprep.subr.mxu0 0.0
    %3323 = vmatpush1.msra.mxu0 0.0
    %3324 = vmatprep.subr.mxu0 0.0
    %3325 = vmatpush1.msra.mxu0 0.0
    %3326 = vmatprep.subr.mxu0 0.0
    %3327 = vmatpush1.msra.mxu0 0.0
    %3328 = vmatprep.subr.mxu0 0.0
    %3329 = vmatpush1.msra.mxu0 0.0
    %3330 = vmatprep.subr.mxu0 0.0
    %3331 = vmatpush1.msra.mxu0 0.0
    %3332 = vmatprep.subr.mxu0 0.0
    %3333 = vmatpush1.msra.mxu0 0.0
    %3334 = vmatprep.subr.mxu0 0.0
    %3335 = vmatpush1.msra.mxu0 0.0
    %3336 = vmatprep.subr.mxu0 0.0
    %3337 = vmatpush1.msra.mxu0 0.0
    %3338 = vmatprep.subr.mxu0 0.0
    %3339 = vmatpush1.msra.mxu0 0.0
    %3340 = vmatprep.subr.mxu0 0.0
    %3341 = vmatpush1.msra.mxu0 0.0
    %3342 = vmatprep.subr.mxu0 0.0
    %3343 = vmatpush1.msra.mxu0 0.0
    %3344 = vmatprep.subr.mxu0 0.0
    %3345 = vmatpush1.msra.mxu0 0.0
    %3346 = vmatprep.subr.mxu0 0.0
    %3347 = vmatpush1.msra.mxu0 0.0
    %3348 = vmatprep.subr.mxu0 0.0
    %3349 = vmatpush1.msra.mxu0 0.0
    %3350 = vmatprep.subr.mxu0 0.0
    %3351 = vmatpush1.msra.mxu0 0.0
    %3352 = vmatprep.subr.mxu0 0.0
    %3353 = vmatpush1.msra.mxu0 0.0
    %3354 = vmatprep.mubr.f32.mxu0 0.0
    %3355 = vmatmul.mubr.f32.gmra.mrb[0].mxu0 %v1831
    %v3356 = vpop.f32.mrb[0].mxu0
    %v3357 = vadd.f32 %v3186, %v3356
    %v3358 = vpop.f32.mrb[0].mxu0
    %v3359 = vadd.f32 %v3190, %v3358
    %3360 = vmatprep.mubr.f32.mxu0 0.0
    %3361 = vmatmul.mubr.f32.gmra.mrb[0].mxu0 %v1832
    %v3362 = vpop.f32.mrb[0].mxu0
    %v3363 = vadd.f32 %v3186, %v3362
    %v3364 = vpop.f32.mrb[0].mxu0
    %v3365 = vadd.f32 %v3190, %v3364
    %3366 = vmatprep.mubr.f32.mxu0 0.0
    %3367 = vmatmul.mubr.f32.gmra.mrb[0].mxu0 %v1833
    %v3368 = vpop.f32.mrb[0].mxu0
    %v3369 = vadd.f32 %v3186, %v3368
    %v3370 = vpop.f32.mrb[0].mxu0
    %v3371 = vadd.f32 %v3190, %v3370
    %3372 = vmatprep.mubr.f32.mxu0 0.0
    %3373 = vmatmul.mubr.f32.gmra.mrb[0].mxu0 %v3099
    %v3374 = vpop.f32.mrb[0].mxu0
    %v3375 = vadd.f32 %v3186, %v3374
    %v3376 = vpop.f32.mrb[0].mxu0
    %v3377 = vadd.f32 %v3190, %v3376
    %3378 = vmatprep.mubr.f32.mxu0 0.0
    %3379 = vmatmul.mubr.f32.gmra.mrb[0].mxu0 %v3100
    %v3380 = vpop.f32.mrb[0].mxu0
    %v3381 = vadd.f32 %v3186, %v3380
    %v3382 = vpop.f32.mrb[0].mxu0
    %v3383 = vadd.f32 %v3190, %v3382
    %3384 = vdwg.mxu0
    %v3385 = vmul.f32 %v3262, 0.5
    %v3386 = vmul.f32 %v3264, 0.5
    %v3387 = vmul.f32 %v3357, 0.5
    %v3388 = vmul.f32 %v3359, 0.5
    %v3389 = vmul.f32 %v3268, 0.5
    %v3390 = vmul.f32 %v3270, 0.5
    %v3391 = vmul.f32 %v3363, 0.5
    %v3392 = vmul.f32 %v3365, 0.5
    %v3393 = vmul.f32 %v3274, 0.5
    %v3394 = vmul.f32 %v3276, 0.5
    %v3395 = vmul.f32 %v3369, 0.5
    %v3396 = vmul.f32 %v3371, 0.5
    %v3397 = vmul.f32 %v3280, 0.5
    %v3398 = vmul.f32 %v3282, 0.5
    %v3399 = vmul.f32 %v3375, 0.5
    %v3400 = vmul.f32 %v3377, 0.5
    %v3401 = vmul.f32 %v3286, 0.5
    %v3402 = vmul.f32 %v3288, 0.5
    %v3403 = vmul.f32 %v3381, 0.5
    %v3404 = vmul.f32 %v3383, 0.5
    %v3405 = vmul.f32 %v3262, 0.044715
    %v3406 = vmul.f32 %v3264, 0.044715
    %v3407 = vmul.f32 %v3357, 0.044715
    %v3408 = vmul.f32 %v3359, 0.044715
    %v3409 = vmul.f32 %v3268, 0.044715
    %v3410 = vmul.f32 %v3270, 0.044715
    %v3411 = vmul.f32 %v3363, 0.044715
    %v3412 = vmul.f32 %v3365, 0.044715
    %v3413 = vmul.f32 %v3274, 0.044715
    %v3414 = vmul.f32 %v3276, 0.044715
    %v3415 = vmul.f32 %v3369, 0.044715
    %v3416 = vmul.f32 %v3371, 0.044715
    %v3417 = vmul.f32 %v3280, 0.044715
    %v3418 = vmul.f32 %v3282, 0.044715
    %v3419 = vmul.f32 %v3375, 0.044715
    %v3420 = vmul.f32 %v3377, 0.044715
    %v3421 = vmul.f32 %v3286, 0.044715
    %v3422 = vmul.f32 %v3288, 0.044715
    %v3423 = vmul.f32 %v3381, 0.044715
    %v3424 = vmul.f32 %v3383, 0.044715
    %v3425 = vmul.f32 %v3405, %v3262
    %v3426 = vmul.f32 %v3406, %v3264
    %v3427 = vmul.f32 %v3407, %v3357
    %v3428 = vmul.f32 %v3408, %v3359
    %v3429 = vmul.f32 %v3409, %v3268
    %v3430 = vmul.f32 %v3410, %v3270
    %v3431 = vmul.f32 %v3411, %v3363
    %v3432 = vmul.f32 %v3412, %v3365
    %v3433 = vmul.f32 %v3413, %v3274
    %v3434 = vmul.f32 %v3414, %v3276
    %v3435 = vmul.f32 %v3415, %v3369
    %v3436 = vmul.f32 %v3416, %v3371
    %v3437 = vmul.f32 %v3417, %v3280
    %v3438 = vmul.f32 %v3418, %v3282
    %v3439 = vmul.f32 %v3419, %v3375
    %v3440 = vmul.f32 %v3420, %v3377
    %v3441 = vmul.f32 %v3421, %v3286
    %v3442 = vmul.f32 %v3422, %v3288
    %v3443 = vmul.f32 %v3423, %v3381
    %v3444 = vmul.f32 %v3424, %v3383
    %v3445 = vmul.f32 %v3425, %v3262
    %v3446 = vmul.f32 %v3426, %v3264
    %v3447 = vmul.f32 %v3427, %v3357
    %v3448 = vmul.f32 %v3428, %v3359
    %v3449 = vmul.f32 %v3429, %v3268
    %v3450 = vmul.f32 %v3430, %v3270
    %v3451 = vmul.f32 %v3431, %v3363
    %v3452 = vmul.f32 %v3432, %v3365
    %v3453 = vmul.f32 %v3433, %v3274
    %v3454 = vmul.f32 %v3434, %v3276
    %v3455 = vmul.f32 %v3435, %v3369
    %v3456 = vmul.f32 %v3436, %v3371
    %v3457 = vmul.f32 %v3437, %v3280
    %v3458 = vmul.f32 %v3438, %v3282
    %v3459 = vmul.f32 %v3439, %v3375
    %v3460 = vmul.f32 %v3440, %v3377
    %v3461 = vmul.f32 %v3441, %v3286
    %v3462 = vmul.f32 %v3442, %v3288
    %v3463 = vmul.f32 %v3443, %v3381
    %v3464 = vmul.f32 %v3444, %v3383
    %v3465 = vadd.f32 %v3262, %v3445
    %v3466 = vadd.f32 %v3264, %v3446
    %v3467 = vadd.f32 %v3357, %v3447
    %v3468 = vadd.f32 %v3359, %v3448
    %v3469 = vadd.f32 %v3268, %v3449
    %v3470 = vadd.f32 %v3270, %v3450
    %v3471 = vadd.f32 %v3363, %v3451
    %v3472 = vadd.f32 %v3365, %v3452
    %v3473 = vadd.f32 %v3274, %v3453
    %v3474 = vadd.f32 %v3276, %v3454
    %v3475 = vadd.f32 %v3369, %v3455
    %v3476 = vadd.f32 %v3371, %v3456
    %v3477 = vadd.f32 %v3280, %v3457
    %v3478 = vadd.f32 %v3282, %v3458
    %v3479 = vadd.f32 %v3375, %v3459
    %v3480 = vadd.f32 %v3377, %v3460
    %v3481 = vadd.f32 %v3286, %v3461
    %v3482 = vadd.f32 %v3288, %v3462
    %v3483 = vadd.f32 %v3381, %v3463
    %v3484 = vadd.f32 %v3383, %v3464
    %v3485 = vmul.f32 %v3465, 0.7978846
    %v3486 = vmul.f32 %v3466, 0.7978846
    %v3487 = vmul.f32 %v3467, 0.7978846
    %v3488 = vmul.f32 %v3468, 0.7978846
    %v3489 = vmul.f32 %v3469, 0.7978846
    %v3490 = vmul.f32 %v3470, 0.7978846
    %v3491 = vmul.f32 %v3471, 0.7978846
    %v3492 = vmul.f32 %v3472, 0.7978846
    %v3493 = vmul.f32 %v3473, 0.7978846
    %v3494 = vmul.f32 %v3474, 0.7978846
    %v3495 = vmul.f32 %v3475, 0.7978846
    %v3496 = vmul.f32 %v3476, 0.7978846
    %v3497 = vmul.f32 %v3477, 0.7978846
    %v3498 = vmul.f32 %v3478, 0.7978846
    %v3499 = vmul.f32 %v3479, 0.7978846
    %v3500 = vmul.f32 %v3480, 0.7978846
    %v3501 = vmul.f32 %v3481, 0.7978846
    %v3502 = vmul.f32 %v3482, 0.7978846
    %v3503 = vmul.f32 %v3483, 0.7978846
    %v3504 = vmul.f32 %v3484, 0.7978846
    %v3505 = vtanh.pop %v3485
    %v3506 = vtanh.pop %v3486
    %v3507 = vtanh.pop %v3487
    %v3508 = vtanh.pop %v3488
    %v3509 = vtanh.pop %v3489
    %v3510 = vtanh.pop %v3490
    %v3511 = vtanh.pop %v3491
    %v3512 = vtanh.pop %v3492
    %v3513 = vtanh.pop %v3493
    %v3514 = vtanh.pop %v3494
    %v3515 = vtanh.pop %v3495
    %v3516 = vtanh.pop %v3496
    %v3517 = vtanh.pop %v3497
    %v3518 = vtanh.pop %v3498
    %v3519 = vtanh.pop %v3499
    %v3520 = vtanh.pop %v3500
    %v3521 = vtanh.pop %v3501
    %v3522 = vtanh.pop %v3502
    %v3523 = vtanh.pop %v3503
    %v3524 = vtanh.pop %v3504
    %v3525 = vadd.f32 %v3505, 1.0
    %v3526 = vadd.f32 %v3506, 1.0
    %v3527 = vadd.f32 %v3507, 1.0
    %v3528 = vadd.f32 %v3508, 1.0
    %v3529 = vadd.f32 %v3509, 1.0
    %v3530 = vadd.f32 %v3510, 1.0
    %v3531 = vadd.f32 %v3511, 1.0
    %v3532 = vadd.f32 %v3512, 1.0
    %v3533 = vadd.f32 %v3513, 1.0
    %v3534 = vadd.f32 %v3514, 1.0
    %v3535 = vadd.f32 %v3515, 1.0
    %v3536 = vadd.f32 %v3516, 1.0
    %v3537 = vadd.f32 %v3517, 1.0
    %v3538 = vadd.f32 %v3518, 1.0
    %v3539 = vadd.f32 %v3519, 1.0
    %v3540 = vadd.f32 %v3520, 1.0
    %v3541 = vadd.f32 %v3521, 1.0
    %v3542 = vadd.f32 %v3522, 1.0
    %v3543 = vadd.f32 %v3523, 1.0
    %v3544 = vadd.f32 %v3524, 1.0
    %v3545 = vmul.f32 %v3385, %v3525
    %v3546 = vmul.f32 %v3386, %v3526
    %v3547 = vmul.f32 %v3387, %v3527
    %v3548 = vmul.f32 %v3388, %v3528
    %v3549 = vmul.f32 %v3389, %v3529
    %v3550 = vmul.f32 %v3390, %v3530
    %v3551 = vmul.f32 %v3391, %v3531
    %v3552 = vmul.f32 %v3392, %v3532
    %v3553 = vmul.f32 %v3393, %v3533
    %v3554 = vmul.f32 %v3394, %v3534
    %v3555 = vmul.f32 %v3395, %v3535
    %v3556 = vmul.f32 %v3396, %v3536
    %v3557 = vmul.f32 %v3397, %v3537
    %v3558 = vmul.f32 %v3398, %v3538
    %v3559 = vmul.f32 %v3399, %v3539
    %v3560 = vmul.f32 %v3400, %v3540
    %v3561 = vmul.f32 %v3401, %v3541
    %v3562 = vmul.f32 %v3402, %v3542
    %v3563 = vmul.f32 %v3403, %v3543
    %v3564 = vmul.f32 %v3404, %v3544
    %v3565 = vld [vmem:[#allocation10] sm:$0xff]
    %v3566 = vld [vmem:[#allocation10 + $0x8] sm:$0xff]
    %v3567 = vld [vmem:[#allocation10 + $0x10] sm:$0xff]
    %v3568 = vld [vmem:[#allocation10 + $0x18] sm:$0xff]
    %v3569 = vld [vmem:[#allocation10 + $0x20] sm:$0xff]
    %v3570 = vld [vmem:[#allocation10 + $0x28] sm:$0xff]
    %v3571 = vld [vmem:[#allocation10 + $0x30] sm:$0xff]
    %v3572 = vld [vmem:[#allocation10 + $0x38] sm:$0xff]
    %v3573 = vld [vmem:[#allocation10 + $0x40] sm:$0xff]
    %v3574 = vld [vmem:[#allocation10 + $0x48] sm:$0xff]
    %v3575 = vld [vmem:[#allocation10 + $0x50] sm:$0xff]
    %v3576 = vld [vmem:[#allocation10 + $0x58] sm:$0xff]
    %v3577 = vld [vmem:[#allocation10 + $0x60] sm:$0xff]
    %v3578 = vld [vmem:[#allocation10 + $0x68] sm:$0xff]
    %v3579 = vld [vmem:[#allocation10 + $0x70] sm:$0xff]
    %v3580 = vld [vmem:[#allocation10 + $0x78] sm:$0xff]
    %v3581 = vld [vmem:[#allocation10 + $0x80] sm:$0xff]
    %v3582 = vld [vmem:[#allocation10 + $0x88] sm:$0xff]
    %v3583 = vld [vmem:[#allocation10 + $0x90] sm:$0xff]
    %v3584 = vld [vmem:[#allocation10 + $0x98] sm:$0xff]
    %v3585 = vld [vmem:[#allocation10 + $0xa0] sm:$0xff]
    %v3586 = vld [vmem:[#allocation10 + $0xa8] sm:$0xff]
    %v3587 = vld [vmem:[#allocation10 + $0xb0] sm:$0xff]
    %v3588 = vld [vmem:[#allocation10 + $0xb8] sm:$0xff]
    %v3589 = vld [vmem:[#allocation10 + $0xc0] sm:$0xff]
    %v3590 = vld [vmem:[#allocation10 + $0xc8] sm:$0xff]
    %v3591 = vld [vmem:[#allocation10 + $0xd0] sm:$0xff]
    %v3592 = vld [vmem:[#allocation10 + $0xd8] sm:$0xff]
    %v3593 = vld [vmem:[#allocation10 + $0xe0] sm:$0xff]
    %v3594 = vld [vmem:[#allocation10 + $0xe8] sm:$0xff]
    %v3595 = vld [vmem:[#allocation10 + $0xf0] sm:$0xff]
    %v3596 = vld [vmem:[#allocation10 + $0xf8] sm:$0xff]
    %v3597 = vld [vmem:[#allocation10 + $0x100] sm:$0xff]
    %v3598 = vld [vmem:[#allocation10 + $0x108] sm:$0xff]
    %v3599 = vld [vmem:[#allocation10 + $0x110] sm:$0xff]
    %v3600 = vld [vmem:[#allocation10 + $0x118] sm:$0xff]
    %v3601 = vld [vmem:[#allocation10 + $0x120] sm:$0xff]
    %v3602 = vld [vmem:[#allocation10 + $0x128] sm:$0xff]
    %v3603 = vld [vmem:[#allocation10 + $0x130] sm:$0xff]
    %v3604 = vld [vmem:[#allocation10 + $0x138] sm:$0xff]
    %v3605 = vld [vmem:[#allocation10 + $0x140] sm:$0xff]
    %v3606 = vld [vmem:[#allocation10 + $0x148] sm:$0xff]
    %v3607 = vld [vmem:[#allocation10 + $0x150] sm:$0xff]
    %v3608 = vld [vmem:[#allocation10 + $0x158] sm:$0xff]
    %v3609 = vld [vmem:[#allocation10 + $0x160] sm:$0xff]
    %v3610 = vld [vmem:[#allocation10 + $0x168] sm:$0xff]
    %v3611 = vld [vmem:[#allocation10 + $0x170] sm:$0xff]
    %v3612 = vld [vmem:[#allocation10 + $0x178] sm:$0xff]
    %v3613 = vld [vmem:[#allocation10 + $0x180] sm:$0xff]
    %v3614 = vld [vmem:[#allocation10 + $0x188] sm:$0xff]
    %v3615 = vld [vmem:[#allocation10 + $0x190] sm:$0xff]
    %v3616 = vld [vmem:[#allocation10 + $0x198] sm:$0xff]
    %v3617 = vld [vmem:[#allocation10 + $0x1a0] sm:$0xff]
    %v3618 = vld [vmem:[#allocation10 + $0x1a8] sm:$0xff]
    %v3619 = vld [vmem:[#allocation10 + $0x1b0] sm:$0xff]
    %v3620 = vld [vmem:[#allocation10 + $0x1b8] sm:$0xff]
    %v3621 = vld [vmem:[#allocation10 + $0x1c0] sm:$0xff]
    %v3622 = vld [vmem:[#allocation10 + $0x1c8] sm:$0xff]
    %v3623 = vld [vmem:[#allocation10 + $0x1d0] sm:$0xff]
    %v3624 = vld [vmem:[#allocation10 + $0x1d8] sm:$0xff]
    %v3625 = vld [vmem:[#allocation10 + $0x1e0] sm:$0xff]
    %v3626 = vld [vmem:[#allocation10 + $0x1e8] sm:$0xff]
    %v3627 = vld [vmem:[#allocation10 + $0x1f0] sm:$0xff]
    %v3628 = vld [vmem:[#allocation10 + $0x1f8] sm:$0xff]
    %v3629 = vld [vmem:[%s21] sm:$0x1]
    %v3631 = vlaneseq
    %v3632 = vshrl.u32 %v3631, 7
    %v3633 = vsub.s32 0, %v3632
    %v3634 = vrot.slane %v3629, %v3633
    %3636 = vmatprep.subr.mxu0 0.0
    %3637 = vmatpush1.msra.mxu0 %v3565
    %3638 = vmatprep.subr.mxu0 0.0
    %3639 = vmatpush1.msra.mxu0 %v3566
    %3640 = vmatprep.subr.mxu0 0.0
    %3641 = vmatpush1.msra.mxu0 %v3567
    %3642 = vmatprep.subr.mxu0 0.0
    %3643 = vmatpush1.msra.mxu0 %v3568
    %3644 = vmatprep.subr.mxu0 0.0
    %3645 = vmatpush1.msra.mxu0 %v3569
    %3646 = vmatprep.subr.mxu0 0.0
    %3647 = vmatpush1.msra.mxu0 %v3570
    %3648 = vmatprep.subr.mxu0 0.0
    %3649 = vmatpush1.msra.mxu0 %v3571
    %3650 = vmatprep.subr.mxu0 0.0
    %3651 = vmatpush1.msra.mxu0 %v3572
    %3652 = vmatprep.subr.mxu0 0.0
    %3653 = vmatpush1.msra.mxu0 %v3573
    %3654 = vmatprep.subr.mxu0 0.0
    %3655 = vmatpush1.msra.mxu0 %v3574
    %3656 = vmatprep.subr.mxu0 0.0
    %3657 = vmatpush1.msra.mxu0 %v3575
    %3658 = vmatprep.subr.mxu0 0.0
    %3659 = vmatpush1.msra.mxu0 %v3576
    %3660 = vmatprep.subr.mxu0 0.0
    %3661 = vmatpush1.msra.mxu0 %v3577
    %3662 = vmatprep.subr.mxu0 0.0
    %3663 = vmatpush1.msra.mxu0 %v3578
    %3664 = vmatprep.subr.mxu0 0.0
    %3665 = vmatpush1.msra.mxu0 %v3579
    %3666 = vmatprep.subr.mxu0 0.0
    %3667 = vmatpush1.msra.mxu0 %v3580
    %3668 = vmatprep.subr.mxu0 0.0
    %3669 = vmatpush1.msra.mxu0 %v3581
    %3670 = vmatprep.subr.mxu0 0.0
    %3671 = vmatpush1.msra.mxu0 %v3582
    %3672 = vmatprep.subr.mxu0 0.0
    %3673 = vmatpush1.msra.mxu0 %v3583
    %3674 = vmatprep.subr.mxu0 0.0
    %3675 = vmatpush1.msra.mxu0 %v3584
    %3676 = vmatprep.subr.mxu0 0.0
    %3677 = vmatpush1.msra.mxu0 %v3585
    %3678 = vmatprep.subr.mxu0 0.0
    %3679 = vmatpush1.msra.mxu0 %v3586
    %3680 = vmatprep.subr.mxu0 0.0
    %3681 = vmatpush1.msra.mxu0 %v3587
    %3682 = vmatprep.subr.mxu0 0.0
    %3683 = vmatpush1.msra.mxu0 %v3588
    %3684 = vmatprep.subr.mxu0 0.0
    %3685 = vmatpush1.msra.mxu0 %v3589
    %3686 = vmatprep.subr.mxu0 0.0
    %3687 = vmatpush1.msra.mxu0 %v3590
    %3688 = vmatprep.subr.mxu0 0.0
    %3689 = vmatpush1.msra.mxu0 %v3591
    %3690 = vmatprep.subr.mxu0 0.0
    %3691 = vmatpush1.msra.mxu0 %v3592
    %3692 = vmatprep.subr.mxu0 0.0
    %3693 = vmatpush1.msra.mxu0 %v3593
    %3694 = vmatprep.subr.mxu0 0.0
    %3695 = vmatpush1.msra.mxu0 %v3594
    %3696 = vmatprep.subr.mxu0 0.0
    %3697 = vmatpush1.msra.mxu0 %v3595
    %3698 = vmatprep.subr.mxu0 0.0
    %3699 = vmatpush1.msra.mxu0 %v3596
    %3700 = vmatprep.mubr.f32.mxu0 %v3546
    %3701 = vmatmul.mubr.f32.gmra.mrb[0].mxu0 %v3545
    %v3702 = vpop.f32.mrb[0].mxu0
    %v3703 = vadd.f32 %v3634, %v3702
    %v3704 = vpop.f32.mrb[0].mxu0
    %3705 = vmatprep.mubr.f32.mxu0 %v3550
    %3706 = vmatmul.mubr.f32.gmra.mrb[0].mxu0 %v3549
    %v3707 = vpop.f32.mrb[0].mxu0
    %v3708 = vadd.f32 %v3634, %v3707
    %v3709 = vpop.f32.mrb[0].mxu0
    %3710 = vmatprep.mubr.f32.mxu0 %v3554
    %3711 = vmatmul.mubr.f32.gmra.mrb[0].mxu0 %v3553
    %v3712 = vpop.f32.mrb[0].mxu0
    %v3713 = vadd.f32 %v3634, %v3712
    %v3714 = vpop.f32.mrb[0].mxu0
    %3715 = vmatprep.mubr.f32.mxu0 %v3558
    %3716 = vmatmul.mubr.f32.gmra.mrb[0].mxu0 %v3557
    %v3717 = vpop.f32.mrb[0].mxu0
    %v3718 = vadd.f32 %v3634, %v3717
    %v3719 = vpop.f32.mrb[0].mxu0
    %3720 = vmatprep.mubr.f32.mxu0 %v3562
    %3721 = vmatmul.mubr.f32.gmra.mrb[0].mxu0 %v3561
    %v3722 = vpop.f32.mrb[0].mxu0
    %v3723 = vadd.f32 %v3634, %v3722
    %v3724 = vpop.f32.mrb[0].mxu0
    %3725 = vdwg.mxu0
    %3726 = vmatprep.subr.mxu0 0.0
    %3727 = vmatpush1.msra.mxu0 %v3597
    %3728 = vmatprep.subr.mxu0 0.0
    %3729 = vmatpush1.msra.mxu0 %v3598
    %3730 = vmatprep.subr.mxu0 0.0
    %3731 = vmatpush1.msra.mxu0 %v3599
    %3732 = vmatprep.subr.mxu0 0.0
    %3733 = vmatpush1.msra.mxu0 %v3600
    %3734 = vmatprep.subr.mxu0 0.0
    %3735 = vmatpush1.msra.mxu0 %v3601
    %3736 = vmatprep.subr.mxu0 0.0
    %3737 = vmatpush1.msra.mxu0 %v3602
    %3738 = vmatprep.subr.mxu0 0.0
    %3739 = vmatpush1.msra.mxu0 %v3603
    %3740 = vmatprep.subr.mxu0 0.0
    %3741 = vmatpush1.msra.mxu0 %v3604
    %3742 = vmatprep.subr.mxu0 0.0
    %3743 = vmatpush1.msra.mxu0 %v3605
    %3744 = vmatprep.subr.mxu0 0.0
    %3745 = vmatpush1.msra.mxu0 %v3606
    %3746 = vmatprep.subr.mxu0 0.0
    %3747 = vmatpush1.msra.mxu0 %v3607
    %3748 = vmatprep.subr.mxu0 0.0
    %3749 = vmatpush1.msra.mxu0 %v3608
    %3750 = vmatprep.subr.mxu0 0.0
    %3751 = vmatpush1.msra.mxu0 %v3609
    %3752 = vmatprep.subr.mxu0 0.0
    %3753 = vmatpush1.msra.mxu0 %v3610
    %3754 = vmatprep.subr.mxu0 0.0
    %3755 = vmatpush1.msra.mxu0 %v3611
    %3756 = vmatprep.subr.mxu0 0.0
    %3757 = vmatpush1.msra.mxu0 %v3612
    %3758 = vmatprep.subr.mxu0 0.0
    %3759 = vmatpush1.msra.mxu0 %v3613
    %3760 = vmatprep.subr.mxu0 0.0
    %3761 = vmatpush1.msra.mxu0 %v3614
    %3762 = vmatprep.subr.mxu0 0.0
    %3763 = vmatpush1.msra.mxu0 %v3615
    %3764 = vmatprep.subr.mxu0 0.0
    %3765 = vmatpush1.msra.mxu0 %v3616
    %3766 = vmatprep.subr.mxu0 0.0
    %3767 = vmatpush1.msra.mxu0 %v3617
    %3768 = vmatprep.subr.mxu0 0.0
    %3769 = vmatpush1.msra.mxu0 %v3618
    %3770 = vmatprep.subr.mxu0 0.0
    %3771 = vmatpush1.msra.mxu0 %v3619
    %3772 = vmatprep.subr.mxu0 0.0
    %3773 = vmatpush1.msra.mxu0 %v3620
    %3774 = vmatprep.subr.mxu0 0.0
    %3775 = vmatpush1.msra.mxu0 %v3621
    %3776 = vmatprep.subr.mxu0 0.0
    %3777 = vmatpush1.msra.mxu0 %v3622
    %3778 = vmatprep.subr.mxu0 0.0
    %3779 = vmatpush1.msra.mxu0 %v3623
    %3780 = vmatprep.subr.mxu0 0.0
    %3781 = vmatpush1.msra.mxu0 %v3624
    %3782 = vmatprep.subr.mxu0 0.0
    %3783 = vmatpush1.msra.mxu0 %v3625
    %3784 = vmatprep.subr.mxu0 0.0
    %3785 = vmatpush1.msra.mxu0 %v3626
    %3786 = vmatprep.subr.mxu0 0.0
    %3787 = vmatpush1.msra.mxu0 %v3627
    %3788 = vmatprep.subr.mxu0 0.0
    %3789 = vmatpush1.msra.mxu0 %v3628
    %3790 = vmatprep.mubr.f32.mxu0 %v3548
    %3791 = vmatmul.mubr.f32.gmra.mrb[0].mxu0 %v3547
    %v3792 = vpop.f32.mrb[0].mxu0
    %v3793 = vadd.f32 %v3703, %v3792
    %v3794 = vpop.f32.mrb[0].mxu0
    %3795 = vmatprep.mubr.f32.mxu0 %v3552
    %3796 = vmatmul.mubr.f32.gmra.mrb[0].mxu0 %v3551
    %v3797 = vpop.f32.mrb[0].mxu0
    %v3798 = vadd.f32 %v3708, %v3797
    %v3799 = vpop.f32.mrb[0].mxu0
    %3800 = vmatprep.mubr.f32.mxu0 %v3556
    %3801 = vmatmul.mubr.f32.gmra.mrb[0].mxu0 %v3555
    %v3802 = vpop.f32.mrb[0].mxu0
    %v3803 = vadd.f32 %v3713, %v3802
    %v3804 = vpop.f32.mrb[0].mxu0
    %3805 = vmatprep.mubr.f32.mxu0 %v3560
    %3806 = vmatmul.mubr.f32.gmra.mrb[0].mxu0 %v3559
    %v3807 = vpop.f32.mrb[0].mxu0
    %v3808 = vadd.f32 %v3718, %v3807
    %v3809 = vpop.f32.mrb[0].mxu0
    %3810 = vmatprep.mubr.f32.mxu0 %v3564
    %3811 = vmatmul.mubr.f32.gmra.mrb[0].mxu0 %v3563
    %v3812 = vpop.f32.mrb[0].mxu0
    %v3813 = vadd.f32 %v3723, %v3812
    %v3814 = vpop.f32.mrb[0].mxu0
    %3815 = vdwg.mxu0
    %v3816 = vadd.f32 %v1831, %v3793
    %v3817 = vadd.f32 %v1832, %v3798
    %v3818 = vadd.f32 %v1833, %v3803
    %v3819 = vadd.f32 %v3099, %v3808
    %v3820 = vadd.f32 %v3100, %v3813
    %3821 = vadd.xlane.f32.xlu0 %v3816
    %v3822 = vpop.xlane.xlu0 %3821
    %3823 = vadd.xlane.f32.xlu0 %v3817
    %v3824 = vpop.xlane.xlu0 %3823
    %3825 = vadd.xlane.f32.xlu0 %v3818
    %v3826 = vpop.xlane.xlu0 %3825
    %3827 = vadd.xlane.f32.xlu0 %v3819
    %v3828 = vpop.xlane.xlu0 %3827
    %3829 = vadd.xlane.f32.xlu0 %v3820
    %v3830 = vpop.xlane.xlu0 %3829
    %v3831 = vmul.f32 %v3822, %v1129
    %v3832 = vmul.f32 %v3824, %v1129
    %v3833 = vmul.f32 %v3826, %v1129
    %v3834 = vmul.f32 %v3828, %v1129
    %v3835 = vmul.f32 %v3830, %v1129
    %v3836 = vsub.f32 %v3816, %v3831
    %v3837 = vsub.f32 %v3817, %v3832
    %v3838 = vsub.f32 %v3818, %v3833
    %v3839 = vsub.f32 %v3819, %v3834
    %v3840 = vsub.f32 %v3820, %v3835
    %v3841 = vmul.f32 %v3836, %v3836
    %v3842 = vmul.f32 %v3837, %v3837
    %v3843 = vmul.f32 %v3838, %v3838
    %v3844 = vmul.f32 %v3839, %v3839
    %v3845 = vmul.f32 %v3840, %v3840
    %3846 = vadd.xlane.f32.xlu0 %v3841
    %v3847 = vpop.xlane.xlu0 %3846
    %3848 = vadd.xlane.f32.xlu0 %v3842
    %v3849 = vpop.xlane.xlu0 %3848
    %3850 = vadd.xlane.f32.xlu0 %v3843
    %v3851 = vpop.xlane.xlu0 %3850
    %3852 = vadd.xlane.f32.xlu0 %v3844
    %v3853 = vpop.xlane.xlu0 %3852
    %3854 = vadd.xlane.f32.xlu0 %v3845
    %v3855 = vpop.xlane.xlu0 %3854
    %v3856 = vmul.f32 %v3847, %v1129
    %v3857 = vmul.f32 %v3849, %v1129
    %v3858 = vmul.f32 %v3851, %v1129
    %v3859 = vmul.f32 %v3853, %v1129
    %v3860 = vmul.f32 %v3855, %v1129
    %v3861 = vadd.f32 %v3856, 1e-05
    %v3862 = vadd.f32 %v3857, 1e-05
    %v3863 = vadd.f32 %v3858, 1e-05
    %v3864 = vadd.f32 %v3859, 1e-05
    %v3865 = vadd.f32 %v3860, 1e-05
    %v3866 = vrsqrt.pop %v3861
    %v3867 = vrsqrt.pop %v3862
    %v3868 = vrsqrt.pop %v3863
    %v3869 = vrsqrt.pop %v3864
    %v3870 = vrsqrt.pop %v3865
    %v3871 = vmul.f32 %v3836, %v3866
    %v3872 = vmul.f32 %v3837, %v3867
    %v3873 = vmul.f32 %v3838, %v3868
    %v3874 = vmul.f32 %v3839, %v3869
    %v3875 = vmul.f32 %v3840, %v3870
    %v3876 = vld [vmem:[%s22] sm:$0x1]
    %v3878 = vlaneseq
    %v3879 = vshrl.u32 %v3878, 7
    %v3880 = vsub.s32 0, %v3879
    %v3881 = vrot.slane %v3876, %v3880
    %v3883 = vmul.f32 %v3871, %v3881
    %v3884 = vmul.f32 %v3872, %v3881
    %v3885 = vmul.f32 %v3873, %v3881
    %v3886 = vmul.f32 %v3874, %v3881
    %v3887 = vmul.f32 %v3875, %v3881
    %v3888 = vld [vmem:[%s23] sm:$0x1]
    %v3890 = vlaneseq
    %v3891 = vshrl.u32 %v3890, 7
    %v3892 = vsub.s32 0, %v3891
    %v3893 = vrot.slane %v3888, %v3892
    %v3895 = vadd.f32 %v3883, %v3893
    %v3896 = vadd.f32 %v3884, %v3893
    %v3897 = vadd.f32 %v3885, %v3893
    %v3898 = vadd.f32 %v3886, %v3893
    %v3899 = vadd.f32 %v3887, %v3893
    %s3900 = scalar_lea.vmem %s26, 40
    %3901 = vst [vmem:[%s3900] sm:$0xff] %v3895
    %3902 = vst [vmem:[%s3900 + $0x8] sm:$0xff] %v3896
    %3903 = vst [vmem:[%s3900 + $0x10] sm:$0xff] %v3897
    %3904 = vst [vmem:[%s3900 + $0x18] sm:$0xff] %v3898
    %3905 = vst [vmem:[%s3900 + $0x20] sm:$0xff] %v3899
    %s3906 = scalar_lea.vmem [#allocation9], 512
    %v3907 = vld [vmem:[%s3906] sm:$0xff]
    %v3908 = vld [vmem:[%s3906 + $0x8] sm:$0xff]
    %v3909 = vld [vmem:[%s3906 + $0x10] sm:$0xff]
    %v3910 = vld [vmem:[%s3906 + $0x18] sm:$0xff]
    %v3911 = vld [vmem:[%s3906 + $0x20] sm:$0xff]
    %v3912 = vld [vmem:[%s3906 + $0x28] sm:$0xff]
    %v3913 = vld [vmem:[%s3906 + $0x30] sm:$0xff]
    %v3914 = vld [vmem:[%s3906 + $0x38] sm:$0xff]
    %v3915 = vld [vmem:[%s3906 + $0x40] sm:$0xff]
    %v3916 = vld [vmem:[%s3906 + $0x48] sm:$0xff]
    %v3917 = vld [vmem:[%s3906 + $0x50] sm:$0xff]
    %v3918 = vld [vmem:[%s3906 + $0x58] sm:$0xff]
    %v3919 = vld [vmem:[%s3906 + $0x60] sm:$0xff]
    %v3920 = vld [vmem:[%s3906 + $0x68] sm:$0xff]
    %v3921 = vld [vmem:[%s3906 + $0x70] sm:$0xff]
    %v3922 = vld [vmem:[%s3906 + $0x78] sm:$0xff]
    %v3923 = vld [vmem:[%s3906 + $0x80] sm:$0xff]
    %v3924 = vld [vmem:[%s3906 + $0x88] sm:$0xff]
    %v3925 = vld [vmem:[%s3906 + $0x90] sm:$0xff]
    %v3926 = vld [vmem:[%s3906 + $0x98] sm:$0xff]
    %v3927 = vld [vmem:[%s3906 + $0xa0] sm:$0xff]
    %v3928 = vld [vmem:[%s3906 + $0xa8] sm:$0xff]
    %v3929 = vld [vmem:[%s3906 + $0xb0] sm:$0xff]
    %v3930 = vld [vmem:[%s3906 + $0xb8] sm:$0xff]
    %v3931 = vld [vmem:[%s3906 + $0xc0] sm:$0xff]
    %v3932 = vld [vmem:[%s3906 + $0xc8] sm:$0xff]
    %v3933 = vld [vmem:[%s3906 + $0xd0] sm:$0xff]
    %v3934 = vld [vmem:[%s3906 + $0xd8] sm:$0xff]
    %v3935 = vld [vmem:[%s3906 + $0xe0] sm:$0xff]
    %v3936 = vld [vmem:[%s3906 + $0xe8] sm:$0xff]
    %v3937 = vld [vmem:[%s3906 + $0xf0] sm:$0xff]
    %v3938 = vld [vmem:[%s3906 + $0xf8] sm:$0xff]
    %v3939 = vld [vmem:[%s3906 + $0x100] sm:$0xff]
    %v3940 = vld [vmem:[%s3906 + $0x108] sm:$0xff]
    %v3941 = vld [vmem:[%s3906 + $0x110] sm:$0xff]
    %v3942 = vld [vmem:[%s3906 + $0x118] sm:$0xff]
    %v3943 = vld [vmem:[%s3906 + $0x120] sm:$0xff]
    %v3944 = vld [vmem:[%s3906 + $0x128] sm:$0xff]
    %v3945 = vld [vmem:[%s3906 + $0x130] sm:$0xff]
    %v3946 = vld [vmem:[%s3906 + $0x138] sm:$0xff]
    %v3947 = vld [vmem:[%s3906 + $0x140] sm:$0xff]
    %v3948 = vld [vmem:[%s3906 + $0x148] sm:$0xff]
    %v3949 = vld [vmem:[%s3906 + $0x150] sm:$0xff]
    %v3950 = vld [vmem:[%s3906 + $0x158] sm:$0xff]
    %v3951 = vld [vmem:[%s3906 + $0x160] sm:$0xff]
    %v3952 = vld [vmem:[%s3906 + $0x168] sm:$0xff]
    %v3953 = vld [vmem:[%s3906 + $0x170] sm:$0xff]
    %v3954 = vld [vmem:[%s3906 + $0x178] sm:$0xff]
    %v3955 = vld [vmem:[%s3906 + $0x180] sm:$0xff]
    %v3956 = vld [vmem:[%s3906 + $0x188] sm:$0xff]
    %v3957 = vld [vmem:[%s3906 + $0x190] sm:$0xff]
    %v3958 = vld [vmem:[%s3906 + $0x198] sm:$0xff]
    %v3959 = vld [vmem:[%s3906 + $0x1a0] sm:$0xff]
    %v3960 = vld [vmem:[%s3906 + $0x1a8] sm:$0xff]
    %v3961 = vld [vmem:[%s3906 + $0x1b0] sm:$0xff]
    %v3962 = vld [vmem:[%s3906 + $0x1b8] sm:$0xff]
    %v3963 = vld [vmem:[%s3906 + $0x1c0] sm:$0xff]
    %v3964 = vld [vmem:[%s3906 + $0x1c8] sm:$0xff]
    %v3965 = vld [vmem:[%s3906 + $0x1d0] sm:$0xff]
    %v3966 = vld [vmem:[%s3906 + $0x1d8] sm:$0xff]
    %v3967 = vld [vmem:[%s3906 + $0x1e0] sm:$0xff]
    %v3968 = vld [vmem:[%s3906 + $0x1e8] sm:$0xff]
    %v3969 = vld [vmem:[%s3906 + $0x1f0] sm:$0xff]
    %v3970 = vld [vmem:[%s3906 + $0x1f8] sm:$0xff]
    %s3971 = scalar_lea.vmem %s19, 4
    %v3972 = vld [vmem:[%s3971] sm:$0xf]
    %v3974 = vlaneseq
    %v3975 = vshrl.u32 %v3974, 7
    %v3976 = vsub.s32 0, %v3975
    %v3977 = vrot.slane %v3972, %v3976
    %v3978 = vlaneseq
    %v3979 = vshrl.u32 %v3978, 7
    %v3980 = vsub.s32 1, %v3979
    %v3981 = vrot.slane %v3972, %v3980
    %v3982 = vlaneseq
    %v3983 = vshrl.u32 %v3982, 7
    %v3984 = vsub.s32 2, %v3983
    %v3985 = vrot.slane %v3972, %v3984
    %v3986 = vlaneseq
    %v3987 = vshrl.u32 %v3986, 7
    %v3988 = vsub.s32 3, %v3987
    %v3989 = vrot.slane %v3972, %v3988
    %3994 = vmatprep.subr.mxu0 %v3908
    %3995 = vmatpush1.msra.mxu0 %v3907
    %3996 = vmatprep.subr.mxu0 %v3912
    %3997 = vmatpush1.msra.mxu0 %v3911
    %3998 = vmatprep.subr.mxu0 %v3916
    %3999 = vmatpush1.msra.mxu0 %v3915
    %4000 = vmatprep.subr.mxu0 %v3920
    %4001 = vmatpush1.msra.mxu0 %v3919
    %4002 = vmatprep.subr.mxu0 %v3924
    %4003 = vmatpush1.msra.mxu0 %v3923
    %4004 = vmatprep.subr.mxu0 %v3928
    %4005 = vmatpush1.msra.mxu0 %v3927
    %4006 = vmatprep.subr.mxu0 %v3932
    %4007 = vmatpush1.msra.mxu0 %v3931
    %4008 = vmatprep.subr.mxu0 %v3936
    %4009 = vmatpush1.msra.mxu0 %v3935
    %4010 = vmatprep.subr.mxu0 %v3940
    %4011 = vmatpush1.msra.mxu0 %v3939
    %4012 = vmatprep.subr.mxu0 %v3944
    %4013 = vmatpush1.msra.mxu0 %v3943
    %4014 = vmatprep.subr.mxu0 %v3948
    %4015 = vmatpush1.msra.mxu0 %v3947
    %4016 = vmatprep.subr.mxu0 %v3952
    %4017 = vmatpush1.msra.mxu0 %v3951
    %4018 = vmatprep.subr.mxu0 %v3956
    %4019 = vmatpush1.msra.mxu0 %v3955
    %4020 = vmatprep.subr.mxu0 %v3960
    %4021 = vmatpush1.msra.mxu0 %v3959
    %4022 = vmatprep.subr.mxu0 %v3964
    %4023 = vmatpush1.msra.mxu0 %v3963
    %4024 = vmatprep.subr.mxu0 %v3968
    %4025 = vmatpush1.msra.mxu0 %v3967
    %4026 = vmatprep.subr.mxu0 0.0
    %4027 = vmatpush1.msra.mxu0 0.0
    %4028 = vmatprep.subr.mxu0 0.0
    %4029 = vmatpush1.msra.mxu0 0.0
    %4030 = vmatprep.subr.mxu0 0.0
    %4031 = vmatpush1.msra.mxu0 0.0
    %4032 = vmatprep.subr.mxu0 0.0
    %4033 = vmatpush1.msra.mxu0 0.0
    %4034 = vmatprep.subr.mxu0 0.0
    %4035 = vmatpush1.msra.mxu0 0.0
    %4036 = vmatprep.subr.mxu0 0.0
    %4037 = vmatpush1.msra.mxu0 0.0
    %4038 = vmatprep.subr.mxu0 0.0
    %4039 = vmatpush1.msra.mxu0 0.0
    %4040 = vmatprep.subr.mxu0 0.0
    %4041 = vmatpush1.msra.mxu0 0.0
    %4042 = vmatprep.subr.mxu0 0.0
    %4043 = vmatpush1.msra.mxu0 0.0
    %4044 = vmatprep.subr.mxu0 0.0
    %4045 = vmatpush1.msra.mxu0 0.0
    %4046 = vmatprep.subr.mxu0 0.0
    %4047 = vmatpush1.msra.mxu0 0.0
    %4048 = vmatprep.subr.mxu0 0.0
    %4049 = vmatpush1.msra.mxu0 0.0
    %4050 = vmatprep.subr.mxu0 0.0
    %4051 = vmatpush1.msra.mxu0 0.0
    %4052 = vmatprep.subr.mxu0 0.0
    %4053 = vmatpush1.msra.mxu0 0.0
    %4054 = vmatprep.subr.mxu0 0.0
    %4055 = vmatpush1.msra.mxu0 0.0
    %4056 = vmatprep.subr.mxu0 0.0
    %4057 = vmatpush1.msra.mxu0 0.0
    %4058 = vmatprep.mubr.f32.mxu0 0.0
    %4059 = vmatmul.mubr.f32.gmra.mrb[0].mxu0 %v3895
    %v4060 = vpop.f32.mrb[0].mxu0
    %v4061 = vadd.f32 %v3977, %v4060
    %v4062 = vpop.f32.mrb[0].mxu0
    %v4063 = vadd.f32 %v3981, %v4062
    %4064 = vmatprep.mubr.f32.mxu0 0.0
    %4065 = vmatmul.mubr.f32.gmra.mrb[0].mxu0 %v3896
    %v4066 = vpop.f32.mrb[0].mxu0
    %v4067 = vadd.f32 %v3977, %v4066
    %v4068 = vpop.f32.mrb[0].mxu0
    %v4069 = vadd.f32 %v3981, %v4068
    %4070 = vmatprep.mubr.f32.mxu0 0.0
    %4071 = vmatmul.mubr.f32.gmra.mrb[0].mxu0 %v3897
    %v4072 = vpop.f32.mrb[0].mxu0
    %v4073 = vadd.f32 %v3977, %v4072
    %v4074 = vpop.f32.mrb[0].mxu0
    %v4075 = vadd.f32 %v3981, %v4074
    %4076 = vmatprep.mubr.f32.mxu0 0.0
    %4077 = vmatmul.mubr.f32.gmra.mrb[0].mxu0 %v3898
    %v4078 = vpop.f32.mrb[0].mxu0
    %v4079 = vadd.f32 %v3977, %v4078
    %v4080 = vpop.f32.mrb[0].mxu0
    %v4081 = vadd.f32 %v3981, %v4080
    %4082 = vmatprep.mubr.f32.mxu0 0.0
    %4083 = vmatmul.mubr.f32.gmra.mrb[0].mxu0 %v3899
    %v4084 = vpop.f32.mrb[0].mxu0
    %v4085 = vadd.f32 %v3977, %v4084
    %v4086 = vpop.f32.mrb[0].mxu0
    %v4087 = vadd.f32 %v3981, %v4086
    %4088 = vdwg.mxu0
    %4089 = vmatprep.subr.mxu0 %v3910
    %4090 = vmatpush1.msra.mxu0 %v3909
    %4091 = vmatprep.subr.mxu0 %v3914
    %4092 = vmatpush1.msra.mxu0 %v3913
    %4093 = vmatprep.subr.mxu0 %v3918
    %4094 = vmatpush1.msra.mxu0 %v3917
    %4095 = vmatprep.subr.mxu0 %v3922
    %4096 = vmatpush1.msra.mxu0 %v3921
    %4097 = vmatprep.subr.mxu0 %v3926
    %4098 = vmatpush1.msra.mxu0 %v3925
    %4099 = vmatprep.subr.mxu0 %v3930
    %4100 = vmatpush1.msra.mxu0 %v3929
    %4101 = vmatprep.subr.mxu0 %v3934
    %4102 = vmatpush1.msra.mxu0 %v3933
    %4103 = vmatprep.subr.mxu0 %v3938
    %4104 = vmatpush1.msra.mxu0 %v3937
    %4105 = vmatprep.subr.mxu0 %v3942
    %4106 = vmatpush1.msra.mxu0 %v3941
    %4107 = vmatprep.subr.mxu0 %v3946
    %4108 = vmatpush1.msra.mxu0 %v3945
    %4109 = vmatprep.subr.mxu0 %v3950
    %4110 = vmatpush1.msra.mxu0 %v3949
    %4111 = vmatprep.subr.mxu0 %v3954
    %4112 = vmatpush1.msra.mxu0 %v3953
    %4113 = vmatprep.subr.mxu0 %v3958
    %4114 = vmatpush1.msra.mxu0 %v3957
    %4115 = vmatprep.subr.mxu0 %v3962
    %4116 = vmatpush1.msra.mxu0 %v3961
    %4117 = vmatprep.subr.mxu0 %v3966
    %4118 = vmatpush1.msra.mxu0 %v3965
    %4119 = vmatprep.subr.mxu0 %v3970
    %4120 = vmatpush1.msra.mxu0 %v3969
    %4121 = vmatprep.subr.mxu0 0.0
    %4122 = vmatpush1.msra.mxu0 0.0
    %4123 = vmatprep.subr.mxu0 0.0
    %4124 = vmatpush1.msra.mxu0 0.0
    %4125 = vmatprep.subr.mxu0 0.0
    %4126 = vmatpush1.msra.mxu0 0.0
    %4127 = vmatprep.subr.mxu0 0.0
    %4128 = vmatpush1.msra.mxu0 0.0
    %4129 = vmatprep.subr.mxu0 0.0
    %4130 = vmatpush1.msra.mxu0 0.0
    %4131 = vmatprep.subr.mxu0 0.0
    %4132 = vmatpush1.msra.mxu0 0.0
    %4133 = vmatprep.subr.mxu0 0.0
    %4134 = vmatpush1.msra.mxu0 0.0
    %4135 = vmatprep.subr.mxu0 0.0
    %4136 = vmatpush1.msra.mxu0 0.0
    %4137 = vmatprep.subr.mxu0 0.0
    %4138 = vmatpush1.msra.mxu0 0.0
    %4139 = vmatprep.subr.mxu0 0.0
    %4140 = vmatpush1.msra.mxu0 0.0
    %4141 = vmatprep.subr.mxu0 0.0
    %4142 = vmatpush1.msra.mxu0 0.0
    %4143 = vmatprep.subr.mxu0 0.0
    %4144 = vmatpush1.msra.mxu0 0.0
    %4145 = vmatprep.subr.mxu0 0.0
    %4146 = vmatpush1.msra.mxu0 0.0
    %4147 = vmatprep.subr.mxu0 0.0
    %4148 = vmatpush1.msra.mxu0 0.0
    %4149 = vmatprep.subr.mxu0 0.0
    %4150 = vmatpush1.msra.mxu0 0.0
    %4151 = vmatprep.subr.mxu0 0.0
    %4152 = vmatpush1.msra.mxu0 0.0
    %4153 = vmatprep.mubr.f32.mxu0 0.0
    %4154 = vmatmul.mubr.f32.gmra.mrb[0].mxu0 %v3895
    %v4155 = vpop.f32.mrb[0].mxu0
    %v4156 = vadd.f32 %v3985, %v4155
    %v4157 = vpop.f32.mrb[0].mxu0
    %v4158 = vadd.f32 %v3989, %v4157
    %4159 = vmatprep.mubr.f32.mxu0 0.0
    %4160 = vmatmul.mubr.f32.gmra.mrb[0].mxu0 %v3896
    %v4161 = vpop.f32.mrb[0].mxu0
    %v4162 = vadd.f32 %v3985, %v4161
    %v4163 = vpop.f32.mrb[0].mxu0
    %v4164 = vadd.f32 %v3989, %v4163
    %4165 = vmatprep.mubr.f32.mxu0 0.0
    %4166 = vmatmul.mubr.f32.gmra.mrb[0].mxu0 %v3897
    %v4167 = vpop.f32.mrb[0].mxu0
    %v4168 = vadd.f32 %v3985, %v4167
    %v4169 = vpop.f32.mrb[0].mxu0
    %v4170 = vadd.f32 %v3989, %v4169
    %4171 = vmatprep.mubr.f32.mxu0 0.0
    %4172 = vmatmul.mubr.f32.gmra.mrb[0].mxu0 %v3898
    %v4173 = vpop.f32.mrb[0].mxu0
    %v4174 = vadd.f32 %v3985, %v4173
    %v4175 = vpop.f32.mrb[0].mxu0
    %v4176 = vadd.f32 %v3989, %v4175
    %4177 = vmatprep.mubr.f32.mxu0 0.0
    %4178 = vmatmul.mubr.f32.gmra.mrb[0].mxu0 %v3899
    %v4179 = vpop.f32.mrb[0].mxu0
    %v4180 = vadd.f32 %v3985, %v4179
    %v4181 = vpop.f32.mrb[0].mxu0
    %v4182 = vadd.f32 %v3989, %v4181
    %4183 = vdwg.mxu0
    %v4184 = vmul.f32 %v4061, 0.5
    %v4185 = vmul.f32 %v4063, 0.5
    %v4186 = vmul.f32 %v4156, 0.5
    %v4187 = vmul.f32 %v4158, 0.5
    %v4188 = vmul.f32 %v4067, 0.5
    %v4189 = vmul.f32 %v4069, 0.5
    %v4190 = vmul.f32 %v4162, 0.5
    %v4191 = vmul.f32 %v4164, 0.5
    %v4192 = vmul.f32 %v4073, 0.5
    %v4193 = vmul.f32 %v4075, 0.5
    %v4194 = vmul.f32 %v4168, 0.5
    %v4195 = vmul.f32 %v4170, 0.5
    %v4196 = vmul.f32 %v4079, 0.5
    %v4197 = vmul.f32 %v4081, 0.5
    %v4198 = vmul.f32 %v4174, 0.5
    %v4199 = vmul.f32 %v4176, 0.5
    %v4200 = vmul.f32 %v4085, 0.5
    %v4201 = vmul.f32 %v4087, 0.5
    %v4202 = vmul.f32 %v4180, 0.5
    %v4203 = vmul.f32 %v4182, 0.5
    %v4204 = vmul.f32 %v4061, 0.044715
    %v4205 = vmul.f32 %v4063, 0.044715
    %v4206 = vmul.f32 %v4156, 0.044715
    %v4207 = vmul.f32 %v4158, 0.044715
    %v4208 = vmul.f32 %v4067, 0.044715
    %v4209 = vmul.f32 %v4069, 0.044715
    %v4210 = vmul.f32 %v4162, 0.044715
    %v4211 = vmul.f32 %v4164, 0.044715
    %v4212 = vmul.f32 %v4073, 0.044715
    %v4213 = vmul.f32 %v4075, 0.044715
    %v4214 = vmul.f32 %v4168, 0.044715
    %v4215 = vmul.f32 %v4170, 0.044715
    %v4216 = vmul.f32 %v4079, 0.044715
    %v4217 = vmul.f32 %v4081, 0.044715
    %v4218 = vmul.f32 %v4174, 0.044715
    %v4219 = vmul.f32 %v4176, 0.044715
    %v4220 = vmul.f32 %v4085, 0.044715
    %v4221 = vmul.f32 %v4087, 0.044715
    %v4222 = vmul.f32 %v4180, 0.044715
    %v4223 = vmul.f32 %v4182, 0.044715
    %v4224 = vmul.f32 %v4204, %v4061
    %v4225 = vmul.f32 %v4205, %v4063
    %v4226 = vmul.f32 %v4206, %v4156
    %v4227 = vmul.f32 %v4207, %v4158
    %v4228 = vmul.f32 %v4208, %v4067
    %v4229 = vmul.f32 %v4209, %v4069
    %v4230 = vmul.f32 %v4210, %v4162
    %v4231 = vmul.f32 %v4211, %v4164
    %v4232 = vmul.f32 %v4212, %v4073
    %v4233 = vmul.f32 %v4213, %v4075
    %v4234 = vmul.f32 %v4214, %v4168
    %v4235 = vmul.f32 %v4215, %v4170
    %v4236 = vmul.f32 %v4216, %v4079
    %v4237 = vmul.f32 %v4217, %v4081
    %v4238 = vmul.f32 %v4218, %v4174
    %v4239 = vmul.f32 %v4219, %v4176
    %v4240 = vmul.f32 %v4220, %v4085
    %v4241 = vmul.f32 %v4221, %v4087
    %v4242 = vmul.f32 %v4222, %v4180
    %v4243 = vmul.f32 %v4223, %v4182
    %v4244 = vmul.f32 %v4224, %v4061
    %v4245 = vmul.f32 %v4225, %v4063
    %v4246 = vmul.f32 %v4226, %v4156
    %v4247 = vmul.f32 %v4227, %v4158
    %v4248 = vmul.f32 %v4228, %v4067
    %v4249 = vmul.f32 %v4229, %v4069
    %v4250 = vmul.f32 %v4230, %v4162
    %v4251 = vmul.f32 %v4231, %v4164
    %v4252 = vmul.f32 %v4232, %v4073
    %v4253 = vmul.f32 %v4233, %v4075
    %v4254 = vmul.f32 %v4234, %v4168
    %v4255 = vmul.f32 %v4235, %v4170
    %v4256 = vmul.f32 %v4236, %v4079
    %v4257 = vmul.f32 %v4237, %v4081
    %v4258 = vmul.f32 %v4238, %v4174
    %v4259 = vmul.f32 %v4239, %v4176
    %v4260 = vmul.f32 %v4240, %v4085
    %v4261 = vmul.f32 %v4241, %v4087
    %v4262 = vmul.f32 %v4242, %v4180
    %v4263 = vmul.f32 %v4243, %v4182
    %v4264 = vadd.f32 %v4061, %v4244
    %v4265 = vadd.f32 %v4063, %v4245
    %v4266 = vadd.f32 %v4156, %v4246
    %v4267 = vadd.f32 %v4158, %v4247
    %v4268 = vadd.f32 %v4067, %v4248
    %v4269 = vadd.f32 %v4069, %v4249
    %v4270 = vadd.f32 %v4162, %v4250
    %v4271 = vadd.f32 %v4164, %v4251
    %v4272 = vadd.f32 %v4073, %v4252
    %v4273 = vadd.f32 %v4075, %v4253
    %v4274 = vadd.f32 %v4168, %v4254
    %v4275 = vadd.f32 %v4170, %v4255
    %v4276 = vadd.f32 %v4079, %v4256
    %v4277 = vadd.f32 %v4081, %v4257
    %v4278 = vadd.f32 %v4174, %v4258
    %v4279 = vadd.f32 %v4176, %v4259
    %v4280 = vadd.f32 %v4085, %v4260
    %v4281 = vadd.f32 %v4087, %v4261
    %v4282 = vadd.f32 %v4180, %v4262
    %v4283 = vadd.f32 %v4182, %v4263
    %v4284 = vmul.f32 %v4264, 0.7978846
    %v4285 = vmul.f32 %v4265, 0.7978846
    %v4286 = vmul.f32 %v4266, 0.7978846
    %v4287 = vmul.f32 %v4267, 0.7978846
    %v4288 = vmul.f32 %v4268, 0.7978846
    %v4289 = vmul.f32 %v4269, 0.7978846
    %v4290 = vmul.f32 %v4270, 0.7978846
    %v4291 = vmul.f32 %v4271, 0.7978846
    %v4292 = vmul.f32 %v4272, 0.7978846
    %v4293 = vmul.f32 %v4273, 0.7978846
    %v4294 = vmul.f32 %v4274, 0.7978846
    %v4295 = vmul.f32 %v4275, 0.7978846
    %v4296 = vmul.f32 %v4276, 0.7978846
    %v4297 = vmul.f32 %v4277, 0.7978846
    %v4298 = vmul.f32 %v4278, 0.7978846
    %v4299 = vmul.f32 %v4279, 0.7978846
    %v4300 = vmul.f32 %v4280, 0.7978846
    %v4301 = vmul.f32 %v4281, 0.7978846
    %v4302 = vmul.f32 %v4282, 0.7978846
    %v4303 = vmul.f32 %v4283, 0.7978846
    %v4304 = vtanh.pop %v4284
    %v4305 = vtanh.pop %v4285
    %v4306 = vtanh.pop %v4286
    %v4307 = vtanh.pop %v4287
    %v4308 = vtanh.pop %v4288
    %v4309 = vtanh.pop %v4289
    %v4310 = vtanh.pop %v4290
    %v4311 = vtanh.pop %v4291
    %v4312 = vtanh.pop %v4292
    %v4313 = vtanh.pop %v4293
    %v4314 = vtanh.pop %v4294
    %v4315 = vtanh.pop %v4295
    %v4316 = vtanh.pop %v4296
    %v4317 = vtanh.pop %v4297
    %v4318 = vtanh.pop %v4298
    %v4319 = vtanh.pop %v4299
    %v4320 = vtanh.pop %v4300
    %v4321 = vtanh.pop %v4301
    %v4322 = vtanh.pop %v4302
    %v4323 = vtanh.pop %v4303
    %v4324 = vadd.f32 %v4304, 1.0
    %v4325 = vadd.f32 %v4305, 1.0
    %v4326 = vadd.f32 %v4306, 1.0
    %v4327 = vadd.f32 %v4307, 1.0
    %v4328 = vadd.f32 %v4308, 1.0
    %v4329 = vadd.f32 %v4309, 1.0
    %v4330 = vadd.f32 %v4310, 1.0
    %v4331 = vadd.f32 %v4311, 1.0
    %v4332 = vadd.f32 %v4312, 1.0
    %v4333 = vadd.f32 %v4313, 1.0
    %v4334 = vadd.f32 %v4314, 1.0
    %v4335 = vadd.f32 %v4315, 1.0
    %v4336 = vadd.f32 %v4316, 1.0
    %v4337 = vadd.f32 %v4317, 1.0
    %v4338 = vadd.f32 %v4318, 1.0
    %v4339 = vadd.f32 %v4319, 1.0
    %v4340 = vadd.f32 %v4320, 1.0
    %v4341 = vadd.f32 %v4321, 1.0
    %v4342 = vadd.f32 %v4322, 1.0
    %v4343 = vadd.f32 %v4323, 1.0
    %v4344 = vmul.f32 %v4184, %v4324
    %v4345 = vmul.f32 %v4185, %v4325
    %v4346 = vmul.f32 %v4186, %v4326
    %v4347 = vmul.f32 %v4187, %v4327
    %v4348 = vmul.f32 %v4188, %v4328
    %v4349 = vmul.f32 %v4189, %v4329
    %v4350 = vmul.f32 %v4190, %v4330
    %v4351 = vmul.f32 %v4191, %v4331
    %v4352 = vmul.f32 %v4192, %v4332
    %v4353 = vmul.f32 %v4193, %v4333
    %v4354 = vmul.f32 %v4194, %v4334
    %v4355 = vmul.f32 %v4195, %v4335
    %v4356 = vmul.f32 %v4196, %v4336
    %v4357 = vmul.f32 %v4197, %v4337
    %v4358 = vmul.f32 %v4198, %v4338
    %v4359 = vmul.f32 %v4199, %v4339
    %v4360 = vmul.f32 %v4200, %v4340
    %v4361 = vmul.f32 %v4201, %v4341
    %v4362 = vmul.f32 %v4202, %v4342
    %v4363 = vmul.f32 %v4203, %v4343
    %s4364 = scalar_lea.vmem [#allocation10], 512
    %v4365 = vld [vmem:[%s4364] sm:$0xff]
    %v4366 = vld [vmem:[%s4364 + $0x8] sm:$0xff]
    %v4367 = vld [vmem:[%s4364 + $0x10] sm:$0xff]
    %v4368 = vld [vmem:[%s4364 + $0x18] sm:$0xff]
    %v4369 = vld [vmem:[%s4364 + $0x20] sm:$0xff]
    %v4370 = vld [vmem:[%s4364 + $0x28] sm:$0xff]
    %v4371 = vld [vmem:[%s4364 + $0x30] sm:$0xff]
    %v4372 = vld [vmem:[%s4364 + $0x38] sm:$0xff]
    %v4373 = vld [vmem:[%s4364 + $0x40] sm:$0xff]
    %v4374 = vld [vmem:[%s4364 + $0x48] sm:$0xff]
    %v4375 = vld [vmem:[%s4364 + $0x50] sm:$0xff]
    %v4376 = vld [vmem:[%s4364 + $0x58] sm:$0xff]
    %v4377 = vld [vmem:[%s4364 + $0x60] sm:$0xff]
    %v4378 = vld [vmem:[%s4364 + $0x68] sm:$0xff]
    %v4379 = vld [vmem:[%s4364 + $0x70] sm:$0xff]
    %v4380 = vld [vmem:[%s4364 + $0x78] sm:$0xff]
    %v4381 = vld [vmem:[%s4364 + $0x80] sm:$0xff]
    %v4382 = vld [vmem:[%s4364 + $0x88] sm:$0xff]
    %v4383 = vld [vmem:[%s4364 + $0x90] sm:$0xff]
    %v4384 = vld [vmem:[%s4364 + $0x98] sm:$0xff]
    %v4385 = vld [vmem:[%s4364 + $0xa0] sm:$0xff]
    %v4386 = vld [vmem:[%s4364 + $0xa8] sm:$0xff]
    %v4387 = vld [vmem:[%s4364 + $0xb0] sm:$0xff]
    %v4388 = vld [vmem:[%s4364 + $0xb8] sm:$0xff]
    %v4389 = vld [vmem:[%s4364 + $0xc0] sm:$0xff]
    %v4390 = vld [vmem:[%s4364 + $0xc8] sm:$0xff]
    %v4391 = vld [vmem:[%s4364 + $0xd0] sm:$0xff]
    %v4392 = vld [vmem:[%s4364 + $0xd8] sm:$0xff]
    %v4393 = vld [vmem:[%s4364 + $0xe0] sm:$0xff]
    %v4394 = vld [vmem:[%s4364 + $0xe8] sm:$0xff]
    %v4395 = vld [vmem:[%s4364 + $0xf0] sm:$0xff]
    %v4396 = vld [vmem:[%s4364 + $0xf8] sm:$0xff]
    %v4397 = vld [vmem:[%s4364 + $0x100] sm:$0xff]
    %v4398 = vld [vmem:[%s4364 + $0x108] sm:$0xff]
    %v4399 = vld [vmem:[%s4364 + $0x110] sm:$0xff]
    %v4400 = vld [vmem:[%s4364 + $0x118] sm:$0xff]
    %v4401 = vld [vmem:[%s4364 + $0x120] sm:$0xff]
    %v4402 = vld [vmem:[%s4364 + $0x128] sm:$0xff]
    %v4403 = vld [vmem:[%s4364 + $0x130] sm:$0xff]
    %v4404 = vld [vmem:[%s4364 + $0x138] sm:$0xff]
    %v4405 = vld [vmem:[%s4364 + $0x140] sm:$0xff]
    %v4406 = vld [vmem:[%s4364 + $0x148] sm:$0xff]
    %v4407 = vld [vmem:[%s4364 + $0x150] sm:$0xff]
    %v4408 = vld [vmem:[%s4364 + $0x158] sm:$0xff]
    %v4409 = vld [vmem:[%s4364 + $0x160] sm:$0xff]
    %v4410 = vld [vmem:[%s4364 + $0x168] sm:$0xff]
    %v4411 = vld [vmem:[%s4364 + $0x170] sm:$0xff]
    %v4412 = vld [vmem:[%s4364 + $0x178] sm:$0xff]
    %v4413 = vld [vmem:[%s4364 + $0x180] sm:$0xff]
    %v4414 = vld [vmem:[%s4364 + $0x188] sm:$0xff]
    %v4415 = vld [vmem:[%s4364 + $0x190] sm:$0xff]
    %v4416 = vld [vmem:[%s4364 + $0x198] sm:$0xff]
    %v4417 = vld [vmem:[%s4364 + $0x1a0] sm:$0xff]
    %v4418 = vld [vmem:[%s4364 + $0x1a8] sm:$0xff]
    %v4419 = vld [vmem:[%s4364 + $0x1b0] sm:$0xff]
    %v4420 = vld [vmem:[%s4364 + $0x1b8] sm:$0xff]
    %v4421 = vld [vmem:[%s4364 + $0x1c0] sm:$0xff]
    %v4422 = vld [vmem:[%s4364 + $0x1c8] sm:$0xff]
    %v4423 = vld [vmem:[%s4364 + $0x1d0] sm:$0xff]
    %v4424 = vld [vmem:[%s4364 + $0x1d8] sm:$0xff]
    %v4425 = vld [vmem:[%s4364 + $0x1e0] sm:$0xff]
    %v4426 = vld [vmem:[%s4364 + $0x1e8] sm:$0xff]
    %v4427 = vld [vmem:[%s4364 + $0x1f0] sm:$0xff]
    %v4428 = vld [vmem:[%s4364 + $0x1f8] sm:$0xff]
    %s4429 = scalar_lea.vmem %s21, 1
    %v4430 = vld [vmem:[%s4429] sm:$0x1]
    %v4432 = vlaneseq
    %v4433 = vshrl.u32 %v4432, 7
    %v4434 = vsub.s32 0, %v4433
    %v4435 = vrot.slane %v4430, %v4434
    %4437 = vmatprep.subr.mxu0 0.0
    %4438 = vmatpush1.msra.mxu0 %v4365
    %4439 = vmatprep.subr.mxu0 0.0
    %4440 = vmatpush1.msra.mxu0 %v4366
    %4441 = vmatprep.subr.mxu0 0.0
    %4442 = vmatpush1.msra.mxu0 %v4367
    %4443 = vmatprep.subr.mxu0 0.0
    %4444 = vmatpush1.msra.mxu0 %v4368
    %4445 = vmatprep.subr.mxu0 0.0
    %4446 = vmatpush1.msra.mxu0 %v4369
    %4447 = vmatprep.subr.mxu0 0.0
    %4448 = vmatpush1.msra.mxu0 %v4370
    %4449 = vmatprep.subr.mxu0 0.0
    %4450 = vmatpush1.msra.mxu0 %v4371
    %4451 = vmatprep.subr.mxu0 0.0
    %4452 = vmatpush1.msra.mxu0 %v4372
    %4453 = vmatprep.subr.mxu0 0.0
    %4454 = vmatpush1.msra.mxu0 %v4373
    %4455 = vmatprep.subr.mxu0 0.0
    %4456 = vmatpush1.msra.mxu0 %v4374
    %4457 = vmatprep.subr.mxu0 0.0
    %4458 = vmatpush1.msra.mxu0 %v4375
    %4459 = vmatprep.subr.mxu0 0.0
    %4460 = vmatpush1.msra.mxu0 %v4376
    %4461 = vmatprep.subr.mxu0 0.0
    %4462 = vmatpush1.msra.mxu0 %v4377
    %4463 = vmatprep.subr.mxu0 0.0
    %4464 = vmatpush1.msra.mxu0 %v4378
    %4465 = vmatprep.subr.mxu0 0.0
    %4466 = vmatpush1.msra.mxu0 %v4379
    %4467 = vmatprep.subr.mxu0 0.0
    %4468 = vmatpush1.msra.mxu0 %v4380
    %4469 = vmatprep.subr.mxu0 0.0
    %4470 = vmatpush1.msra.mxu0 %v4381
    %4471 = vmatprep.subr.mxu0 0.0
    %4472 = vmatpush1.msra.mxu0 %v4382
    %4473 = vmatprep.subr.mxu0 0.0
    %4474 = vmatpush1.msra.mxu0 %v4383
    %4475 = vmatprep.subr.mxu0 0.0
    %4476 = vmatpush1.msra.mxu0 %v4384
    %4477 = vmatprep.subr.mxu0 0.0
    %4478 = vmatpush1.msra.mxu0 %v4385
    %4479 = vmatprep.subr.mxu0 0.0
    %4480 = vmatpush1.msra.mxu0 %v4386
    %4481 = vmatprep.subr.mxu0 0.0
    %4482 = vmatpush1.msra.mxu0 %v4387
    %4483 = vmatprep.subr.mxu0 0.0
    %4484 = vmatpush1.msra.mxu0 %v4388
    %4485 = vmatprep.subr.mxu0 0.0
    %4486 = vmatpush1.msra.mxu0 %v4389
    %4487 = vmatprep.subr.mxu0 0.0
    %4488 = vmatpush1.msra.mxu0 %v4390
    %4489 = vmatprep.subr.mxu0 0.0
    %4490 = vmatpush1.msra.mxu0 %v4391
    %4491 = vmatprep.subr.mxu0 0.0
    %4492 = vmatpush1.msra.mxu0 %v4392
    %4493 = vmatprep.subr.mxu0 0.0
    %4494 = vmatpush1.msra.mxu0 %v4393
    %4495 = vmatprep.subr.mxu0 0.0
    %4496 = vmatpush1.msra.mxu0 %v4394
    %4497 = vmatprep.subr.mxu0 0.0
    %4498 = vmatpush1.msra.mxu0 %v4395
    %4499 = vmatprep.subr.mxu0 0.0
    %4500 = vmatpush1.msra.mxu0 %v4396
    %4501 = vmatprep.mubr.f32.mxu0 %v4345
    %4502 = vmatmul.mubr.f32.gmra.mrb[0].mxu0 %v4344
    %v4503 = vpop.f32.mrb[0].mxu0
    %v4504 = vadd.f32 %v4435, %v4503
    %v4505 = vpop.f32.mrb[0].mxu0
    %4506 = vmatprep.mubr.f32.mxu0 %v4349
    %4507 = vmatmul.mubr.f32.gmra.mrb[0].mxu0 %v4348
    %v4508 = vpop.f32.mrb[0].mxu0
    %v4509 = vadd.f32 %v4435, %v4508
    %v4510 = vpop.f32.mrb[0].mxu0
    %4511 = vmatprep.mubr.f32.mxu0 %v4353
    %4512 = vmatmul.mubr.f32.gmra.mrb[0].mxu0 %v4352
    %v4513 = vpop.f32.mrb[0].mxu0
    %v4514 = vadd.f32 %v4435, %v4513
    %v4515 = vpop.f32.mrb[0].mxu0
    %4516 = vmatprep.mubr.f32.mxu0 %v4357
    %4517 = vmatmul.mubr.f32.gmra.mrb[0].mxu0 %v4356
    %v4518 = vpop.f32.mrb[0].mxu0
    %v4519 = vadd.f32 %v4435, %v4518
    %v4520 = vpop.f32.mrb[0].mxu0
    %4521 = vmatprep.mubr.f32.mxu0 %v4361
    %4522 = vmatmul.mubr.f32.gmra.mrb[0].mxu0 %v4360
    %v4523 = vpop.f32.mrb[0].mxu0
    %v4524 = vadd.f32 %v4435, %v4523
    %v4525 = vpop.f32.mrb[0].mxu0
    %4526 = vdwg.mxu0
    %4527 = vmatprep.subr.mxu0 0.0
    %4528 = vmatpush1.msra.mxu0 %v4397
    %4529 = vmatprep.subr.mxu0 0.0
    %4530 = vmatpush1.msra.mxu0 %v4398
    %4531 = vmatprep.subr.mxu0 0.0
    %4532 = vmatpush1.msra.mxu0 %v4399
    %4533 = vmatprep.subr.mxu0 0.0
    %4534 = vmatpush1.msra.mxu0 %v4400
    %4535 = vmatprep.subr.mxu0 0.0
    %4536 = vmatpush1.msra.mxu0 %v4401
    %4537 = vmatprep.subr.mxu0 0.0
    %4538 = vmatpush1.msra.mxu0 %v4402
    %4539 = vmatprep.subr.mxu0 0.0
    %4540 = vmatpush1.msra.mxu0 %v4403
    %4541 = vmatprep.subr.mxu0 0.0
    %4542 = vmatpush1.msra.mxu0 %v4404
    %4543 = vmatprep.subr.mxu0 0.0
    %4544 = vmatpush1.msra.mxu0 %v4405
    %4545 = vmatprep.subr.mxu0 0.0
    %4546 = vmatpush1.msra.mxu0 %v4406
    %4547 = vmatprep.subr.mxu0 0.0
    %4548 = vmatpush1.msra.mxu0 %v4407
    %4549 = vmatprep.subr.mxu0 0.0
    %4550 = vmatpush1.msra.mxu0 %v4408
    %4551 = vmatprep.subr.mxu0 0.0
    %4552 = vmatpush1.msra.mxu0 %v4409
    %4553 = vmatprep.subr.mxu0 0.0
    %4554 = vmatpush1.msra.mxu0 %v4410
    %4555 = vmatprep.subr.mxu0 0.0
    %4556 = vmatpush1.msra.mxu0 %v4411
    %4557 = vmatprep.subr.mxu0 0.0
    %4558 = vmatpush1.msra.mxu0 %v4412
    %4559 = vmatprep.subr.mxu0 0.0
    %4560 = vmatpush1.msra.mxu0 %v4413
    %4561 = vmatprep.subr.mxu0 0.0
    %4562 = vmatpush1.msra.mxu0 %v4414
    %4563 = vmatprep.subr.mxu0 0.0
    %4564 = vmatpush1.msra.mxu0 %v4415
    %4565 = vmatprep.subr.mxu0 0.0
    %4566 = vmatpush1.msra.mxu0 %v4416
    %4567 = vmatprep.subr.mxu0 0.0
    %4568 = vmatpush1.msra.mxu0 %v4417
    %4569 = vmatprep.subr.mxu0 0.0
    %4570 = vmatpush1.msra.mxu0 %v4418
    %4571 = vmatprep.subr.mxu0 0.0
    %4572 = vmatpush1.msra.mxu0 %v4419
    %4573 = vmatprep.subr.mxu0 0.0
    %4574 = vmatpush1.msra.mxu0 %v4420
    %4575 = vmatprep.subr.mxu0 0.0
    %4576 = vmatpush1.msra.mxu0 %v4421
    %4577 = vmatprep.subr.mxu0 0.0
    %4578 = vmatpush1.msra.mxu0 %v4422
    %4579 = vmatprep.subr.mxu0 0.0
    %4580 = vmatpush1.msra.mxu0 %v4423
    %4581 = vmatprep.subr.mxu0 0.0
    %4582 = vmatpush1.msra.mxu0 %v4424
    %4583 = vmatprep.subr.mxu0 0.0
    %4584 = vmatpush1.msra.mxu0 %v4425
    %4585 = vmatprep.subr.mxu0 0.0
    %4586 = vmatpush1.msra.mxu0 %v4426
    %4587 = vmatprep.subr.mxu0 0.0
    %4588 = vmatpush1.msra.mxu0 %v4427
    %4589 = vmatprep.subr.mxu0 0.0
    %4590 = vmatpush1.msra.mxu0 %v4428
    %4591 = vmatprep.mubr.f32.mxu0 %v4347
    %4592 = vmatmul.mubr.f32.gmra.mrb[0].mxu0 %v4346
    %v4593 = vpop.f32.mrb[0].mxu0
    %v4594 = vadd.f32 %v4504, %v4593
    %v4595 = vpop.f32.mrb[0].mxu0
    %4596 = vmatprep.mubr.f32.mxu0 %v4351
    %4597 = vmatmul.mubr.f32.gmra.mrb[0].mxu0 %v4350
    %v4598 = vpop.f32.mrb[0].mxu0
    %v4599 = vadd.f32 %v4509, %v4598
    %v4600 = vpop.f32.mrb[0].mxu0
    %4601 = vmatprep.mubr.f32.mxu0 %v4355
    %4602 = vmatmul.mubr.f32.gmra.mrb[0].mxu0 %v4354
    %v4603 = vpop.f32.mrb[0].mxu0
    %v4604 = vadd.f32 %v4514, %v4603
    %v4605 = vpop.f32.mrb[0].mxu0
    %4606 = vmatprep.mubr.f32.mxu0 %v4359
    %4607 = vmatmul.mubr.f32.gmra.mrb[0].mxu0 %v4358
    %v4608 = vpop.f32.mrb[0].mxu0
    %v4609 = vadd.f32 %v4519, %v4608
    %v4610 = vpop.f32.mrb[0].mxu0
    %4611 = vmatprep.mubr.f32.mxu0 %v4363
    %4612 = vmatmul.mubr.f32.gmra.mrb[0].mxu0 %v4362
    %v4613 = vpop.f32.mrb[0].mxu0
    %v4614 = vadd.f32 %v4524, %v4613
    %v4615 = vpop.f32.mrb[0].mxu0
    %4616 = vdwg.mxu0
    %v4617 = vadd.f32 %v3895, %v4594
    %v4618 = vadd.f32 %v3896, %v4599
    %v4619 = vadd.f32 %v3897, %v4604
    %v4620 = vadd.f32 %v3898, %v4609
    %v4621 = vadd.f32 %v3899, %v4614
    %4622 = vadd.xlane.f32.xlu0 %v4617
    %v4623 = vpop.xlane.xlu0 %4622
    %4624 = vadd.xlane.f32.xlu0 %v4618
    %v4625 = vpop.xlane.xlu0 %4624
    %4626 = vadd.xlane.f32.xlu0 %v4619
    %v4627 = vpop.xlane.xlu0 %4626
    %4628 = vadd.xlane.f32.xlu0 %v4620
    %v4629 = vpop.xlane.xlu0 %4628
    %4630 = vadd.xlane.f32.xlu0 %v4621
    %v4631 = vpop.xlane.xlu0 %4630
    %v4632 = vmul.f32 %v4623, %v1129
    %v4633 = vmul.f32 %v4625, %v1129
    %v4634 = vmul.f32 %v4627, %v1129
    %v4635 = vmul.f32 %v4629, %v1129
    %v4636 = vmul.f32 %v4631, %v1129
    %v4637 = vsub.f32 %v4617, %v4632
    %v4638 = vsub.f32 %v4618, %v4633
    %v4639 = vsub.f32 %v4619, %v4634
    %v4640 = vsub.f32 %v4620, %v4635
    %v4641 = vsub.f32 %v4621, %v4636
    %v4642 = vmul.f32 %v4637, %v4637
    %v4643 = vmul.f32 %v4638, %v4638
    %v4644 = vmul.f32 %v4639, %v4639
    %v4645 = vmul.f32 %v4640, %v4640
    %v4646 = vmul.f32 %v4641, %v4641
    %4647 = vadd.xlane.f32.xlu0 %v4642
    %v4648 = vpop.xlane.xlu0 %4647
    %4649 = vadd.xlane.f32.xlu0 %v4643
    %v4650 = vpop.xlane.xlu0 %4649
    %4651 = vadd.xlane.f32.xlu0 %v4644
    %v4652 = vpop.xlane.xlu0 %4651
    %4653 = vadd.xlane.f32.xlu0 %v4645
    %v4654 = vpop.xlane.xlu0 %4653
    %4655 = vadd.xlane.f32.xlu0 %v4646
    %v4656 = vpop.xlane.xlu0 %4655
    %v4657 = vmul.f32 %v4648, %v1129
    %v4658 = vmul.f32 %v4650, %v1129
    %v4659 = vmul.f32 %v4652, %v1129
    %v4660 = vmul.f32 %v4654, %v1129
    %v4661 = vmul.f32 %v4656, %v1129
    %v4662 = vadd.f32 %v4657, 1e-05
    %v4663 = vadd.f32 %v4658, 1e-05
    %v4664 = vadd.f32 %v4659, 1e-05
    %v4665 = vadd.f32 %v4660, 1e-05
    %v4666 = vadd.f32 %v4661, 1e-05
    %v4667 = vrsqrt.pop %v4662
    %v4668 = vrsqrt.pop %v4663
    %v4669 = vrsqrt.pop %v4664
    %v4670 = vrsqrt.pop %v4665
    %v4671 = vrsqrt.pop %v4666
    %v4672 = vmul.f32 %v4637, %v4667
    %v4673 = vmul.f32 %v4638, %v4668
    %v4674 = vmul.f32 %v4639, %v4669
    %v4675 = vmul.f32 %v4640, %v4670
    %v4676 = vmul.f32 %v4641, %v4671
    %s4677 = scalar_lea.vmem %s22, 1
    %v4678 = vld [vmem:[%s4677] sm:$0x1]
    %v4680 = vlaneseq
    %v4681 = vshrl.u32 %v4680, 7
    %v4682 = vsub.s32 0, %v4681
    %v4683 = vrot.slane %v4678, %v4682
    %v4685 = vmul.f32 %v4672, %v4683
    %v4686 = vmul.f32 %v4673, %v4683
    %v4687 = vmul.f32 %v4674, %v4683
    %v4688 = vmul.f32 %v4675, %v4683
    %v4689 = vmul.f32 %v4676, %v4683
    %s4690 = scalar_lea.vmem %s23, 1
    %v4691 = vld [vmem:[%s4690] sm:$0x1]
    %v4693 = vlaneseq
    %v4694 = vshrl.u32 %v4693, 7
    %v4695 = vsub.s32 0, %v4694
    %v4696 = vrot.slane %v4691, %v4695
    %v4698 = vadd.f32 %v4685, %v4696
    %v4699 = vadd.f32 %v4686, %v4696
    %v4700 = vadd.f32 %v4687, %v4696
    %v4701 = vadd.f32 %v4688, %v4696
    %v4702 = vadd.f32 %v4689, %v4696
    %s4703 = scalar_lea.vmem %s26, 80
    %4704 = vst [vmem:[%s4703] sm:$0xff] %v4698
    %4705 = vst [vmem:[%s4703 + $0x8] sm:$0xff] %v4699
    %4706 = vst [vmem:[%s4703 + $0x10] sm:$0xff] %v4700
    %4707 = vst [vmem:[%s4703 + $0x18] sm:$0xff] %v4701
    %4708 = vst [vmem:[%s4703 + $0x20] sm:$0xff] %v4702
    // Predicated region
    $region122: #{_avbert_forward.1} parent=1 // pred_check
      _
    $region123: #{_avbert_forward.1} parent=1 // pred_check_branch
      %4710 = sbr.rel (0) target = $region125
    $region124: #{_avbert_forward.1} parent=1 // pred_region
      _
    $region125: #{_avbert_forward.1} parent=1 // pred_fallthru
      _
    // Predicated region
    $region126: #{_avbert_forward.1} parent=1 // pred_check
      _
    $region127: #{_avbert_forward.1} parent=1 // pred_check_branch
      %4712 = sbr.rel (0) target = $region129
    $region128: #{_avbert_forward.1} parent=1 // pred_region
      _
    $region129: #{_avbert_forward.1} parent=1 // pred_fallthru
      _
    // Predicated region
    $region130: #{_avbert_forward.1} parent=1 // pred_check
      _
    $region131: #{_avbert_forward.1} parent=1 // pred_check_branch
      %4714 = sbr.rel (0) target = $region133
    $region132: #{_avbert_forward.1} parent=1 // pred_region
      _
    $region133: #{_avbert_forward.1} parent=1 // pred_fallthru
      _
    // Predicated region
    $region134: #{_avbert_forward.1} parent=1 // pred_check
      _
    $region135: #{_avbert_forward.1} parent=1 // pred_check_branch
      %4716 = sbr.rel (0) target = $region137
    $region136: #{_avbert_forward.1} parent=1 // pred_region
      _
    $region137: #{_avbert_forward.1} parent=1 // pred_fallthru
      _
    // Predicated region
    $region138: #{_avbert_forward.1} parent=1 // pred_check
      _
    $region139: #{_avbert_forward.1} parent=1 // pred_check_branch
      %4718 = sbr.rel (0) target = $region141
    $region140: #{_avbert_forward.1} parent=1 // pred_region
      _
    $region141: #{_avbert_forward.1} parent=1 // pred_fallthru
      _
    // Predicated region
    $region142: #{_avbert_forward.1} parent=1 // pred_check
      _
    $region143: #{_avbert_forward.1} parent=1 // pred_check_branch
      %4720 = sbr.rel (0) target = $region145
    $region144: #{_avbert_forward.1} parent=1 // pred_region
      _
    $region145: #{_avbert_forward.1} parent=1 // pred_fallthru
      _
    %4721 = vsyncpa [#allocation3], 1
    %4722 = vsyncpa [#allocation5], 1
    %4723 = vsyncpa [#allocation8], 1
    %4724 = vsyncpa [#allocation11], 1

</llo_original>
